<compile_context>
chip_gen: v5e
topology: v5e:2x2
jax: 0.10.0
libtpu: 0.0.40
codegen_flags: <defaults>
</compile_context>

<pallas_src>
import functools

import jax
import jax.numpy as jnp
from jax.experimental import pallas as pl
from jax.experimental.pallas import tpu as pltpu


def _round_up(n, m):
    return ((n + m - 1) // m) * m


def _disc_dann_kernel(x_ref, w1_ref, b1_ref, w2_ref, b2_ref, w3_ref, b3_ref, o_ref):
    # fc1: Linear(feature_len, 1024) + ReLU  (Dropout == identity at inference).
    # The f32->bf16 cast of the streamed x tile is a cheap VPU op hidden under
    # the MXU (replaces the former HBM-side padded bf16 copy).
    x = x_ref[...].astype(jnp.bfloat16)
    h1 = jnp.dot(x, w1_ref[...], preferred_element_type=jnp.float32)
    h1 = jnp.maximum(h1 + b1_ref[...], 0.0)

    # fc2_3 part 1: Linear(1024, 1024) + ReLU  (Dropout == identity at inference).
    h2 = jnp.dot(h1.astype(jnp.bfloat16), w2_ref[...],
                 preferred_element_type=jnp.float32)
    h2 = jnp.maximum(h2 + b2_ref[...], 0.0)

    # fc2_3 part 2: Linear(1024, 1).  Contract w3 (1,1024) with h2 (tb,1024)
    # over the feature axis (q @ k^T - style NT dimension numbers) so the
    # per-tile result is a lane-dense (1, tb) row -> unmasked full-width stores.
    out_row = jax.lax.dot_general(
        w3_ref[...], h2,
        dimension_numbers=(((1,), (1,)), ((), ())),
        preferred_element_type=jnp.float32)                 # (1, tb)
    o_ref[...] = (out_row + b3_ref[0]).astype(o_ref.dtype)
    # TODO(synk): training-mode Dropout(0.5) (pltpu.prng_random_bits masking) is
    # intentionally omitted; this kernel reproduces eval-mode forward semantics.


def init_params(feature_len, key):
    """Deterministic init mirroring the PyTorch __init__:
       layer1/layer2 weights ~ N(0, 0.01), layer3 weights ~ N(0, 0.3), biases 0.
       Stored as (in_features, out_features); w1/w2 in bf16."""
    k1, k2, k3 = jax.random.split(key, 3)
    w1 = (jax.random.normal(k1, (feature_len, 1024), jnp.float32) * 0.01
          ).astype(jnp.bfloat16)
    b1 = jnp.zeros((1, 1024), jnp.float32)
    w2 = (jax.random.normal(k2, (1024, 1024), jnp.float32) * 0.01
          ).astype(jnp.bfloat16)
    b2 = jnp.zeros((1, 1024), jnp.float32)
    w3 = (jax.random.normal(k3, (1024,), jnp.float32) * 0.3).reshape(1, 1024)
    b3 = jnp.zeros((1,), jnp.float32)
    return (w1, b1, w2, b2, w3, b3)


@functools.partial(jax.jit, static_argnames=("block_b",))
def discriminator_dann_forward(x, y, params, *, block_b=512):
    """x: (B, feature_len) float32, y: unused (kept for API parity). Returns (B, 1)."""
    del y  # unused by the PyTorch forward as well
    w1, b1, w2, b2, w3, b3 = params
    B, F = x.shape

    # Batch tiling: round to 16 rows (bf16 sublane packing) and pick the tile.
    B_pad = _round_up(B, 16)
    tb = min(block_b, B_pad)
    B_pad = _round_up(B_pad, tb)
    if B_pad != B:
        # Batch-axis-only zero pad (no feature padding, no dtype change); only
        # needed so the grid tiles evenly.  Padded rows are sliced off below.
        x = jnp.pad(x, ((0, B_pad - B), (0, 0)))

    num_tiles = B_pad // tb
    grid = (num_tiles,)
    in_specs = [
        pl.BlockSpec((tb, F), lambda i: (i, 0)),             # x: streamed (f32)
        pl.BlockSpec((F, 1024), lambda i: (0, 0)),           # w1: VMEM-resident
        pl.BlockSpec((1, 1024), lambda i: (0, 0)),           # b1: resident
        pl.BlockSpec((1024, 1024), lambda i: (0, 0)),        # w2: VMEM-resident
        pl.BlockSpec((1, 1024), lambda i: (0, 0)),           # b2: resident
        pl.BlockSpec((1, 1024), lambda i: (0, 0)),           # w3 row: resident
        pl.BlockSpec(memory_space=pltpu.MemorySpace.SMEM),   # b3 scalar
    ]
    # Lane-dense output: one (1, tb) row per grid step of a (1, B_pad) array.
    out_specs = pl.BlockSpec((1, tb), lambda i: (0, i))

    out = pl.pallas_call(
        _disc_dann_kernel,
        out_shape=jax.ShapeDtypeStruct((1, B_pad), jnp.float32),
        grid=grid,
        in_specs=in_specs,
        out_specs=out_specs,
        compiler_params=pltpu.CompilerParams(
            dimension_semantics=("parallel",),   # shards batch tiles across TCs
        ),
    )(x, w1, b1, w2, b2, w3, b3)
    # (1, B_pad) lane-dense row -> (B, 1) column; drop batch padding.
    return out.reshape(B_pad, 1)[:B]


def reference_forward(x, params):
    """Pure-JAX reference with matching numerics (bf16 matmuls, f32 accumulate)."""
    w1, b1, w2, b2, w3, b3 = params
    h1 = jnp.maximum(
        jnp.dot(x.astype(jnp.bfloat16), w1, preferred_element_type=jnp.float32) + b1,
        0.0)
    h2 = jnp.maximum(
        jnp.dot(h1.astype(jnp.bfloat16), w2, preferred_element_type=jnp.float32) + b2,
        0.0)
    return jnp.dot(h2, w3.T) + b3[0]


if __name__ == "__main__":
    feature_len = 32
    batch = 8

    key = jax.random.PRNGKey(0)
    kx, ky, kp = jax.random.split(key, 3)

    x = jax.random.normal(kx, (batch, feature_len), jnp.float32)
    # `y` is an unused second argument in the PyTorch forward; keep it for parity.
    y = jax.random.normal(ky, (batch, feature_len), jnp.float32)

    params = init_params(feature_len, kp)

    f = discriminator_dann_forward(x, y, params)
    f = jax.block_until_ready(f)

    ref = reference_forward(x, params)
    assert f.shape == (batch, 1), f.shape
    assert jnp.allclose(f, ref, atol=1e-2, rtol=1e-2), "mismatch vs. reference"

    print("KERNEL_OK")
</pallas_src>

<mosaic_0001>
module attributes {stable_mosaic.version = 11 : i64} {
  func.func @_disc_dann_kernel(%arg0: i32, %arg1: memref<16x32xf32, #tpu.memory_space<vmem>>, %arg2: memref<32x1024xbf16, #tpu.memory_space<vmem>>, %arg3: memref<1x1024xf32, #tpu.memory_space<vmem>>, %arg4: memref<1024x1024xbf16, #tpu.memory_space<vmem>>, %arg5: memref<1x1024xf32, #tpu.memory_space<vmem>>, %arg6: memref<1x1024xf32, #tpu.memory_space<vmem>>, %arg7: memref<1xf32, #tpu.memory_space<smem>>, %arg8: memref<1x16xf32, #tpu.memory_space<vmem>>) attributes {dimension_semantics = [#tpu.dimension_semantics<parallel>], iteration_bounds = array<i64: 1>, scalar_prefetch = 0 : i64, scratch_operands = 0 : i64, tpu.core_type = #tpu.core_type<tc>, window_params = [{transform_indices = @transform_0, window_bounds = array<i64: 16, 32>}, {pipeline_mode = #tpu.pipeline_mode<synchronous>, transform_indices = @transform_1, window_bounds = array<i64: 32, 1024>}, {pipeline_mode = #tpu.pipeline_mode<synchronous>, transform_indices = @transform_2, window_bounds = array<i64: 1, 1024>}, {pipeline_mode = #tpu.pipeline_mode<synchronous>, transform_indices = @transform_3, window_bounds = array<i64: 1024, 1024>}, {pipeline_mode = #tpu.pipeline_mode<synchronous>, transform_indices = @transform_4, window_bounds = array<i64: 1, 1024>}, {pipeline_mode = #tpu.pipeline_mode<synchronous>, transform_indices = @transform_5, window_bounds = array<i64: 1, 1024>}, {transform_indices = @transform_6, window_bounds = array<i64: 1>}, {transform_indices = @transform_7, window_bounds = array<i64: 1, 16>}]} {
    %c0 = arith.constant 0 : index
    %c0_0 = arith.constant 0 : index
    %0 = vector.load %arg1[%c0, %c0_0] : memref<16x32xf32, #tpu.memory_space<vmem>>, vector<16x32xf32>
    %1 = arith.truncf %0 : vector<16x32xf32> to vector<16x32xbf16>
    %c0_1 = arith.constant 0 : index
    %c0_2 = arith.constant 0 : index
    %2 = vector.load %arg2[%c0_1, %c0_2] : memref<32x1024xbf16, #tpu.memory_space<vmem>>, vector<32x1024xbf16>
    %cst = arith.constant dense<0.000000e+00> : vector<16x1024xf32>
    %3 = tpu.matmul %1, %2, %cst {dimension_numbers = #tpu.dot_dimension_numbers<[1], [0], [0], [1], [0, 0, 1, 1], [], []>} : vector<16x32xbf16>, vector<32x1024xbf16>, vector<16x1024xf32> -> vector<16x1024xf32>
    %c0_3 = arith.constant 0 : index
    %c0_4 = arith.constant 0 : index
    %4 = vector.load %arg3[%c0_3, %c0_4] : memref<1x1024xf32, #tpu.memory_space<vmem>>, vector<1x1024xf32>
    %5 = vector.broadcast %4 : vector<1x1024xf32> to vector<16x1024xf32>
    %6 = arith.addf %3, %5 : vector<16x1024xf32>
    %cst_5 = arith.constant 0.000000e+00 : f32
    %7 = vector.broadcast %cst_5 : f32 to vector<16x1024xf32>
    %8 = arith.maximumf %6, %7 : vector<16x1024xf32>
    %9 = arith.truncf %8 : vector<16x1024xf32> to vector<16x1024xbf16>
    %c0_6 = arith.constant 0 : index
    %c0_7 = arith.constant 0 : index
    %10 = vector.load %arg4[%c0_6, %c0_7] : memref<1024x1024xbf16, #tpu.memory_space<vmem>>, vector<1024x1024xbf16>
    %cst_8 = arith.constant dense<0.000000e+00> : vector<16x1024xf32>
    %11 = tpu.matmul %9, %10, %cst_8 {dimension_numbers = #tpu.dot_dimension_numbers<[1], [0], [0], [1], [0, 0, 1, 1], [], []>} : vector<16x1024xbf16>, vector<1024x1024xbf16>, vector<16x1024xf32> -> vector<16x1024xf32>
    %c0_9 = arith.constant 0 : index
    %c0_10 = arith.constant 0 : index
    %12 = vector.load %arg5[%c0_9, %c0_10] : memref<1x1024xf32, #tpu.memory_space<vmem>>, vector<1x1024xf32>
    %13 = vector.broadcast %12 : vector<1x1024xf32> to vector<16x1024xf32>
    %14 = arith.addf %11, %13 : vector<16x1024xf32>
    %cst_11 = arith.constant 0.000000e+00 : f32
    %15 = vector.broadcast %cst_11 : f32 to vector<16x1024xf32>
    %16 = arith.maximumf %14, %15 : vector<16x1024xf32>
    %c0_12 = arith.constant 0 : index
    %c0_13 = arith.constant 0 : index
    %17 = vector.load %arg6[%c0_12, %c0_13] : memref<1x1024xf32, #tpu.memory_space<vmem>>, vector<1x1024xf32>
    %cst_14 = arith.constant dense<0.000000e+00> : vector<1x16xf32>
    %18 = tpu.matmul %17, %16, %cst_14 {dimension_numbers = #tpu.dot_dimension_numbers<[1], [1], [0], [0], [0, 0, 1, 0], [], []>} : vector<1x1024xf32>, vector<16x1024xf32>, vector<1x16xf32> -> vector<1x16xf32>
    %c0_15 = arith.constant 0 : index
    %19 = memref.load %arg7[%c0_15] : memref<1xf32, #tpu.memory_space<smem>>
    %20 = vector.broadcast %19 : f32 to vector<1x16xf32>
    %21 = arith.addf %18, %20 : vector<1x16xf32>
    %c0_16 = arith.constant 0 : index
    %c0_17 = arith.constant 0 : index
    %22 = vector.load %arg8[%c0_16, %c0_17] : memref<1x16xf32, #tpu.memory_space<vmem>>, vector<1x16xf32>
    tpu.vector_store %arg8[%c0_16, %c0_17], %21 {strides = array<i32>} : memref<1x16xf32, #tpu.memory_space<vmem>>, vector<1x16xf32>,
    return
  }
  func.func @transform_0(%arg0: i32) -> (i32, i32) {
    %c0_i32 = arith.constant 0 : i32
    %c0_i32_0 = arith.constant 0 : i32
    return %arg0, %c0_i32 : i32, i32
  }
  func.func @transform_1(%arg0: i32) -> (i32, i32) {
    %c0_i32 = arith.constant 0 : i32
    %c0_i32_0 = arith.constant 0 : i32
    %c0_i32_1 = arith.constant 0 : i32
    return %c0_i32, %c0_i32_0 : i32, i32
  }
  func.func @transform_2(%arg0: i32) -> (i32, i32) {
    %c0_i32 = arith.constant 0 : i32
    %c0_i32_0 = arith.constant 0 : i32
    %c0_i32_1 = arith.constant 0 : i32
    return %c0_i32, %c0_i32_0 : i32, i32
  }
  func.func @transform_3(%arg0: i32) -> (i32, i32) {
    %c0_i32 = arith.constant 0 : i32
    %c0_i32_0 = arith.constant 0 : i32
    %c0_i32_1 = arith.constant 0 : i32
    return %c0_i32, %c0_i32_0 : i32, i32
  }
  func.func @transform_4(%arg0: i32) -> (i32, i32) {
    %c0_i32 = arith.constant 0 : i32
    %c0_i32_0 = arith.constant 0 : i32
    %c0_i32_1 = arith.constant 0 : i32
    return %c0_i32, %c0_i32_0 : i32, i32
  }
  func.func @transform_5(%arg0: i32) -> (i32, i32) {
    %c0_i32 = arith.constant 0 : i32
    %c0_i32_0 = arith.constant 0 : i32
    %c0_i32_1 = arith.constant 0 : i32
    return %c0_i32, %c0_i32_0 : i32, i32
  }
  func.func @transform_6(%arg0: i32) -> i32 {
    %c0_i32 = arith.constant 0 : i32
    %c0_i32_0 = arith.constant 0 : i32
    return %c0_i32 : i32
  }
  func.func @transform_7(%arg0: i32) -> (i32, i32) {
    %c0_i32 = arith.constant 0 : i32
    %c0_i32_0 = arith.constant 0 : i32
    return %c0_i32, %arg0 : i32, i32
  }
}

</mosaic_0001>

<llo_original>
// kernel: discriminator_dann_forward.1
$region0: #{discriminator_dann_forward.1}
  #allocation0 [shape = 'u32[]', space=smem, size = 0x4, offset = 0x4, fixed_abs, tag = 'smem constant byte address 0x4 - core index']
  #allocation1 [shape = 'u32[72,128]{1,0:T(1,128)}', space=vmem, size = 0x9000, scoped, tag = 'internal scratch']
  #allocation2 [shape = 'f32[1]{0:T(128)S(6)}', space=smem, size = 0x200, scoped, tag = 'scoped memory for discriminator_dann_forward.1']
  %s0 = inlined_call_operand.vmem [shape: f32[16,32], index: 0, kind: input, shape index: {}]
  %s1 = inlined_call_operand.hbm [shape: bf16[32,1024], index: 1, kind: input, shape index: {}]
  %s2 = inlined_call_operand.hbm [shape: f32[1,1024], index: 2, kind: input, shape index: {}]
  %s3 = inlined_call_operand.hbm [shape: bf16[1024,1024], index: 3, kind: input, shape index: {}]
  %s4 = inlined_call_operand.hbm [shape: f32[1,1024], index: 4, kind: input, shape index: {}]
  %s5 = inlined_call_operand.hbm [shape: f32[1,1024], index: 5, kind: input, shape index: {}]
  %s6 = inlined_call_operand.<no memory space> [shape: f32[1], index: 6, kind: input, shape index: {}]
  %s7 = inlined_call_operand.vmem [shape: f32[1,16], index: 7, kind: output, shape index: {}]
  %s8 = sld [smem:[#allocation0]]
  $region58: #{discriminator_dann_forward.1} parent=0
    _
  %s10 = ssub.s32 1, %s8
  %s11 = scalar_select 0, %s10, %s8
  %12 = sst [smem:[#allocation2]] %s6
  $region1: #{discriminator_dann_forward.1} parent=0
    #allocation3 [shape = 'u8[65536]{0}', space=vmem, size = 0x10000, scoped, tag = 'input window, operand 1, single buffered']
    #allocation4 [shape = 's32[1]{0}', space=sflag, size = 0x4, scoped, tag = 'scoped memory for discriminator_dann_forward.1']
    #allocation5 [shape = 'u8[4096]{0}', space=vmem, size = 0x1000, scoped, tag = 'input window, operand 2, single buffered']
    #allocation6 [shape = 's32[1]{0}', space=sflag, size = 0x4, scoped, tag = 'scoped memory for discriminator_dann_forward.1']
    #allocation7 [shape = 'u8[2097152]{0}', space=vmem, size = 0x200000, scoped, tag = 'input window, operand 3, single buffered']
    #allocation8 [shape = 'u8[4096]{0}', space=vmem, size = 0x1000, scoped, tag = 'input window, operand 4, single buffered']
    #allocation9 [shape = 's32[1]{0}', space=sflag, size = 0x4, scoped, tag = 'scoped memory for discriminator_dann_forward.1']
    #allocation10 [shape = 'u8[4096]{0}', space=vmem, size = 0x1000, scoped, tag = 'input window, operand 5, single buffered']
    %13 = vsyncpa [#allocation4], 0
    %14 = vsyncpa [#allocation6], 0
    %15 = vsyncpa [#allocation9], 0
    // Predicated region
    $region2: #{discriminator_dann_forward.1} parent=1 // pred_check
      _
    $region3: #{discriminator_dann_forward.1} parent=1 // pred_check_branch
      %17 = sbr.rel (0) target = $region5
    $region4: #{discriminator_dann_forward.1} parent=1 // pred_region
      _
    $region5: #{discriminator_dann_forward.1} parent=1 // pred_fallthru
      _
    // Predicated region
    $region6: #{discriminator_dann_forward.1} parent=1 // pred_check
      _
    $region7: #{discriminator_dann_forward.1} parent=1 // pred_check_branch
      %19 = sbr.rel (0) target = $region9
    $region8: #{discriminator_dann_forward.1} parent=1 // pred_region
      %21 = vsyncadd [#allocation4], 0
      %s22 = sshll.u32 %s1, 4
      %s23 = int_to_ptr.hbm [resolvable:$true] %s22
      %s24 = sshll.u32 [#allocation3], 4
      %s25 = int_to_ptr.vmem [resolvable:$true] %s24
      %30 = dma.hbm_to_vmem [thread:$0]  %s23, 2048, %s25, [#allocation4], 512, 512, 32
    $region9: #{discriminator_dann_forward.1} parent=1 // pred_fallthru
      _
    // Predicated region
    $region10: #{discriminator_dann_forward.1} parent=1 // pred_check
      _
    $region11: #{discriminator_dann_forward.1} parent=1 // pred_check_branch
      %32 = sbr.rel (0) target = $region13
    $region12: #{discriminator_dann_forward.1} parent=1 // pred_region
      %34 = vsyncadd [#allocation6], 0
      %s36 = sshll.u32 %s2, 4
      %s37 = int_to_ptr.hbm [resolvable:$true] %s36
      %s38 = sshll.u32 [#allocation5], 4
      %s39 = int_to_ptr.vmem [resolvable:$true] %s38
      %41 = dma.hbm_to_vmem [thread:$0]  %s37, 128, %s39, [#allocation6]
    $region13: #{discriminator_dann_forward.1} parent=1 // pred_fallthru
      _
    // Predicated region
    $region14: #{discriminator_dann_forward.1} parent=1 // pred_check
      _
    $region15: #{discriminator_dann_forward.1} parent=1 // pred_check_branch
      %43 = sbr.rel (0) target = $region17
    $region16: #{discriminator_dann_forward.1} parent=1 // pred_region
      %45 = vsyncadd [#allocation6], 0
      %s46 = sshll.u32 %s3, 4
      %s47 = int_to_ptr.hbm [resolvable:$true] %s46
      %s48 = sshll.u32 [#allocation7], 4
      %s49 = int_to_ptr.vmem [resolvable:$true] %s48
      %54 = dma.hbm_to_vmem [thread:$0]  %s47, 65536, %s49, [#allocation6], 512, 512, 32
    $region17: #{discriminator_dann_forward.1} parent=1 // pred_fallthru
      _
    // Predicated region
    $region18: #{discriminator_dann_forward.1} parent=1 // pred_check
      _
    $region19: #{discriminator_dann_forward.1} parent=1 // pred_check_branch
      %56 = sbr.rel (0) target = $region21
    $region20: #{discriminator_dann_forward.1} parent=1 // pred_region
      %58 = vsyncadd [#allocation9], 0
      %s60 = sshll.u32 %s4, 4
      %s61 = int_to_ptr.hbm [resolvable:$true] %s60
      %s62 = sshll.u32 [#allocation8], 4
      %s63 = int_to_ptr.vmem [resolvable:$true] %s62
      %65 = dma.hbm_to_vmem [thread:$0]  %s61, 128, %s63, [#allocation9]
    $region21: #{discriminator_dann_forward.1} parent=1 // pred_fallthru
      _
    // Predicated region
    $region22: #{discriminator_dann_forward.1} parent=1 // pred_check
      _
    $region23: #{discriminator_dann_forward.1} parent=1 // pred_check_branch
      %67 = sbr.rel (0) target = $region25
    $region24: #{discriminator_dann_forward.1} parent=1 // pred_region
      %69 = vsyncadd [#allocation9], 0
      %s71 = sshll.u32 %s5, 4
      %s72 = int_to_ptr.hbm [resolvable:$true] %s71
      %s73 = sshll.u32 [#allocation10], 4
      %s74 = int_to_ptr.vmem [resolvable:$true] %s73
      %76 = dma.hbm_to_vmem [thread:$0]  %s72, 128, %s74, [#allocation9]
    $region25: #{discriminator_dann_forward.1} parent=1 // pred_fallthru
      _
    // Predicated region
    $region26: #{discriminator_dann_forward.1} parent=1 // pred_check
      _
    $region27: #{discriminator_dann_forward.1} parent=1 // pred_check_branch
      %78 = sbr.rel (0) target = $region29
    $region28: #{discriminator_dann_forward.1} parent=1 // pred_region
      _
    $region29: #{discriminator_dann_forward.1} parent=1 // pred_fallthru
      _
    // Predicated region
    $region30: #{discriminator_dann_forward.1} parent=1 // pred_check
      _
    $region31: #{discriminator_dann_forward.1} parent=1 // pred_check_branch
      %80 = sbr.rel (0) target = $region33
    $region32: #{discriminator_dann_forward.1} parent=1 // pred_region
      %82 = dma.done [#allocation4], 2048
    $region33: #{discriminator_dann_forward.1} parent=1 // pred_fallthru
      _
    // Predicated region
    $region34: #{discriminator_dann_forward.1} parent=1 // pred_check
      _
    $region35: #{discriminator_dann_forward.1} parent=1 // pred_check_branch
      %84 = sbr.rel (0) target = $region37
    $region36: #{discriminator_dann_forward.1} parent=1 // pred_region
      %86 = dma.done [#allocation6], 128
    $region37: #{discriminator_dann_forward.1} parent=1 // pred_fallthru
      _
    // Predicated region
    $region38: #{discriminator_dann_forward.1} parent=1 // pred_check
      _
    $region39: #{discriminator_dann_forward.1} parent=1 // pred_check_branch
      %88 = sbr.rel (0) target = $region41
    $region40: #{discriminator_dann_forward.1} parent=1 // pred_region
      %90 = dma.done [#allocation6], 65536
    $region41: #{discriminator_dann_forward.1} parent=1 // pred_fallthru
      _
    // Predicated region
    $region42: #{discriminator_dann_forward.1} parent=1 // pred_check
      _
    $region43: #{discriminator_dann_forward.1} parent=1 // pred_check_branch
      %92 = sbr.rel (0) target = $region45
    $region44: #{discriminator_dann_forward.1} parent=1 // pred_region
      %94 = dma.done [#allocation9], 128
    $region45: #{discriminator_dann_forward.1} parent=1 // pred_fallthru
      _
    // Predicated region
    $region46: #{discriminator_dann_forward.1} parent=1 // pred_check
      _
    $region47: #{discriminator_dann_forward.1} parent=1 // pred_check_branch
      %96 = sbr.rel (0) target = $region49
    $region48: #{discriminator_dann_forward.1} parent=1 // pred_region
      %98 = dma.done [#allocation9], 128
    $region49: #{discriminator_dann_forward.1} parent=1 // pred_fallthru
      _
    %v100 = vld [vmem:[%s0] sm:$0xff]
    %v101 = vld [vmem:[%s0 + $0x8] sm:$0xff]
    %v102 = vpack.c.bf16 %v101, %v100
    %v103 = vld [vmem:[#allocation3] sm:$0xff]
    %v104 = vld [vmem:[#allocation3 + $0x8] sm:$0xff]
    %v105 = vld [vmem:[#allocation3 + $0x10] sm:$0xff]
    %v106 = vld [vmem:[#allocation3 + $0x18] sm:$0xff]
    %v107 = vld [vmem:[#allocation3 + $0x20] sm:$0xff]
    %v108 = vld [vmem:[#allocation3 + $0x28] sm:$0xff]
    %v109 = vld [vmem:[#allocation3 + $0x30] sm:$0xff]
    %v110 = vld [vmem:[#allocation3 + $0x38] sm:$0xff]
    %v111 = vld [vmem:[#allocation3 + $0x40] sm:$0xff]
    %v112 = vld [vmem:[#allocation3 + $0x48] sm:$0xff]
    %v113 = vld [vmem:[#allocation3 + $0x50] sm:$0xff]
    %v114 = vld [vmem:[#allocation3 + $0x58] sm:$0xff]
    %v115 = vld [vmem:[#allocation3 + $0x60] sm:$0xff]
    %v116 = vld [vmem:[#allocation3 + $0x68] sm:$0xff]
    %v117 = vld [vmem:[#allocation3 + $0x70] sm:$0xff]
    %v118 = vld [vmem:[#allocation3 + $0x78] sm:$0xff]
    %v119 = vld [vmem:[#allocation5] sm:$0xff]
    %v121 = vperm.slane %v119, 0
    %v122 = vperm.slane %v119, 1
    %v123 = vperm.slane %v119, 2
    %v124 = vperm.slane %v119, 3
    %v125 = vperm.slane %v119, 4
    %v126 = vperm.slane %v119, 5
    %v127 = vperm.slane %v119, 6
    %v128 = vperm.slane %v119, 7
    %v153 = vunpack.c.l.b16 %v103
    %v154 = vunpack.c.h.b16 %v103
    %v155 = vunpack.c.l.b16 %v104
    %v156 = vunpack.c.h.b16 %v104
    %v157 = vunpack.c.l.b16 %v105
    %v158 = vunpack.c.h.b16 %v105
    %v159 = vunpack.c.l.b16 %v106
    %v160 = vunpack.c.h.b16 %v106
    %v161 = vunpack.c.l.b16 %v107
    %v162 = vunpack.c.h.b16 %v107
    %v163 = vunpack.c.l.b16 %v108
    %v164 = vunpack.c.h.b16 %v108
    %v165 = vunpack.c.l.b16 %v109
    %v166 = vunpack.c.h.b16 %v109
    %v167 = vunpack.c.l.b16 %v110
    %v168 = vunpack.c.h.b16 %v110
    %v169 = vunpack.c.l.b16 %v111
    %v170 = vunpack.c.h.b16 %v111
    %v171 = vunpack.c.l.b16 %v112
    %v172 = vunpack.c.h.b16 %v112
    %v173 = vunpack.c.l.b16 %v113
    %v174 = vunpack.c.h.b16 %v113
    %v175 = vunpack.c.l.b16 %v114
    %v176 = vunpack.c.h.b16 %v114
    %v177 = vunpack.c.l.b16 %v115
    %v178 = vunpack.c.h.b16 %v115
    %v179 = vunpack.c.l.b16 %v116
    %v180 = vunpack.c.h.b16 %v116
    %v181 = vunpack.c.l.b16 %v117
    %v182 = vunpack.c.h.b16 %v117
    %v183 = vunpack.c.l.b16 %v118
    %v184 = vunpack.c.h.b16 %v118
    %v185 = vpack.c.b16 %v161, %v153
    %v186 = vpack.c.b16 %v162, %v154
    %v187 = vpack.c.b16 %v163, %v155
    %v188 = vpack.c.b16 %v164, %v156
    %v189 = vpack.c.b16 %v165, %v157
    %v190 = vpack.c.b16 %v166, %v158
    %v191 = vpack.c.b16 %v167, %v159
    %v192 = vpack.c.b16 %v168, %v160
    %v193 = vpack.c.b16 %v177, %v169
    %v194 = vpack.c.b16 %v178, %v170
    %v195 = vpack.c.b16 %v179, %v171
    %v196 = vpack.c.b16 %v180, %v172
    %v197 = vpack.c.b16 %v181, %v173
    %v198 = vpack.c.b16 %v182, %v174
    %v199 = vpack.c.b16 %v183, %v175
    %v200 = vpack.c.b16 %v184, %v176
    %vm217 = vcmask 261120
    %v219 = vsel %vm217, %v102, 0
    %221 = vmatpush.bf16.msra.mxu0 0
    %222 = vmatpush.bf16.msra.mxu0 0
    %223 = vmatpush.bf16.msra.mxu0 0
    %224 = vmatpush.bf16.msra.mxu0 0
    %225 = vmatpush.bf16.msra.mxu0 0
    %226 = vmatpush.bf16.msra.mxu0 0
    %227 = vmatpush.bf16.msra.mxu0 %v193
    %228 = vmatpush.bf16.msra.mxu0 %v185
    %229 = vmatmul.bf16.gmra.mxu0 %v219
    %v230 = vpop.f32.mrf.mxu0
    %v231 = vadd.f32 %v121, %v230
    %v232 = vpop.f32.mrf.mxu0
    %v233 = vadd.f32 %v121, %v232
    %234 = vdwg.mxu0
    %235 = vmatpush.bf16.msra.mxu0 0
    %236 = vmatpush.bf16.msra.mxu0 0
    %237 = vmatpush.bf16.msra.mxu0 0
    %238 = vmatpush.bf16.msra.mxu0 0
    %239 = vmatpush.bf16.msra.mxu0 0
    %240 = vmatpush.bf16.msra.mxu0 0
    %241 = vmatpush.bf16.msra.mxu0 %v194
    %242 = vmatpush.bf16.msra.mxu0 %v186
    %243 = vmatmul.bf16.gmra.mxu0 %v219
    %v244 = vpop.f32.mrf.mxu0
    %v245 = vadd.f32 %v122, %v244
    %v246 = vpop.f32.mrf.mxu0
    %v247 = vadd.f32 %v122, %v246
    %248 = vdwg.mxu0
    %249 = vmatpush.bf16.msra.mxu0 0
    %250 = vmatpush.bf16.msra.mxu0 0
    %251 = vmatpush.bf16.msra.mxu0 0
    %252 = vmatpush.bf16.msra.mxu0 0
    %253 = vmatpush.bf16.msra.mxu0 0
    %254 = vmatpush.bf16.msra.mxu0 0
    %255 = vmatpush.bf16.msra.mxu0 %v195
    %256 = vmatpush.bf16.msra.mxu0 %v187
    %257 = vmatmul.bf16.gmra.mxu0 %v219
    %v258 = vpop.f32.mrf.mxu0
    %v259 = vadd.f32 %v123, %v258
    %v260 = vpop.f32.mrf.mxu0
    %v261 = vadd.f32 %v123, %v260
    %262 = vdwg.mxu0
    %263 = vmatpush.bf16.msra.mxu0 0
    %264 = vmatpush.bf16.msra.mxu0 0
    %265 = vmatpush.bf16.msra.mxu0 0
    %266 = vmatpush.bf16.msra.mxu0 0
    %267 = vmatpush.bf16.msra.mxu0 0
    %268 = vmatpush.bf16.msra.mxu0 0
    %269 = vmatpush.bf16.msra.mxu0 %v196
    %270 = vmatpush.bf16.msra.mxu0 %v188
    %271 = vmatmul.bf16.gmra.mxu0 %v219
    %v272 = vpop.f32.mrf.mxu0
    %v273 = vadd.f32 %v124, %v272
    %v274 = vpop.f32.mrf.mxu0
    %v275 = vadd.f32 %v124, %v274
    %276 = vdwg.mxu0
    %277 = vmatpush.bf16.msra.mxu0 0
    %278 = vmatpush.bf16.msra.mxu0 0
    %279 = vmatpush.bf16.msra.mxu0 0
    %280 = vmatpush.bf16.msra.mxu0 0
    %281 = vmatpush.bf16.msra.mxu0 0
    %282 = vmatpush.bf16.msra.mxu0 0
    %283 = vmatpush.bf16.msra.mxu0 %v197
    %284 = vmatpush.bf16.msra.mxu0 %v189
    %285 = vmatmul.bf16.gmra.mxu0 %v219
    %v286 = vpop.f32.mrf.mxu0
    %v287 = vadd.f32 %v125, %v286
    %v288 = vpop.f32.mrf.mxu0
    %v289 = vadd.f32 %v125, %v288
    %290 = vdwg.mxu0
    %291 = vmatpush.bf16.msra.mxu0 0
    %292 = vmatpush.bf16.msra.mxu0 0
    %293 = vmatpush.bf16.msra.mxu0 0
    %294 = vmatpush.bf16.msra.mxu0 0
    %295 = vmatpush.bf16.msra.mxu0 0
    %296 = vmatpush.bf16.msra.mxu0 0
    %297 = vmatpush.bf16.msra.mxu0 %v198
    %298 = vmatpush.bf16.msra.mxu0 %v190
    %299 = vmatmul.bf16.gmra.mxu0 %v219
    %v300 = vpop.f32.mrf.mxu0
    %v301 = vadd.f32 %v126, %v300
    %v302 = vpop.f32.mrf.mxu0
    %v303 = vadd.f32 %v126, %v302
    %304 = vdwg.mxu0
    %305 = vmatpush.bf16.msra.mxu0 0
    %306 = vmatpush.bf16.msra.mxu0 0
    %307 = vmatpush.bf16.msra.mxu0 0
    %308 = vmatpush.bf16.msra.mxu0 0
    %309 = vmatpush.bf16.msra.mxu0 0
    %310 = vmatpush.bf16.msra.mxu0 0
    %311 = vmatpush.bf16.msra.mxu0 %v199
    %312 = vmatpush.bf16.msra.mxu0 %v191
    %313 = vmatmul.bf16.gmra.mxu0 %v219
    %v314 = vpop.f32.mrf.mxu0
    %v315 = vadd.f32 %v127, %v314
    %v316 = vpop.f32.mrf.mxu0
    %v317 = vadd.f32 %v127, %v316
    %318 = vdwg.mxu0
    %319 = vmatpush.bf16.msra.mxu0 0
    %320 = vmatpush.bf16.msra.mxu0 0
    %321 = vmatpush.bf16.msra.mxu0 0
    %322 = vmatpush.bf16.msra.mxu0 0
    %323 = vmatpush.bf16.msra.mxu0 0
    %324 = vmatpush.bf16.msra.mxu0 0
    %325 = vmatpush.bf16.msra.mxu0 %v200
    %326 = vmatpush.bf16.msra.mxu0 %v192
    %327 = vmatmul.bf16.gmra.mxu0 %v219
    %v328 = vpop.f32.mrf.mxu0
    %v329 = vadd.f32 %v128, %v328
    %v330 = vpop.f32.mrf.mxu0
    %v331 = vadd.f32 %v128, %v330
    %332 = vdwg.mxu0
    %v333 = vmax.f32 %v231, 0.0
    %v334 = vmax.f32 %v245, 0.0
    %v335 = vmax.f32 %v259, 0.0
    %v336 = vmax.f32 %v273, 0.0
    %v337 = vmax.f32 %v287, 0.0
    %v338 = vmax.f32 %v301, 0.0
    %v339 = vmax.f32 %v315, 0.0
    %v340 = vmax.f32 %v329, 0.0
    %v341 = vmax.f32 %v233, 0.0
    %v342 = vmax.f32 %v247, 0.0
    %v343 = vmax.f32 %v261, 0.0
    %v344 = vmax.f32 %v275, 0.0
    %v345 = vmax.f32 %v289, 0.0
    %v346 = vmax.f32 %v303, 0.0
    %v347 = vmax.f32 %v317, 0.0
    %v348 = vmax.f32 %v331, 0.0
    %v349 = vpack.c.bf16 %v341, %v333
    %v350 = vpack.c.bf16 %v342, %v334
    %v351 = vpack.c.bf16 %v343, %v335
    %v352 = vpack.c.bf16 %v344, %v336
    %v353 = vpack.c.bf16 %v345, %v337
    %v354 = vpack.c.bf16 %v346, %v338
    %v355 = vpack.c.bf16 %v347, %v339
    %v356 = vpack.c.bf16 %v348, %v340
    %v357 = vld [vmem:[#allocation7] sm:$0xff]
    %v358 = vld [vmem:[#allocation7 + $0x8] sm:$0xff]
    %v359 = vld [vmem:[#allocation7 + $0x10] sm:$0xff]
    %v360 = vld [vmem:[#allocation7 + $0x18] sm:$0xff]
    %v361 = vld [vmem:[#allocation7 + $0x20] sm:$0xff]
    %v362 = vld [vmem:[#allocation7 + $0x28] sm:$0xff]
    %v363 = vld [vmem:[#allocation7 + $0x30] sm:$0xff]
    %v364 = vld [vmem:[#allocation7 + $0x38] sm:$0xff]
    %v365 = vld [vmem:[#allocation7 + $0x40] sm:$0xff]
    %v366 = vld [vmem:[#allocation7 + $0x48] sm:$0xff]
    %v367 = vld [vmem:[#allocation7 + $0x50] sm:$0xff]
    %v368 = vld [vmem:[#allocation7 + $0x58] sm:$0xff]
    %v369 = vld [vmem:[#allocation7 + $0x60] sm:$0xff]
    %v370 = vld [vmem:[#allocation7 + $0x68] sm:$0xff]
    %v371 = vld [vmem:[#allocation7 + $0x70] sm:$0xff]
    %v372 = vld [vmem:[#allocation7 + $0x78] sm:$0xff]
    %v373 = vld [vmem:[#allocation7 + $0x80] sm:$0xff]
    %v374 = vld [vmem:[#allocation7 + $0x88] sm:$0xff]
    %v375 = vld [vmem:[#allocation7 + $0x90] sm:$0xff]
    %v376 = vld [vmem:[#allocation7 + $0x98] sm:$0xff]
    %v377 = vld [vmem:[#allocation7 + $0xa0] sm:$0xff]
    %v378 = vld [vmem:[#allocation7 + $0xa8] sm:$0xff]
    %v379 = vld [vmem:[#allocation7 + $0xb0] sm:$0xff]
    %v380 = vld [vmem:[#allocation7 + $0xb8] sm:$0xff]
    %v381 = vld [vmem:[#allocation7 + $0xc0] sm:$0xff]
    %v382 = vld [vmem:[#allocation7 + $0xc8] sm:$0xff]
    %v383 = vld [vmem:[#allocation7 + $0xd0] sm:$0xff]
    %v384 = vld [vmem:[#allocation7 + $0xd8] sm:$0xff]
    %v385 = vld [vmem:[#allocation7 + $0xe0] sm:$0xff]
    %v386 = vld [vmem:[#allocation7 + $0xe8] sm:$0xff]
    %v387 = vld [vmem:[#allocation7 + $0xf0] sm:$0xff]
    %v388 = vld [vmem:[#allocation7 + $0xf8] sm:$0xff]
    %v389 = vld [vmem:[#allocation7 + $0x100] sm:$0xff]
    %v390 = vld [vmem:[#allocation7 + $0x108] sm:$0xff]
    %v391 = vld [vmem:[#allocation7 + $0x110] sm:$0xff]
    %v392 = vld [vmem:[#allocation7 + $0x118] sm:$0xff]
    %v393 = vld [vmem:[#allocation7 + $0x120] sm:$0xff]
    %v394 = vld [vmem:[#allocation7 + $0x128] sm:$0xff]
    %v395 = vld [vmem:[#allocation7 + $0x130] sm:$0xff]
    %v396 = vld [vmem:[#allocation7 + $0x138] sm:$0xff]
    %v397 = vld [vmem:[#allocation7 + $0x140] sm:$0xff]
    %v398 = vld [vmem:[#allocation7 + $0x148] sm:$0xff]
    %v399 = vld [vmem:[#allocation7 + $0x150] sm:$0xff]
    %v400 = vld [vmem:[#allocation7 + $0x158] sm:$0xff]
    %v401 = vld [vmem:[#allocation7 + $0x160] sm:$0xff]
    %v402 = vld [vmem:[#allocation7 + $0x168] sm:$0xff]
    %v403 = vld [vmem:[#allocation7 + $0x170] sm:$0xff]
    %v404 = vld [vmem:[#allocation7 + $0x178] sm:$0xff]
    %v405 = vld [vmem:[#allocation7 + $0x180] sm:$0xff]
    %v406 = vld [vmem:[#allocation7 + $0x188] sm:$0xff]
    %v407 = vld [vmem:[#allocation7 + $0x190] sm:$0xff]
    %v408 = vld [vmem:[#allocation7 + $0x198] sm:$0xff]
    %v409 = vld [vmem:[#allocation7 + $0x1a0] sm:$0xff]
    %v410 = vld [vmem:[#allocation7 + $0x1a8] sm:$0xff]
    %v411 = vld [vmem:[#allocation7 + $0x1b0] sm:$0xff]
    %v412 = vld [vmem:[#allocation7 + $0x1b8] sm:$0xff]
    %v413 = vld [vmem:[#allocation7 + $0x1c0] sm:$0xff]
    %v414 = vld [vmem:[#allocation7 + $0x1c8] sm:$0xff]
    %v415 = vld [vmem:[#allocation7 + $0x1d0] sm:$0xff]
    %v416 = vld [vmem:[#allocation7 + $0x1d8] sm:$0xff]
    %v417 = vld [vmem:[#allocation7 + $0x1e0] sm:$0xff]
    %v418 = vld [vmem:[#allocation7 + $0x1e8] sm:$0xff]
    %v419 = vld [vmem:[#allocation7 + $0x1f0] sm:$0xff]
    %v420 = vld [vmem:[#allocation7 + $0x1f8] sm:$0xff]
    %v421 = vld [vmem:[#allocation7 + $0x200] sm:$0xff]
    %v422 = vld [vmem:[#allocation7 + $0x208] sm:$0xff]
    %v423 = vld [vmem:[#allocation7 + $0x210] sm:$0xff]
    %v424 = vld [vmem:[#allocation7 + $0x218] sm:$0xff]
    %v425 = vld [vmem:[#allocation7 + $0x220] sm:$0xff]
    %v426 = vld [vmem:[#allocation7 + $0x228] sm:$0xff]
    %v427 = vld [vmem:[#allocation7 + $0x230] sm:$0xff]
    %v428 = vld [vmem:[#allocation7 + $0x238] sm:$0xff]
    %v429 = vld [vmem:[#allocation7 + $0x240] sm:$0xff]
    %v430 = vld [vmem:[#allocation7 + $0x248] sm:$0xff]
    %v431 = vld [vmem:[#allocation7 + $0x250] sm:$0xff]
    %v432 = vld [vmem:[#allocation7 + $0x258] sm:$0xff]
    %v433 = vld [vmem:[#allocation7 + $0x260] sm:$0xff]
    %v434 = vld [vmem:[#allocation7 + $0x268] sm:$0xff]
    %v435 = vld [vmem:[#allocation7 + $0x270] sm:$0xff]
    %v436 = vld [vmem:[#allocation7 + $0x278] sm:$0xff]
    %v437 = vld [vmem:[#allocation7 + $0x280] sm:$0xff]
    %v438 = vld [vmem:[#allocation7 + $0x288] sm:$0xff]
    %v439 = vld [vmem:[#allocation7 + $0x290] sm:$0xff]
    %v440 = vld [vmem:[#allocation7 + $0x298] sm:$0xff]
    %v441 = vld [vmem:[#allocation7 + $0x2a0] sm:$0xff]
    %v442 = vld [vmem:[#allocation7 + $0x2a8] sm:$0xff]
    %v443 = vld [vmem:[#allocation7 + $0x2b0] sm:$0xff]
    %v444 = vld [vmem:[#allocation7 + $0x2b8] sm:$0xff]
    %v445 = vld [vmem:[#allocation7 + $0x2c0] sm:$0xff]
    %v446 = vld [vmem:[#allocation7 + $0x2c8] sm:$0xff]
    %v447 = vld [vmem:[#allocation7 + $0x2d0] sm:$0xff]
    %v448 = vld [vmem:[#allocation7 + $0x2d8] sm:$0xff]
    %v449 = vld [vmem:[#allocation7 + $0x2e0] sm:$0xff]
    %v450 = vld [vmem:[#allocation7 + $0x2e8] sm:$0xff]
    %v451 = vld [vmem:[#allocation7 + $0x2f0] sm:$0xff]
    %v452 = vld [vmem:[#allocation7 + $0x2f8] sm:$0xff]
    %v453 = vld [vmem:[#allocation7 + $0x300] sm:$0xff]
    %v454 = vld [vmem:[#allocation7 + $0x308] sm:$0xff]
    %v455 = vld [vmem:[#allocation7 + $0x310] sm:$0xff]
    %v456 = vld [vmem:[#allocation7 + $0x318] sm:$0xff]
    %v457 = vld [vmem:[#allocation7 + $0x320] sm:$0xff]
    %v458 = vld [vmem:[#allocation7 + $0x328] sm:$0xff]
    %v459 = vld [vmem:[#allocation7 + $0x330] sm:$0xff]
    %v460 = vld [vmem:[#allocation7 + $0x338] sm:$0xff]
    %v461 = vld [vmem:[#allocation7 + $0x340] sm:$0xff]
    %v462 = vld [vmem:[#allocation7 + $0x348] sm:$0xff]
    %v463 = vld [vmem:[#allocation7 + $0x350] sm:$0xff]
    %v464 = vld [vmem:[#allocation7 + $0x358] sm:$0xff]
    %v465 = vld [vmem:[#allocation7 + $0x360] sm:$0xff]
    %v466 = vld [vmem:[#allocation7 + $0x368] sm:$0xff]
    %v467 = vld [vmem:[#allocation7 + $0x370] sm:$0xff]
    %v468 = vld [vmem:[#allocation7 + $0x378] sm:$0xff]
    %v469 = vld [vmem:[#allocation7 + $0x380] sm:$0xff]
    %v470 = vld [vmem:[#allocation7 + $0x388] sm:$0xff]
    %v471 = vld [vmem:[#allocation7 + $0x390] sm:$0xff]
    %v472 = vld [vmem:[#allocation7 + $0x398] sm:$0xff]
    %v473 = vld [vmem:[#allocation7 + $0x3a0] sm:$0xff]
    %v474 = vld [vmem:[#allocation7 + $0x3a8] sm:$0xff]
    %v475 = vld [vmem:[#allocation7 + $0x3b0] sm:$0xff]
    %v476 = vld [vmem:[#allocation7 + $0x3b8] sm:$0xff]
    %v477 = vld [vmem:[#allocation7 + $0x3c0] sm:$0xff]
    %v478 = vld [vmem:[#allocation7 + $0x3c8] sm:$0xff]
    %v479 = vld [vmem:[#allocation7 + $0x3d0] sm:$0xff]
    %v480 = vld [vmem:[#allocation7 + $0x3d8] sm:$0xff]
    %v481 = vld [vmem:[#allocation7 + $0x3e0] sm:$0xff]
    %v482 = vld [vmem:[#allocation7 + $0x3e8] sm:$0xff]
    %v483 = vld [vmem:[#allocation7 + $0x3f0] sm:$0xff]
    %v484 = vld [vmem:[#allocation7 + $0x3f8] sm:$0xff]
    %v485 = vld [vmem:[#allocation7 + $0x400] sm:$0xff]
    %v486 = vld [vmem:[#allocation7 + $0x408] sm:$0xff]
    %v487 = vld [vmem:[#allocation7 + $0x410] sm:$0xff]
    %v488 = vld [vmem:[#allocation7 + $0x418] sm:$0xff]
    %v489 = vld [vmem:[#allocation7 + $0x420] sm:$0xff]
    %v490 = vld [vmem:[#allocation7 + $0x428] sm:$0xff]
    %v491 = vld [vmem:[#allocation7 + $0x430] sm:$0xff]
    %v492 = vld [vmem:[#allocation7 + $0x438] sm:$0xff]
    %v493 = vld [vmem:[#allocation7 + $0x440] sm:$0xff]
    %v494 = vld [vmem:[#allocation7 + $0x448] sm:$0xff]
    %v495 = vld [vmem:[#allocation7 + $0x450] sm:$0xff]
    %v496 = vld [vmem:[#allocation7 + $0x458] sm:$0xff]
    %v497 = vld [vmem:[#allocation7 + $0x460] sm:$0xff]
    %v498 = vld [vmem:[#allocation7 + $0x468] sm:$0xff]
    %v499 = vld [vmem:[#allocation7 + $0x470] sm:$0xff]
    %v500 = vld [vmem:[#allocation7 + $0x478] sm:$0xff]
    %v501 = vld [vmem:[#allocation7 + $0x480] sm:$0xff]
    %v502 = vld [vmem:[#allocation7 + $0x488] sm:$0xff]
    %v503 = vld [vmem:[#allocation7 + $0x490] sm:$0xff]
    %v504 = vld [vmem:[#allocation7 + $0x498] sm:$0xff]
    %v505 = vld [vmem:[#allocation7 + $0x4a0] sm:$0xff]
    %v506 = vld [vmem:[#allocation7 + $0x4a8] sm:$0xff]
    %v507 = vld [vmem:[#allocation7 + $0x4b0] sm:$0xff]
    %v508 = vld [vmem:[#allocation7 + $0x4b8] sm:$0xff]
    %v509 = vld [vmem:[#allocation7 + $0x4c0] sm:$0xff]
    %v510 = vld [vmem:[#allocation7 + $0x4c8] sm:$0xff]
    %v511 = vld [vmem:[#allocation7 + $0x4d0] sm:$0xff]
    %v512 = vld [vmem:[#allocation7 + $0x4d8] sm:$0xff]
    %v513 = vld [vmem:[#allocation7 + $0x4e0] sm:$0xff]
    %v514 = vld [vmem:[#allocation7 + $0x4e8] sm:$0xff]
    %v515 = vld [vmem:[#allocation7 + $0x4f0] sm:$0xff]
    %v516 = vld [vmem:[#allocation7 + $0x4f8] sm:$0xff]
    %v517 = vld [vmem:[#allocation7 + $0x500] sm:$0xff]
    %v518 = vld [vmem:[#allocation7 + $0x508] sm:$0xff]
    %v519 = vld [vmem:[#allocation7 + $0x510] sm:$0xff]
    %v520 = vld [vmem:[#allocation7 + $0x518] sm:$0xff]
    %v521 = vld [vmem:[#allocation7 + $0x520] sm:$0xff]
    %v522 = vld [vmem:[#allocation7 + $0x528] sm:$0xff]
    %v523 = vld [vmem:[#allocation7 + $0x530] sm:$0xff]
    %v524 = vld [vmem:[#allocation7 + $0x538] sm:$0xff]
    %v525 = vld [vmem:[#allocation7 + $0x540] sm:$0xff]
    %v526 = vld [vmem:[#allocation7 + $0x548] sm:$0xff]
    %v527 = vld [vmem:[#allocation7 + $0x550] sm:$0xff]
    %v528 = vld [vmem:[#allocation7 + $0x558] sm:$0xff]
    %v529 = vld [vmem:[#allocation7 + $0x560] sm:$0xff]
    %v530 = vld [vmem:[#allocation7 + $0x568] sm:$0xff]
    %v531 = vld [vmem:[#allocation7 + $0x570] sm:$0xff]
    %v532 = vld [vmem:[#allocation7 + $0x578] sm:$0xff]
    %v533 = vld [vmem:[#allocation7 + $0x580] sm:$0xff]
    %v534 = vld [vmem:[#allocation7 + $0x588] sm:$0xff]
    %v535 = vld [vmem:[#allocation7 + $0x590] sm:$0xff]
    %v536 = vld [vmem:[#allocation7 + $0x598] sm:$0xff]
    %v537 = vld [vmem:[#allocation7 + $0x5a0] sm:$0xff]
    %v538 = vld [vmem:[#allocation7 + $0x5a8] sm:$0xff]
    %v539 = vld [vmem:[#allocation7 + $0x5b0] sm:$0xff]
    %v540 = vld [vmem:[#allocation7 + $0x5b8] sm:$0xff]
    %v541 = vld [vmem:[#allocation7 + $0x5c0] sm:$0xff]
    %v542 = vld [vmem:[#allocation7 + $0x5c8] sm:$0xff]
    %v543 = vld [vmem:[#allocation7 + $0x5d0] sm:$0xff]
    %v544 = vld [vmem:[#allocation7 + $0x5d8] sm:$0xff]
    %v545 = vld [vmem:[#allocation7 + $0x5e0] sm:$0xff]
    %v546 = vld [vmem:[#allocation7 + $0x5e8] sm:$0xff]
    %v547 = vld [vmem:[#allocation7 + $0x5f0] sm:$0xff]
    %v548 = vld [vmem:[#allocation7 + $0x5f8] sm:$0xff]
    %v549 = vld [vmem:[#allocation7 + $0x600] sm:$0xff]
    %v550 = vld [vmem:[#allocation7 + $0x608] sm:$0xff]
    %v551 = vld [vmem:[#allocation7 + $0x610] sm:$0xff]
    %v552 = vld [vmem:[#allocation7 + $0x618] sm:$0xff]
    %v553 = vld [vmem:[#allocation7 + $0x620] sm:$0xff]
    %v554 = vld [vmem:[#allocation7 + $0x628] sm:$0xff]
    %v555 = vld [vmem:[#allocation7 + $0x630] sm:$0xff]
    %v556 = vld [vmem:[#allocation7 + $0x638] sm:$0xff]
    %v557 = vld [vmem:[#allocation7 + $0x640] sm:$0xff]
    %v558 = vld [vmem:[#allocation7 + $0x648] sm:$0xff]
    %v559 = vld [vmem:[#allocation7 + $0x650] sm:$0xff]
    %v560 = vld [vmem:[#allocation7 + $0x658] sm:$0xff]
    %v561 = vld [vmem:[#allocation7 + $0x660] sm:$0xff]
    %v562 = vld [vmem:[#allocation7 + $0x668] sm:$0xff]
    %v563 = vld [vmem:[#allocation7 + $0x670] sm:$0xff]
    %v564 = vld [vmem:[#allocation7 + $0x678] sm:$0xff]
    %v565 = vld [vmem:[#allocation7 + $0x680] sm:$0xff]
    %v566 = vld [vmem:[#allocation7 + $0x688] sm:$0xff]
    %v567 = vld [vmem:[#allocation7 + $0x690] sm:$0xff]
    %v568 = vld [vmem:[#allocation7 + $0x698] sm:$0xff]
    %v569 = vld [vmem:[#allocation7 + $0x6a0] sm:$0xff]
    %v570 = vld [vmem:[#allocation7 + $0x6a8] sm:$0xff]
    %v571 = vld [vmem:[#allocation7 + $0x6b0] sm:$0xff]
    %v572 = vld [vmem:[#allocation7 + $0x6b8] sm:$0xff]
    %v573 = vld [vmem:[#allocation7 + $0x6c0] sm:$0xff]
    %v574 = vld [vmem:[#allocation7 + $0x6c8] sm:$0xff]
    %v575 = vld [vmem:[#allocation7 + $0x6d0] sm:$0xff]
    %v576 = vld [vmem:[#allocation7 + $0x6d8] sm:$0xff]
    %v577 = vld [vmem:[#allocation7 + $0x6e0] sm:$0xff]
    %v578 = vld [vmem:[#allocation7 + $0x6e8] sm:$0xff]
    %v579 = vld [vmem:[#allocation7 + $0x6f0] sm:$0xff]
    %v580 = vld [vmem:[#allocation7 + $0x6f8] sm:$0xff]
    %v581 = vld [vmem:[#allocation7 + $0x700] sm:$0xff]
    %v582 = vld [vmem:[#allocation7 + $0x708] sm:$0xff]
    %v583 = vld [vmem:[#allocation7 + $0x710] sm:$0xff]
    %v584 = vld [vmem:[#allocation7 + $0x718] sm:$0xff]
    %v585 = vld [vmem:[#allocation7 + $0x720] sm:$0xff]
    %v586 = vld [vmem:[#allocation7 + $0x728] sm:$0xff]
    %v587 = vld [vmem:[#allocation7 + $0x730] sm:$0xff]
    %v588 = vld [vmem:[#allocation7 + $0x738] sm:$0xff]
    %v589 = vld [vmem:[#allocation7 + $0x740] sm:$0xff]
    %v590 = vld [vmem:[#allocation7 + $0x748] sm:$0xff]
    %v591 = vld [vmem:[#allocation7 + $0x750] sm:$0xff]
    %v592 = vld [vmem:[#allocation7 + $0x758] sm:$0xff]
    %v593 = vld [vmem:[#allocation7 + $0x760] sm:$0xff]
    %v594 = vld [vmem:[#allocation7 + $0x768] sm:$0xff]
    %v595 = vld [vmem:[#allocation7 + $0x770] sm:$0xff]
    %v596 = vld [vmem:[#allocation7 + $0x778] sm:$0xff]
    %v597 = vld [vmem:[#allocation7 + $0x780] sm:$0xff]
    %v598 = vld [vmem:[#allocation7 + $0x788] sm:$0xff]
    %v599 = vld [vmem:[#allocation7 + $0x790] sm:$0xff]
    %v600 = vld [vmem:[#allocation7 + $0x798] sm:$0xff]
    %v601 = vld [vmem:[#allocation7 + $0x7a0] sm:$0xff]
    %v602 = vld [vmem:[#allocation7 + $0x7a8] sm:$0xff]
    %v603 = vld [vmem:[#allocation7 + $0x7b0] sm:$0xff]
    %v604 = vld [vmem:[#allocation7 + $0x7b8] sm:$0xff]
    %v605 = vld [vmem:[#allocation7 + $0x7c0] sm:$0xff]
    %v606 = vld [vmem:[#allocation7 + $0x7c8] sm:$0xff]
    %v607 = vld [vmem:[#allocation7 + $0x7d0] sm:$0xff]
    %v608 = vld [vmem:[#allocation7 + $0x7d8] sm:$0xff]
    %v609 = vld [vmem:[#allocation7 + $0x7e0] sm:$0xff]
    %v610 = vld [vmem:[#allocation7 + $0x7e8] sm:$0xff]
    %v611 = vld [vmem:[#allocation7 + $0x7f0] sm:$0xff]
    %v612 = vld [vmem:[#allocation7 + $0x7f8] sm:$0xff]
    %v613 = vld [vmem:[#allocation7 + $0x800] sm:$0xff]
    %v614 = vld [vmem:[#allocation7 + $0x808] sm:$0xff]
    %v615 = vld [vmem:[#allocation7 + $0x810] sm:$0xff]
    %v616 = vld [vmem:[#allocation7 + $0x818] sm:$0xff]
    %v617 = vld [vmem:[#allocation7 + $0x820] sm:$0xff]
    %v618 = vld [vmem:[#allocation7 + $0x828] sm:$0xff]
    %v619 = vld [vmem:[#allocation7 + $0x830] sm:$0xff]
    %v620 = vld [vmem:[#allocation7 + $0x838] sm:$0xff]
    %v621 = vld [vmem:[#allocation7 + $0x840] sm:$0xff]
    %v622 = vld [vmem:[#allocation7 + $0x848] sm:$0xff]
    %v623 = vld [vmem:[#allocation7 + $0x850] sm:$0xff]
    %v624 = vld [vmem:[#allocation7 + $0x858] sm:$0xff]
    %v625 = vld [vmem:[#allocation7 + $0x860] sm:$0xff]
    %v626 = vld [vmem:[#allocation7 + $0x868] sm:$0xff]
    %v627 = vld [vmem:[#allocation7 + $0x870] sm:$0xff]
    %v628 = vld [vmem:[#allocation7 + $0x878] sm:$0xff]
    %v629 = vld [vmem:[#allocation7 + $0x880] sm:$0xff]
    %v630 = vld [vmem:[#allocation7 + $0x888] sm:$0xff]
    %v631 = vld [vmem:[#allocation7 + $0x890] sm:$0xff]
    %v632 = vld [vmem:[#allocation7 + $0x898] sm:$0xff]
    %v633 = vld [vmem:[#allocation7 + $0x8a0] sm:$0xff]
    %v634 = vld [vmem:[#allocation7 + $0x8a8] sm:$0xff]
    %v635 = vld [vmem:[#allocation7 + $0x8b0] sm:$0xff]
    %v636 = vld [vmem:[#allocation7 + $0x8b8] sm:$0xff]
    %v637 = vld [vmem:[#allocation7 + $0x8c0] sm:$0xff]
    %v638 = vld [vmem:[#allocation7 + $0x8c8] sm:$0xff]
    %v639 = vld [vmem:[#allocation7 + $0x8d0] sm:$0xff]
    %v640 = vld [vmem:[#allocation7 + $0x8d8] sm:$0xff]
    %v641 = vld [vmem:[#allocation7 + $0x8e0] sm:$0xff]
    %v642 = vld [vmem:[#allocation7 + $0x8e8] sm:$0xff]
    %v643 = vld [vmem:[#allocation7 + $0x8f0] sm:$0xff]
    %v644 = vld [vmem:[#allocation7 + $0x8f8] sm:$0xff]
    %v645 = vld [vmem:[#allocation7 + $0x900] sm:$0xff]
    %v646 = vld [vmem:[#allocation7 + $0x908] sm:$0xff]
    %v647 = vld [vmem:[#allocation7 + $0x910] sm:$0xff]
    %v648 = vld [vmem:[#allocation7 + $0x918] sm:$0xff]
    %v649 = vld [vmem:[#allocation7 + $0x920] sm:$0xff]
    %v650 = vld [vmem:[#allocation7 + $0x928] sm:$0xff]
    %v651 = vld [vmem:[#allocation7 + $0x930] sm:$0xff]
    %v652 = vld [vmem:[#allocation7 + $0x938] sm:$0xff]
    %v653 = vld [vmem:[#allocation7 + $0x940] sm:$0xff]
    %v654 = vld [vmem:[#allocation7 + $0x948] sm:$0xff]
    %v655 = vld [vmem:[#allocation7 + $0x950] sm:$0xff]
    %v656 = vld [vmem:[#allocation7 + $0x958] sm:$0xff]
    %v657 = vld [vmem:[#allocation7 + $0x960] sm:$0xff]
    %v658 = vld [vmem:[#allocation7 + $0x968] sm:$0xff]
    %v659 = vld [vmem:[#allocation7 + $0x970] sm:$0xff]
    %v660 = vld [vmem:[#allocation7 + $0x978] sm:$0xff]
    %v661 = vld [vmem:[#allocation7 + $0x980] sm:$0xff]
    %v662 = vld [vmem:[#allocation7 + $0x988] sm:$0xff]
    %v663 = vld [vmem:[#allocation7 + $0x990] sm:$0xff]
    %v664 = vld [vmem:[#allocation7 + $0x998] sm:$0xff]
    %v665 = vld [vmem:[#allocation7 + $0x9a0] sm:$0xff]
    %v666 = vld [vmem:[#allocation7 + $0x9a8] sm:$0xff]
    %v667 = vld [vmem:[#allocation7 + $0x9b0] sm:$0xff]
    %v668 = vld [vmem:[#allocation7 + $0x9b8] sm:$0xff]
    %v669 = vld [vmem:[#allocation7 + $0x9c0] sm:$0xff]
    %v670 = vld [vmem:[#allocation7 + $0x9c8] sm:$0xff]
    %v671 = vld [vmem:[#allocation7 + $0x9d0] sm:$0xff]
    %v672 = vld [vmem:[#allocation7 + $0x9d8] sm:$0xff]
    %v673 = vld [vmem:[#allocation7 + $0x9e0] sm:$0xff]
    %v674 = vld [vmem:[#allocation7 + $0x9e8] sm:$0xff]
    %v675 = vld [vmem:[#allocation7 + $0x9f0] sm:$0xff]
    %v676 = vld [vmem:[#allocation7 + $0x9f8] sm:$0xff]
    %v677 = vld [vmem:[#allocation7 + $0xa00] sm:$0xff]
    %v678 = vld [vmem:[#allocation7 + $0xa08] sm:$0xff]
    %v679 = vld [vmem:[#allocation7 + $0xa10] sm:$0xff]
    %v680 = vld [vmem:[#allocation7 + $0xa18] sm:$0xff]
    %v681 = vld [vmem:[#allocation7 + $0xa20] sm:$0xff]
    %v682 = vld [vmem:[#allocation7 + $0xa28] sm:$0xff]
    %v683 = vld [vmem:[#allocation7 + $0xa30] sm:$0xff]
    %v684 = vld [vmem:[#allocation7 + $0xa38] sm:$0xff]
    %v685 = vld [vmem:[#allocation7 + $0xa40] sm:$0xff]
    %v686 = vld [vmem:[#allocation7 + $0xa48] sm:$0xff]
    %v687 = vld [vmem:[#allocation7 + $0xa50] sm:$0xff]
    %v688 = vld [vmem:[#allocation7 + $0xa58] sm:$0xff]
    %v689 = vld [vmem:[#allocation7 + $0xa60] sm:$0xff]
    %v690 = vld [vmem:[#allocation7 + $0xa68] sm:$0xff]
    %v691 = vld [vmem:[#allocation7 + $0xa70] sm:$0xff]
    %v692 = vld [vmem:[#allocation7 + $0xa78] sm:$0xff]
    %v693 = vld [vmem:[#allocation7 + $0xa80] sm:$0xff]
    %v694 = vld [vmem:[#allocation7 + $0xa88] sm:$0xff]
    %v695 = vld [vmem:[#allocation7 + $0xa90] sm:$0xff]
    %v696 = vld [vmem:[#allocation7 + $0xa98] sm:$0xff]
    %v697 = vld [vmem:[#allocation7 + $0xaa0] sm:$0xff]
    %v698 = vld [vmem:[#allocation7 + $0xaa8] sm:$0xff]
    %v699 = vld [vmem:[#allocation7 + $0xab0] sm:$0xff]
    %v700 = vld [vmem:[#allocation7 + $0xab8] sm:$0xff]
    %v701 = vld [vmem:[#allocation7 + $0xac0] sm:$0xff]
    %v702 = vld [vmem:[#allocation7 + $0xac8] sm:$0xff]
    %v703 = vld [vmem:[#allocation7 + $0xad0] sm:$0xff]
    %v704 = vld [vmem:[#allocation7 + $0xad8] sm:$0xff]
    %v705 = vld [vmem:[#allocation7 + $0xae0] sm:$0xff]
    %v706 = vld [vmem:[#allocation7 + $0xae8] sm:$0xff]
    %v707 = vld [vmem:[#allocation7 + $0xaf0] sm:$0xff]
    %v708 = vld [vmem:[#allocation7 + $0xaf8] sm:$0xff]
    %v709 = vld [vmem:[#allocation7 + $0xb00] sm:$0xff]
    %v710 = vld [vmem:[#allocation7 + $0xb08] sm:$0xff]
    %v711 = vld [vmem:[#allocation7 + $0xb10] sm:$0xff]
    %v712 = vld [vmem:[#allocation7 + $0xb18] sm:$0xff]
    %v713 = vld [vmem:[#allocation7 + $0xb20] sm:$0xff]
    %v714 = vld [vmem:[#allocation7 + $0xb28] sm:$0xff]
    %v715 = vld [vmem:[#allocation7 + $0xb30] sm:$0xff]
    %v716 = vld [vmem:[#allocation7 + $0xb38] sm:$0xff]
    %v717 = vld [vmem:[#allocation7 + $0xb40] sm:$0xff]
    %v718 = vld [vmem:[#allocation7 + $0xb48] sm:$0xff]
    %v719 = vld [vmem:[#allocation7 + $0xb50] sm:$0xff]
    %v720 = vld [vmem:[#allocation7 + $0xb58] sm:$0xff]
    %v721 = vld [vmem:[#allocation7 + $0xb60] sm:$0xff]
    %v722 = vld [vmem:[#allocation7 + $0xb68] sm:$0xff]
    %v723 = vld [vmem:[#allocation7 + $0xb70] sm:$0xff]
    %v724 = vld [vmem:[#allocation7 + $0xb78] sm:$0xff]
    %v725 = vld [vmem:[#allocation7 + $0xb80] sm:$0xff]
    %v726 = vld [vmem:[#allocation7 + $0xb88] sm:$0xff]
    %v727 = vld [vmem:[#allocation7 + $0xb90] sm:$0xff]
    %v728 = vld [vmem:[#allocation7 + $0xb98] sm:$0xff]
    %v729 = vld [vmem:[#allocation7 + $0xba0] sm:$0xff]
    %v730 = vld [vmem:[#allocation7 + $0xba8] sm:$0xff]
    %v731 = vld [vmem:[#allocation7 + $0xbb0] sm:$0xff]
    %v732 = vld [vmem:[#allocation7 + $0xbb8] sm:$0xff]
    %v733 = vld [vmem:[#allocation7 + $0xbc0] sm:$0xff]
    %v734 = vld [vmem:[#allocation7 + $0xbc8] sm:$0xff]
    %v735 = vld [vmem:[#allocation7 + $0xbd0] sm:$0xff]
    %v736 = vld [vmem:[#allocation7 + $0xbd8] sm:$0xff]
    %v737 = vld [vmem:[#allocation7 + $0xbe0] sm:$0xff]
    %v738 = vld [vmem:[#allocation7 + $0xbe8] sm:$0xff]
    %v739 = vld [vmem:[#allocation7 + $0xbf0] sm:$0xff]
    %v740 = vld [vmem:[#allocation7 + $0xbf8] sm:$0xff]
    %v741 = vld [vmem:[#allocation7 + $0xc00] sm:$0xff]
    %v742 = vld [vmem:[#allocation7 + $0xc08] sm:$0xff]
    %v743 = vld [vmem:[#allocation7 + $0xc10] sm:$0xff]
    %v744 = vld [vmem:[#allocation7 + $0xc18] sm:$0xff]
    %v745 = vld [vmem:[#allocation7 + $0xc20] sm:$0xff]
    %v746 = vld [vmem:[#allocation7 + $0xc28] sm:$0xff]
    %v747 = vld [vmem:[#allocation7 + $0xc30] sm:$0xff]
    %v748 = vld [vmem:[#allocation7 + $0xc38] sm:$0xff]
    %v749 = vld [vmem:[#allocation7 + $0xc40] sm:$0xff]
    %v750 = vld [vmem:[#allocation7 + $0xc48] sm:$0xff]
    %v751 = vld [vmem:[#allocation7 + $0xc50] sm:$0xff]
    %v752 = vld [vmem:[#allocation7 + $0xc58] sm:$0xff]
    %v753 = vld [vmem:[#allocation7 + $0xc60] sm:$0xff]
    %v754 = vld [vmem:[#allocation7 + $0xc68] sm:$0xff]
    %v755 = vld [vmem:[#allocation7 + $0xc70] sm:$0xff]
    %v756 = vld [vmem:[#allocation7 + $0xc78] sm:$0xff]
    %v757 = vld [vmem:[#allocation7 + $0xc80] sm:$0xff]
    %v758 = vld [vmem:[#allocation7 + $0xc88] sm:$0xff]
    %v759 = vld [vmem:[#allocation7 + $0xc90] sm:$0xff]
    %v760 = vld [vmem:[#allocation7 + $0xc98] sm:$0xff]
    %v761 = vld [vmem:[#allocation7 + $0xca0] sm:$0xff]
    %v762 = vld [vmem:[#allocation7 + $0xca8] sm:$0xff]
    %v763 = vld [vmem:[#allocation7 + $0xcb0] sm:$0xff]
    %v764 = vld [vmem:[#allocation7 + $0xcb8] sm:$0xff]
    %v765 = vld [vmem:[#allocation7 + $0xcc0] sm:$0xff]
    %v766 = vld [vmem:[#allocation7 + $0xcc8] sm:$0xff]
    %v767 = vld [vmem:[#allocation7 + $0xcd0] sm:$0xff]
    %v768 = vld [vmem:[#allocation7 + $0xcd8] sm:$0xff]
    %v769 = vld [vmem:[#allocation7 + $0xce0] sm:$0xff]
    %v770 = vld [vmem:[#allocation7 + $0xce8] sm:$0xff]
    %v771 = vld [vmem:[#allocation7 + $0xcf0] sm:$0xff]
    %v772 = vld [vmem:[#allocation7 + $0xcf8] sm:$0xff]
    %v773 = vld [vmem:[#allocation7 + $0xd00] sm:$0xff]
    %v774 = vld [vmem:[#allocation7 + $0xd08] sm:$0xff]
    %v775 = vld [vmem:[#allocation7 + $0xd10] sm:$0xff]
    %v776 = vld [vmem:[#allocation7 + $0xd18] sm:$0xff]
    %v777 = vld [vmem:[#allocation7 + $0xd20] sm:$0xff]
    %v778 = vld [vmem:[#allocation7 + $0xd28] sm:$0xff]
    %v779 = vld [vmem:[#allocation7 + $0xd30] sm:$0xff]
    %v780 = vld [vmem:[#allocation7 + $0xd38] sm:$0xff]
    %v781 = vld [vmem:[#allocation7 + $0xd40] sm:$0xff]
    %v782 = vld [vmem:[#allocation7 + $0xd48] sm:$0xff]
    %v783 = vld [vmem:[#allocation7 + $0xd50] sm:$0xff]
    %v784 = vld [vmem:[#allocation7 + $0xd58] sm:$0xff]
    %v785 = vld [vmem:[#allocation7 + $0xd60] sm:$0xff]
    %v786 = vld [vmem:[#allocation7 + $0xd68] sm:$0xff]
    %v787 = vld [vmem:[#allocation7 + $0xd70] sm:$0xff]
    %v788 = vld [vmem:[#allocation7 + $0xd78] sm:$0xff]
    %v789 = vld [vmem:[#allocation7 + $0xd80] sm:$0xff]
    %v790 = vld [vmem:[#allocation7 + $0xd88] sm:$0xff]
    %v791 = vld [vmem:[#allocation7 + $0xd90] sm:$0xff]
    %v792 = vld [vmem:[#allocation7 + $0xd98] sm:$0xff]
    %v793 = vld [vmem:[#allocation7 + $0xda0] sm:$0xff]
    %v794 = vld [vmem:[#allocation7 + $0xda8] sm:$0xff]
    %v795 = vld [vmem:[#allocation7 + $0xdb0] sm:$0xff]
    %v796 = vld [vmem:[#allocation7 + $0xdb8] sm:$0xff]
    %v797 = vld [vmem:[#allocation7 + $0xdc0] sm:$0xff]
    %v798 = vld [vmem:[#allocation7 + $0xdc8] sm:$0xff]
    %v799 = vld [vmem:[#allocation7 + $0xdd0] sm:$0xff]
    %v800 = vld [vmem:[#allocation7 + $0xdd8] sm:$0xff]
    %v801 = vld [vmem:[#allocation7 + $0xde0] sm:$0xff]
    %v802 = vld [vmem:[#allocation7 + $0xde8] sm:$0xff]
    %v803 = vld [vmem:[#allocation7 + $0xdf0] sm:$0xff]
    %v804 = vld [vmem:[#allocation7 + $0xdf8] sm:$0xff]
    %v805 = vld [vmem:[#allocation7 + $0xe00] sm:$0xff]
    %v806 = vld [vmem:[#allocation7 + $0xe08] sm:$0xff]
    %v807 = vld [vmem:[#allocation7 + $0xe10] sm:$0xff]
    %v808 = vld [vmem:[#allocation7 + $0xe18] sm:$0xff]
    %v809 = vld [vmem:[#allocation7 + $0xe20] sm:$0xff]
    %v810 = vld [vmem:[#allocation7 + $0xe28] sm:$0xff]
    %v811 = vld [vmem:[#allocation7 + $0xe30] sm:$0xff]
    %v812 = vld [vmem:[#allocation7 + $0xe38] sm:$0xff]
    %v813 = vld [vmem:[#allocation7 + $0xe40] sm:$0xff]
    %v814 = vld [vmem:[#allocation7 + $0xe48] sm:$0xff]
    %v815 = vld [vmem:[#allocation7 + $0xe50] sm:$0xff]
    %v816 = vld [vmem:[#allocation7 + $0xe58] sm:$0xff]
    %v817 = vld [vmem:[#allocation7 + $0xe60] sm:$0xff]
    %v818 = vld [vmem:[#allocation7 + $0xe68] sm:$0xff]
    %v819 = vld [vmem:[#allocation7 + $0xe70] sm:$0xff]
    %v820 = vld [vmem:[#allocation7 + $0xe78] sm:$0xff]
    %v821 = vld [vmem:[#allocation7 + $0xe80] sm:$0xff]
    %v822 = vld [vmem:[#allocation7 + $0xe88] sm:$0xff]
    %v823 = vld [vmem:[#allocation7 + $0xe90] sm:$0xff]
    %v824 = vld [vmem:[#allocation7 + $0xe98] sm:$0xff]
    %v825 = vld [vmem:[#allocation7 + $0xea0] sm:$0xff]
    %v826 = vld [vmem:[#allocation7 + $0xea8] sm:$0xff]
    %v827 = vld [vmem:[#allocation7 + $0xeb0] sm:$0xff]
    %v828 = vld [vmem:[#allocation7 + $0xeb8] sm:$0xff]
    %v829 = vld [vmem:[#allocation7 + $0xec0] sm:$0xff]
    %v830 = vld [vmem:[#allocation7 + $0xec8] sm:$0xff]
    %v831 = vld [vmem:[#allocation7 + $0xed0] sm:$0xff]
    %v832 = vld [vmem:[#allocation7 + $0xed8] sm:$0xff]
    %v833 = vld [vmem:[#allocation7 + $0xee0] sm:$0xff]
    %v834 = vld [vmem:[#allocation7 + $0xee8] sm:$0xff]
    %v835 = vld [vmem:[#allocation7 + $0xef0] sm:$0xff]
    %v836 = vld [vmem:[#allocation7 + $0xef8] sm:$0xff]
    %v837 = vld [vmem:[#allocation7 + $0xf00] sm:$0xff]
    %v838 = vld [vmem:[#allocation7 + $0xf08] sm:$0xff]
    %v839 = vld [vmem:[#allocation7 + $0xf10] sm:$0xff]
    %v840 = vld [vmem:[#allocation7 + $0xf18] sm:$0xff]
    %v841 = vld [vmem:[#allocation7 + $0xf20] sm:$0xff]
    %v842 = vld [vmem:[#allocation7 + $0xf28] sm:$0xff]
    %v843 = vld [vmem:[#allocation7 + $0xf30] sm:$0xff]
    %v844 = vld [vmem:[#allocation7 + $0xf38] sm:$0xff]
    %v845 = vld [vmem:[#allocation7 + $0xf40] sm:$0xff]
    %v846 = vld [vmem:[#allocation7 + $0xf48] sm:$0xff]
    %v847 = vld [vmem:[#allocation7 + $0xf50] sm:$0xff]
    %v848 = vld [vmem:[#allocation7 + $0xf58] sm:$0xff]
    %v849 = vld [vmem:[#allocation7 + $0xf60] sm:$0xff]
    %v850 = vld [vmem:[#allocation7 + $0xf68] sm:$0xff]
    %v851 = vld [vmem:[#allocation7 + $0xf70] sm:$0xff]
    %v852 = vld [vmem:[#allocation7 + $0xf78] sm:$0xff]
    %v853 = vld [vmem:[#allocation7 + $0xf80] sm:$0xff]
    %v854 = vld [vmem:[#allocation7 + $0xf88] sm:$0xff]
    %v855 = vld [vmem:[#allocation7 + $0xf90] sm:$0xff]
    %v856 = vld [vmem:[#allocation7 + $0xf98] sm:$0xff]
    %v857 = vld [vmem:[#allocation7 + $0xfa0] sm:$0xff]
    %v858 = vld [vmem:[#allocation7 + $0xfa8] sm:$0xff]
    %v859 = vld [vmem:[#allocation7 + $0xfb0] sm:$0xff]
    %v860 = vld [vmem:[#allocation7 + $0xfb8] sm:$0xff]
    %v861 = vld [vmem:[#allocation7 + $0xfc0] sm:$0xff]
    %v862 = vld [vmem:[#allocation7 + $0xfc8] sm:$0xff]
    %v863 = vld [vmem:[#allocation7 + $0xfd0] sm:$0xff]
    %v864 = vld [vmem:[#allocation7 + $0xfd8] sm:$0xff]
    %v865 = vld [vmem:[#allocation7 + $0xfe0] sm:$0xff]
    %v866 = vld [vmem:[#allocation7 + $0xfe8] sm:$0xff]
    %v867 = vld [vmem:[#allocation7 + $0xff0] sm:$0xff]
    %v868 = vld [vmem:[#allocation7 + $0xff8] sm:$0xff]
    %v869 = vld [vmem:[#allocation8] sm:$0xff]
    %v871 = vperm.slane %v869, 0
    %v872 = vperm.slane %v869, 1
    %v873 = vperm.slane %v869, 2
    %v874 = vperm.slane %v869, 3
    %v875 = vperm.slane %v869, 4
    %v876 = vperm.slane %v869, 5
    %v877 = vperm.slane %v869, 6
    %v878 = vperm.slane %v869, 7
    %v1399 = vunpack.c.l.b16 %v357
    %v1400 = vunpack.c.h.b16 %v357
    %v1401 = vunpack.c.l.b16 %v358
    %v1402 = vunpack.c.h.b16 %v358
    %v1403 = vunpack.c.l.b16 %v359
    %v1404 = vunpack.c.h.b16 %v359
    %v1405 = vunpack.c.l.b16 %v360
    %v1406 = vunpack.c.h.b16 %v360
    %v1407 = vunpack.c.l.b16 %v361
    %v1408 = vunpack.c.h.b16 %v361
    %v1409 = vunpack.c.l.b16 %v362
    %v1410 = vunpack.c.h.b16 %v362
    %v1411 = vunpack.c.l.b16 %v363
    %v1412 = vunpack.c.h.b16 %v363
    %v1413 = vunpack.c.l.b16 %v364
    %v1414 = vunpack.c.h.b16 %v364
    %v1415 = vunpack.c.l.b16 %v365
    %v1416 = vunpack.c.h.b16 %v365
    %v1417 = vunpack.c.l.b16 %v366
    %v1418 = vunpack.c.h.b16 %v366
    %v1419 = vunpack.c.l.b16 %v367
    %v1420 = vunpack.c.h.b16 %v367
    %v1421 = vunpack.c.l.b16 %v368
    %v1422 = vunpack.c.h.b16 %v368
    %v1423 = vunpack.c.l.b16 %v369
    %v1424 = vunpack.c.h.b16 %v369
    %v1425 = vunpack.c.l.b16 %v370
    %v1426 = vunpack.c.h.b16 %v370
    %v1427 = vunpack.c.l.b16 %v371
    %v1428 = vunpack.c.h.b16 %v371
    %v1429 = vunpack.c.l.b16 %v372
    %v1430 = vunpack.c.h.b16 %v372
    %v1431 = vunpack.c.l.b16 %v373
    %v1432 = vunpack.c.h.b16 %v373
    %v1433 = vunpack.c.l.b16 %v374
    %v1434 = vunpack.c.h.b16 %v374
    %v1435 = vunpack.c.l.b16 %v375
    %v1436 = vunpack.c.h.b16 %v375
    %v1437 = vunpack.c.l.b16 %v376
    %v1438 = vunpack.c.h.b16 %v376
    %v1439 = vunpack.c.l.b16 %v377
    %v1440 = vunpack.c.h.b16 %v377
    %v1441 = vunpack.c.l.b16 %v378
    %v1442 = vunpack.c.h.b16 %v378
    %v1443 = vunpack.c.l.b16 %v379
    %v1444 = vunpack.c.h.b16 %v379
    %v1445 = vunpack.c.l.b16 %v380
    %v1446 = vunpack.c.h.b16 %v380
    %v1447 = vunpack.c.l.b16 %v381
    %v1448 = vunpack.c.h.b16 %v381
    %v1449 = vunpack.c.l.b16 %v382
    %v1450 = vunpack.c.h.b16 %v382
    %v1451 = vunpack.c.l.b16 %v383
    %v1452 = vunpack.c.h.b16 %v383
    %v1453 = vunpack.c.l.b16 %v384
    %v1454 = vunpack.c.h.b16 %v384
    %v1455 = vunpack.c.l.b16 %v385
    %v1456 = vunpack.c.h.b16 %v385
    %v1457 = vunpack.c.l.b16 %v386
    %v1458 = vunpack.c.h.b16 %v386
    %v1459 = vunpack.c.l.b16 %v387
    %v1460 = vunpack.c.h.b16 %v387
    %v1461 = vunpack.c.l.b16 %v388
    %v1462 = vunpack.c.h.b16 %v388
    %v1463 = vunpack.c.l.b16 %v389
    %v1464 = vunpack.c.h.b16 %v389
    %v1465 = vunpack.c.l.b16 %v390
    %v1466 = vunpack.c.h.b16 %v390
    %v1467 = vunpack.c.l.b16 %v391
    %v1468 = vunpack.c.h.b16 %v391
    %v1469 = vunpack.c.l.b16 %v392
    %v1470 = vunpack.c.h.b16 %v392
    %v1471 = vunpack.c.l.b16 %v393
    %v1472 = vunpack.c.h.b16 %v393
    %v1473 = vunpack.c.l.b16 %v394
    %v1474 = vunpack.c.h.b16 %v394
    %v1475 = vunpack.c.l.b16 %v395
    %v1476 = vunpack.c.h.b16 %v395
    %v1477 = vunpack.c.l.b16 %v396
    %v1478 = vunpack.c.h.b16 %v396
    %v1479 = vunpack.c.l.b16 %v397
    %v1480 = vunpack.c.h.b16 %v397
    %v1481 = vunpack.c.l.b16 %v398
    %v1482 = vunpack.c.h.b16 %v398
    %v1483 = vunpack.c.l.b16 %v399
    %v1484 = vunpack.c.h.b16 %v399
    %v1485 = vunpack.c.l.b16 %v400
    %v1486 = vunpack.c.h.b16 %v400
    %v1487 = vunpack.c.l.b16 %v401
    %v1488 = vunpack.c.h.b16 %v401
    %v1489 = vunpack.c.l.b16 %v402
    %v1490 = vunpack.c.h.b16 %v402
    %v1491 = vunpack.c.l.b16 %v403
    %v1492 = vunpack.c.h.b16 %v403
    %v1493 = vunpack.c.l.b16 %v404
    %v1494 = vunpack.c.h.b16 %v404
    %v1495 = vunpack.c.l.b16 %v405
    %v1496 = vunpack.c.h.b16 %v405
    %v1497 = vunpack.c.l.b16 %v406
    %v1498 = vunpack.c.h.b16 %v406
    %v1499 = vunpack.c.l.b16 %v407
    %v1500 = vunpack.c.h.b16 %v407
    %v1501 = vunpack.c.l.b16 %v408
    %v1502 = vunpack.c.h.b16 %v408
    %v1503 = vunpack.c.l.b16 %v409
    %v1504 = vunpack.c.h.b16 %v409
    %v1505 = vunpack.c.l.b16 %v410
    %v1506 = vunpack.c.h.b16 %v410
    %v1507 = vunpack.c.l.b16 %v411
    %v1508 = vunpack.c.h.b16 %v411
    %v1509 = vunpack.c.l.b16 %v412
    %v1510 = vunpack.c.h.b16 %v412
    %v1511 = vunpack.c.l.b16 %v413
    %v1512 = vunpack.c.h.b16 %v413
    %v1513 = vunpack.c.l.b16 %v414
    %v1514 = vunpack.c.h.b16 %v414
    %v1515 = vunpack.c.l.b16 %v415
    %v1516 = vunpack.c.h.b16 %v415
    %v1517 = vunpack.c.l.b16 %v416
    %v1518 = vunpack.c.h.b16 %v416
    %v1519 = vunpack.c.l.b16 %v417
    %v1520 = vunpack.c.h.b16 %v417
    %v1521 = vunpack.c.l.b16 %v418
    %v1522 = vunpack.c.h.b16 %v418
    %v1523 = vunpack.c.l.b16 %v419
    %v1524 = vunpack.c.h.b16 %v419
    %v1525 = vunpack.c.l.b16 %v420
    %v1526 = vunpack.c.h.b16 %v420
    %v1527 = vunpack.c.l.b16 %v421
    %v1528 = vunpack.c.h.b16 %v421
    %v1529 = vunpack.c.l.b16 %v422
    %v1530 = vunpack.c.h.b16 %v422
    %v1531 = vunpack.c.l.b16 %v423
    %v1532 = vunpack.c.h.b16 %v423
    %v1533 = vunpack.c.l.b16 %v424
    %v1534 = vunpack.c.h.b16 %v424
    %v1535 = vunpack.c.l.b16 %v425
    %v1536 = vunpack.c.h.b16 %v425
    %v1537 = vunpack.c.l.b16 %v426
    %v1538 = vunpack.c.h.b16 %v426
    %v1539 = vunpack.c.l.b16 %v427
    %v1540 = vunpack.c.h.b16 %v427
    %v1541 = vunpack.c.l.b16 %v428
    %v1542 = vunpack.c.h.b16 %v428
    %v1543 = vunpack.c.l.b16 %v429
    %v1544 = vunpack.c.h.b16 %v429
    %v1545 = vunpack.c.l.b16 %v430
    %v1546 = vunpack.c.h.b16 %v430
    %v1547 = vunpack.c.l.b16 %v431
    %v1548 = vunpack.c.h.b16 %v431
    %v1549 = vunpack.c.l.b16 %v432
    %v1550 = vunpack.c.h.b16 %v432
    %v1551 = vunpack.c.l.b16 %v433
    %v1552 = vunpack.c.h.b16 %v433
    %v1553 = vunpack.c.l.b16 %v434
    %v1554 = vunpack.c.h.b16 %v434
    %v1555 = vunpack.c.l.b16 %v435
    %v1556 = vunpack.c.h.b16 %v435
    %v1557 = vunpack.c.l.b16 %v436
    %v1558 = vunpack.c.h.b16 %v436
    %v1559 = vunpack.c.l.b16 %v437
    %v1560 = vunpack.c.h.b16 %v437
    %v1561 = vunpack.c.l.b16 %v438
    %v1562 = vunpack.c.h.b16 %v438
    %v1563 = vunpack.c.l.b16 %v439
    %v1564 = vunpack.c.h.b16 %v439
    %v1565 = vunpack.c.l.b16 %v440
    %v1566 = vunpack.c.h.b16 %v440
    %v1567 = vunpack.c.l.b16 %v441
    %v1568 = vunpack.c.h.b16 %v441
    %v1569 = vunpack.c.l.b16 %v442
    %v1570 = vunpack.c.h.b16 %v442
    %v1571 = vunpack.c.l.b16 %v443
    %v1572 = vunpack.c.h.b16 %v443
    %v1573 = vunpack.c.l.b16 %v444
    %v1574 = vunpack.c.h.b16 %v444
    %v1575 = vunpack.c.l.b16 %v445
    %v1576 = vunpack.c.h.b16 %v445
    %v1577 = vunpack.c.l.b16 %v446
    %v1578 = vunpack.c.h.b16 %v446
    %v1579 = vunpack.c.l.b16 %v447
    %v1580 = vunpack.c.h.b16 %v447
    %v1581 = vunpack.c.l.b16 %v448
    %v1582 = vunpack.c.h.b16 %v448
    %v1583 = vunpack.c.l.b16 %v449
    %v1584 = vunpack.c.h.b16 %v449
    %v1585 = vunpack.c.l.b16 %v450
    %v1586 = vunpack.c.h.b16 %v450
    %v1587 = vunpack.c.l.b16 %v451
    %v1588 = vunpack.c.h.b16 %v451
    %v1589 = vunpack.c.l.b16 %v452
    %v1590 = vunpack.c.h.b16 %v452
    %v1591 = vunpack.c.l.b16 %v453
    %v1592 = vunpack.c.h.b16 %v453
    %v1593 = vunpack.c.l.b16 %v454
    %v1594 = vunpack.c.h.b16 %v454
    %v1595 = vunpack.c.l.b16 %v455
    %v1596 = vunpack.c.h.b16 %v455
    %v1597 = vunpack.c.l.b16 %v456
    %v1598 = vunpack.c.h.b16 %v456
    %v1599 = vunpack.c.l.b16 %v457
    %v1600 = vunpack.c.h.b16 %v457
    %v1601 = vunpack.c.l.b16 %v458
    %v1602 = vunpack.c.h.b16 %v458
    %v1603 = vunpack.c.l.b16 %v459
    %v1604 = vunpack.c.h.b16 %v459
    %v1605 = vunpack.c.l.b16 %v460
    %v1606 = vunpack.c.h.b16 %v460
    %v1607 = vunpack.c.l.b16 %v461
    %v1608 = vunpack.c.h.b16 %v461
    %v1609 = vunpack.c.l.b16 %v462
    %v1610 = vunpack.c.h.b16 %v462
    %v1611 = vunpack.c.l.b16 %v463
    %v1612 = vunpack.c.h.b16 %v463
    %v1613 = vunpack.c.l.b16 %v464
    %v1614 = vunpack.c.h.b16 %v464
    %v1615 = vunpack.c.l.b16 %v465
    %v1616 = vunpack.c.h.b16 %v465
    %v1617 = vunpack.c.l.b16 %v466
    %v1618 = vunpack.c.h.b16 %v466
    %v1619 = vunpack.c.l.b16 %v467
    %v1620 = vunpack.c.h.b16 %v467
    %v1621 = vunpack.c.l.b16 %v468
    %v1622 = vunpack.c.h.b16 %v468
    %v1623 = vunpack.c.l.b16 %v469
    %v1624 = vunpack.c.h.b16 %v469
    %v1625 = vunpack.c.l.b16 %v470
    %v1626 = vunpack.c.h.b16 %v470
    %v1627 = vunpack.c.l.b16 %v471
    %v1628 = vunpack.c.h.b16 %v471
    %v1629 = vunpack.c.l.b16 %v472
    %v1630 = vunpack.c.h.b16 %v472
    %v1631 = vunpack.c.l.b16 %v473
    %v1632 = vunpack.c.h.b16 %v473
    %v1633 = vunpack.c.l.b16 %v474
    %v1634 = vunpack.c.h.b16 %v474
    %v1635 = vunpack.c.l.b16 %v475
    %v1636 = vunpack.c.h.b16 %v475
    %v1637 = vunpack.c.l.b16 %v476
    %v1638 = vunpack.c.h.b16 %v476
    %v1639 = vunpack.c.l.b16 %v477
    %v1640 = vunpack.c.h.b16 %v477
    %v1641 = vunpack.c.l.b16 %v478
    %v1642 = vunpack.c.h.b16 %v478
    %v1643 = vunpack.c.l.b16 %v479
    %v1644 = vunpack.c.h.b16 %v479
    %v1645 = vunpack.c.l.b16 %v480
    %v1646 = vunpack.c.h.b16 %v480
    %v1647 = vunpack.c.l.b16 %v481
    %v1648 = vunpack.c.h.b16 %v481
    %v1649 = vunpack.c.l.b16 %v482
    %v1650 = vunpack.c.h.b16 %v482
    %v1651 = vunpack.c.l.b16 %v483
    %v1652 = vunpack.c.h.b16 %v483
    %v1653 = vunpack.c.l.b16 %v484
    %v1654 = vunpack.c.h.b16 %v484
    %v1655 = vunpack.c.l.b16 %v485
    %v1656 = vunpack.c.h.b16 %v485
    %v1657 = vunpack.c.l.b16 %v486
    %v1658 = vunpack.c.h.b16 %v486
    %v1659 = vunpack.c.l.b16 %v487
    %v1660 = vunpack.c.h.b16 %v487
    %v1661 = vunpack.c.l.b16 %v488
    %v1662 = vunpack.c.h.b16 %v488
    %v1663 = vunpack.c.l.b16 %v489
    %v1664 = vunpack.c.h.b16 %v489
    %v1665 = vunpack.c.l.b16 %v490
    %v1666 = vunpack.c.h.b16 %v490
    %v1667 = vunpack.c.l.b16 %v491
    %v1668 = vunpack.c.h.b16 %v491
    %v1669 = vunpack.c.l.b16 %v492
    %v1670 = vunpack.c.h.b16 %v492
    %v1671 = vunpack.c.l.b16 %v493
    %v1672 = vunpack.c.h.b16 %v493
    %v1673 = vunpack.c.l.b16 %v494
    %v1674 = vunpack.c.h.b16 %v494
    %v1675 = vunpack.c.l.b16 %v495
    %v1676 = vunpack.c.h.b16 %v495
    %v1677 = vunpack.c.l.b16 %v496
    %v1678 = vunpack.c.h.b16 %v496
    %v1679 = vunpack.c.l.b16 %v497
    %v1680 = vunpack.c.h.b16 %v497
    %v1681 = vunpack.c.l.b16 %v498
    %v1682 = vunpack.c.h.b16 %v498
    %v1683 = vunpack.c.l.b16 %v499
    %v1684 = vunpack.c.h.b16 %v499
    %v1685 = vunpack.c.l.b16 %v500
    %v1686 = vunpack.c.h.b16 %v500
    %v1687 = vunpack.c.l.b16 %v501
    %v1688 = vunpack.c.h.b16 %v501
    %v1689 = vunpack.c.l.b16 %v502
    %v1690 = vunpack.c.h.b16 %v502
    %v1691 = vunpack.c.l.b16 %v503
    %v1692 = vunpack.c.h.b16 %v503
    %v1693 = vunpack.c.l.b16 %v504
    %v1694 = vunpack.c.h.b16 %v504
    %v1695 = vunpack.c.l.b16 %v505
    %v1696 = vunpack.c.h.b16 %v505
    %v1697 = vunpack.c.l.b16 %v506
    %v1698 = vunpack.c.h.b16 %v506
    %v1699 = vunpack.c.l.b16 %v507
    %v1700 = vunpack.c.h.b16 %v507
    %v1701 = vunpack.c.l.b16 %v508
    %v1702 = vunpack.c.h.b16 %v508
    %v1703 = vunpack.c.l.b16 %v509
    %v1704 = vunpack.c.h.b16 %v509
    %v1705 = vunpack.c.l.b16 %v510
    %v1706 = vunpack.c.h.b16 %v510
    %v1707 = vunpack.c.l.b16 %v511
    %v1708 = vunpack.c.h.b16 %v511
    %v1709 = vunpack.c.l.b16 %v512
    %v1710 = vunpack.c.h.b16 %v512
    %v1711 = vunpack.c.l.b16 %v513
    %v1712 = vunpack.c.h.b16 %v513
    %v1713 = vunpack.c.l.b16 %v514
    %v1714 = vunpack.c.h.b16 %v514
    %v1715 = vunpack.c.l.b16 %v515
    %v1716 = vunpack.c.h.b16 %v515
    %v1717 = vunpack.c.l.b16 %v516
    %v1718 = vunpack.c.h.b16 %v516
    %v1719 = vunpack.c.l.b16 %v517
    %v1720 = vunpack.c.h.b16 %v517
    %v1721 = vunpack.c.l.b16 %v518
    %v1722 = vunpack.c.h.b16 %v518
    %v1723 = vunpack.c.l.b16 %v519
    %v1724 = vunpack.c.h.b16 %v519
    %v1725 = vunpack.c.l.b16 %v520
    %v1726 = vunpack.c.h.b16 %v520
    %v1727 = vunpack.c.l.b16 %v521
    %v1728 = vunpack.c.h.b16 %v521
    %v1729 = vunpack.c.l.b16 %v522
    %v1730 = vunpack.c.h.b16 %v522
    %v1731 = vunpack.c.l.b16 %v523
    %v1732 = vunpack.c.h.b16 %v523
    %v1733 = vunpack.c.l.b16 %v524
    %v1734 = vunpack.c.h.b16 %v524
    %v1735 = vunpack.c.l.b16 %v525
    %v1736 = vunpack.c.h.b16 %v525
    %v1737 = vunpack.c.l.b16 %v526
    %v1738 = vunpack.c.h.b16 %v526
    %v1739 = vunpack.c.l.b16 %v527
    %v1740 = vunpack.c.h.b16 %v527
    %v1741 = vunpack.c.l.b16 %v528
    %v1742 = vunpack.c.h.b16 %v528
    %v1743 = vunpack.c.l.b16 %v529
    %v1744 = vunpack.c.h.b16 %v529
    %v1745 = vunpack.c.l.b16 %v530
    %v1746 = vunpack.c.h.b16 %v530
    %v1747 = vunpack.c.l.b16 %v531
    %v1748 = vunpack.c.h.b16 %v531
    %v1749 = vunpack.c.l.b16 %v532
    %v1750 = vunpack.c.h.b16 %v532
    %v1751 = vunpack.c.l.b16 %v533
    %v1752 = vunpack.c.h.b16 %v533
    %v1753 = vunpack.c.l.b16 %v534
    %v1754 = vunpack.c.h.b16 %v534
    %v1755 = vunpack.c.l.b16 %v535
    %v1756 = vunpack.c.h.b16 %v535
    %v1757 = vunpack.c.l.b16 %v536
    %v1758 = vunpack.c.h.b16 %v536
    %v1759 = vunpack.c.l.b16 %v537
    %v1760 = vunpack.c.h.b16 %v537
    %v1761 = vunpack.c.l.b16 %v538
    %v1762 = vunpack.c.h.b16 %v538
    %v1763 = vunpack.c.l.b16 %v539
    %v1764 = vunpack.c.h.b16 %v539
    %v1765 = vunpack.c.l.b16 %v540
    %v1766 = vunpack.c.h.b16 %v540
    %v1767 = vunpack.c.l.b16 %v541
    %v1768 = vunpack.c.h.b16 %v541
    %v1769 = vunpack.c.l.b16 %v542
    %v1770 = vunpack.c.h.b16 %v542
    %v1771 = vunpack.c.l.b16 %v543
    %v1772 = vunpack.c.h.b16 %v543
    %v1773 = vunpack.c.l.b16 %v544
    %v1774 = vunpack.c.h.b16 %v544
    %v1775 = vunpack.c.l.b16 %v545
    %v1776 = vunpack.c.h.b16 %v545
    %v1777 = vunpack.c.l.b16 %v546
    %v1778 = vunpack.c.h.b16 %v546
    %v1779 = vunpack.c.l.b16 %v547
    %v1780 = vunpack.c.h.b16 %v547
    %v1781 = vunpack.c.l.b16 %v548
    %v1782 = vunpack.c.h.b16 %v548
    %v1783 = vunpack.c.l.b16 %v549
    %v1784 = vunpack.c.h.b16 %v549
    %v1785 = vunpack.c.l.b16 %v550
    %v1786 = vunpack.c.h.b16 %v550
    %v1787 = vunpack.c.l.b16 %v551
    %v1788 = vunpack.c.h.b16 %v551
    %v1789 = vunpack.c.l.b16 %v552
    %v1790 = vunpack.c.h.b16 %v552
    %v1791 = vunpack.c.l.b16 %v553
    %v1792 = vunpack.c.h.b16 %v553
    %v1793 = vunpack.c.l.b16 %v554
    %v1794 = vunpack.c.h.b16 %v554
    %v1795 = vunpack.c.l.b16 %v555
    %v1796 = vunpack.c.h.b16 %v555
    %v1797 = vunpack.c.l.b16 %v556
    %v1798 = vunpack.c.h.b16 %v556
    %v1799 = vunpack.c.l.b16 %v557
    %v1800 = vunpack.c.h.b16 %v557
    %v1801 = vunpack.c.l.b16 %v558
    %v1802 = vunpack.c.h.b16 %v558
    %v1803 = vunpack.c.l.b16 %v559
    %v1804 = vunpack.c.h.b16 %v559
    %v1805 = vunpack.c.l.b16 %v560
    %v1806 = vunpack.c.h.b16 %v560
    %v1807 = vunpack.c.l.b16 %v561
    %v1808 = vunpack.c.h.b16 %v561
    %v1809 = vunpack.c.l.b16 %v562
    %v1810 = vunpack.c.h.b16 %v562
    %v1811 = vunpack.c.l.b16 %v563
    %v1812 = vunpack.c.h.b16 %v563
    %v1813 = vunpack.c.l.b16 %v564
    %v1814 = vunpack.c.h.b16 %v564
    %v1815 = vunpack.c.l.b16 %v565
    %v1816 = vunpack.c.h.b16 %v565
    %v1817 = vunpack.c.l.b16 %v566
    %v1818 = vunpack.c.h.b16 %v566
    %v1819 = vunpack.c.l.b16 %v567
    %v1820 = vunpack.c.h.b16 %v567
    %v1821 = vunpack.c.l.b16 %v568
    %v1822 = vunpack.c.h.b16 %v568
    %v1823 = vunpack.c.l.b16 %v569
    %v1824 = vunpack.c.h.b16 %v569
    %v1825 = vunpack.c.l.b16 %v570
    %v1826 = vunpack.c.h.b16 %v570
    %v1827 = vunpack.c.l.b16 %v571
    %v1828 = vunpack.c.h.b16 %v571
    %v1829 = vunpack.c.l.b16 %v572
    %v1830 = vunpack.c.h.b16 %v572
    %v1831 = vunpack.c.l.b16 %v573
    %v1832 = vunpack.c.h.b16 %v573
    %v1833 = vunpack.c.l.b16 %v574
    %v1834 = vunpack.c.h.b16 %v574
    %v1835 = vunpack.c.l.b16 %v575
    %v1836 = vunpack.c.h.b16 %v575
    %v1837 = vunpack.c.l.b16 %v576
    %v1838 = vunpack.c.h.b16 %v576
    %v1839 = vunpack.c.l.b16 %v577
    %v1840 = vunpack.c.h.b16 %v577
    %v1841 = vunpack.c.l.b16 %v578
    %v1842 = vunpack.c.h.b16 %v578
    %v1843 = vunpack.c.l.b16 %v579
    %v1844 = vunpack.c.h.b16 %v579
    %v1845 = vunpack.c.l.b16 %v580
    %v1846 = vunpack.c.h.b16 %v580
    %v1847 = vunpack.c.l.b16 %v581
    %v1848 = vunpack.c.h.b16 %v581
    %v1849 = vunpack.c.l.b16 %v582
    %v1850 = vunpack.c.h.b16 %v582
    %v1851 = vunpack.c.l.b16 %v583
    %v1852 = vunpack.c.h.b16 %v583
    %v1853 = vunpack.c.l.b16 %v584
    %v1854 = vunpack.c.h.b16 %v584
    %v1855 = vunpack.c.l.b16 %v585
    %v1856 = vunpack.c.h.b16 %v585
    %v1857 = vunpack.c.l.b16 %v586
    %v1858 = vunpack.c.h.b16 %v586
    %v1859 = vunpack.c.l.b16 %v587
    %v1860 = vunpack.c.h.b16 %v587
    %v1861 = vunpack.c.l.b16 %v588
    %v1862 = vunpack.c.h.b16 %v588
    %v1863 = vunpack.c.l.b16 %v589
    %v1864 = vunpack.c.h.b16 %v589
    %v1865 = vunpack.c.l.b16 %v590
    %v1866 = vunpack.c.h.b16 %v590
    %v1867 = vunpack.c.l.b16 %v591
    %v1868 = vunpack.c.h.b16 %v591
    %v1869 = vunpack.c.l.b16 %v592
    %v1870 = vunpack.c.h.b16 %v592
    %v1871 = vunpack.c.l.b16 %v593
    %v1872 = vunpack.c.h.b16 %v593
    %v1873 = vunpack.c.l.b16 %v594
    %v1874 = vunpack.c.h.b16 %v594
    %v1875 = vunpack.c.l.b16 %v595
    %v1876 = vunpack.c.h.b16 %v595
    %v1877 = vunpack.c.l.b16 %v596
    %v1878 = vunpack.c.h.b16 %v596
    %v1879 = vunpack.c.l.b16 %v597
    %v1880 = vunpack.c.h.b16 %v597
    %v1881 = vunpack.c.l.b16 %v598
    %v1882 = vunpack.c.h.b16 %v598
    %v1883 = vunpack.c.l.b16 %v599
    %v1884 = vunpack.c.h.b16 %v599
    %v1885 = vunpack.c.l.b16 %v600
    %v1886 = vunpack.c.h.b16 %v600
    %v1887 = vunpack.c.l.b16 %v601
    %v1888 = vunpack.c.h.b16 %v601
    %v1889 = vunpack.c.l.b16 %v602
    %v1890 = vunpack.c.h.b16 %v602
    %v1891 = vunpack.c.l.b16 %v603
    %v1892 = vunpack.c.h.b16 %v603
    %v1893 = vunpack.c.l.b16 %v604
    %v1894 = vunpack.c.h.b16 %v604
    %v1895 = vunpack.c.l.b16 %v605
    %v1896 = vunpack.c.h.b16 %v605
    %v1897 = vunpack.c.l.b16 %v606
    %v1898 = vunpack.c.h.b16 %v606
    %v1899 = vunpack.c.l.b16 %v607
    %v1900 = vunpack.c.h.b16 %v607
    %v1901 = vunpack.c.l.b16 %v608
    %v1902 = vunpack.c.h.b16 %v608
    %v1903 = vunpack.c.l.b16 %v609
    %v1904 = vunpack.c.h.b16 %v609
    %v1905 = vunpack.c.l.b16 %v610
    %v1906 = vunpack.c.h.b16 %v610
    %v1907 = vunpack.c.l.b16 %v611
    %v1908 = vunpack.c.h.b16 %v611
    %v1909 = vunpack.c.l.b16 %v612
    %v1910 = vunpack.c.h.b16 %v612
    %v1911 = vunpack.c.l.b16 %v613
    %v1912 = vunpack.c.h.b16 %v613
    %v1913 = vunpack.c.l.b16 %v614
    %v1914 = vunpack.c.h.b16 %v614
    %v1915 = vunpack.c.l.b16 %v615
    %v1916 = vunpack.c.h.b16 %v615
    %v1917 = vunpack.c.l.b16 %v616
    %v1918 = vunpack.c.h.b16 %v616
    %v1919 = vunpack.c.l.b16 %v617
    %v1920 = vunpack.c.h.b16 %v617
    %v1921 = vunpack.c.l.b16 %v618
    %v1922 = vunpack.c.h.b16 %v618
    %v1923 = vunpack.c.l.b16 %v619
    %v1924 = vunpack.c.h.b16 %v619
    %v1925 = vunpack.c.l.b16 %v620
    %v1926 = vunpack.c.h.b16 %v620
    %v1927 = vunpack.c.l.b16 %v621
    %v1928 = vunpack.c.h.b16 %v621
    %v1929 = vunpack.c.l.b16 %v622
    %v1930 = vunpack.c.h.b16 %v622
    %v1931 = vunpack.c.l.b16 %v623
    %v1932 = vunpack.c.h.b16 %v623
    %v1933 = vunpack.c.l.b16 %v624
    %v1934 = vunpack.c.h.b16 %v624
    %v1935 = vunpack.c.l.b16 %v625
    %v1936 = vunpack.c.h.b16 %v625
    %v1937 = vunpack.c.l.b16 %v626
    %v1938 = vunpack.c.h.b16 %v626
    %v1939 = vunpack.c.l.b16 %v627
    %v1940 = vunpack.c.h.b16 %v627
    %v1941 = vunpack.c.l.b16 %v628
    %v1942 = vunpack.c.h.b16 %v628
    %v1943 = vunpack.c.l.b16 %v629
    %v1944 = vunpack.c.h.b16 %v629
    %v1945 = vunpack.c.l.b16 %v630
    %v1946 = vunpack.c.h.b16 %v630
    %v1947 = vunpack.c.l.b16 %v631
    %v1948 = vunpack.c.h.b16 %v631
    %v1949 = vunpack.c.l.b16 %v632
    %v1950 = vunpack.c.h.b16 %v632
    %v1951 = vunpack.c.l.b16 %v633
    %v1952 = vunpack.c.h.b16 %v633
    %v1953 = vunpack.c.l.b16 %v634
    %v1954 = vunpack.c.h.b16 %v634
    %v1955 = vunpack.c.l.b16 %v635
    %v1956 = vunpack.c.h.b16 %v635
    %v1957 = vunpack.c.l.b16 %v636
    %v1958 = vunpack.c.h.b16 %v636
    %v1959 = vunpack.c.l.b16 %v637
    %v1960 = vunpack.c.h.b16 %v637
    %v1961 = vunpack.c.l.b16 %v638
    %v1962 = vunpack.c.h.b16 %v638
    %v1963 = vunpack.c.l.b16 %v639
    %v1964 = vunpack.c.h.b16 %v639
    %v1965 = vunpack.c.l.b16 %v640
    %v1966 = vunpack.c.h.b16 %v640
    %v1967 = vunpack.c.l.b16 %v641
    %v1968 = vunpack.c.h.b16 %v641
    %v1969 = vunpack.c.l.b16 %v642
    %v1970 = vunpack.c.h.b16 %v642
    %v1971 = vunpack.c.l.b16 %v643
    %v1972 = vunpack.c.h.b16 %v643
    %v1973 = vunpack.c.l.b16 %v644
    %v1974 = vunpack.c.h.b16 %v644
    %v1975 = vunpack.c.l.b16 %v645
    %v1976 = vunpack.c.h.b16 %v645
    %v1977 = vunpack.c.l.b16 %v646
    %v1978 = vunpack.c.h.b16 %v646
    %v1979 = vunpack.c.l.b16 %v647
    %v1980 = vunpack.c.h.b16 %v647
    %v1981 = vunpack.c.l.b16 %v648
    %v1982 = vunpack.c.h.b16 %v648
    %v1983 = vunpack.c.l.b16 %v649
    %v1984 = vunpack.c.h.b16 %v649
    %v1985 = vunpack.c.l.b16 %v650
    %v1986 = vunpack.c.h.b16 %v650
    %v1987 = vunpack.c.l.b16 %v651
    %v1988 = vunpack.c.h.b16 %v651
    %v1989 = vunpack.c.l.b16 %v652
    %v1990 = vunpack.c.h.b16 %v652
    %v1991 = vunpack.c.l.b16 %v653
    %v1992 = vunpack.c.h.b16 %v653
    %v1993 = vunpack.c.l.b16 %v654
    %v1994 = vunpack.c.h.b16 %v654
    %v1995 = vunpack.c.l.b16 %v655
    %v1996 = vunpack.c.h.b16 %v655
    %v1997 = vunpack.c.l.b16 %v656
    %v1998 = vunpack.c.h.b16 %v656
    %v1999 = vunpack.c.l.b16 %v657
    %v2000 = vunpack.c.h.b16 %v657
    %v2001 = vunpack.c.l.b16 %v658
    %v2002 = vunpack.c.h.b16 %v658
    %v2003 = vunpack.c.l.b16 %v659
    %v2004 = vunpack.c.h.b16 %v659
    %v2005 = vunpack.c.l.b16 %v660
    %v2006 = vunpack.c.h.b16 %v660
    %v2007 = vunpack.c.l.b16 %v661
    %v2008 = vunpack.c.h.b16 %v661
    %v2009 = vunpack.c.l.b16 %v662
    %v2010 = vunpack.c.h.b16 %v662
    %v2011 = vunpack.c.l.b16 %v663
    %v2012 = vunpack.c.h.b16 %v663
    %v2013 = vunpack.c.l.b16 %v664
    %v2014 = vunpack.c.h.b16 %v664
    %v2015 = vunpack.c.l.b16 %v665
    %v2016 = vunpack.c.h.b16 %v665
    %v2017 = vunpack.c.l.b16 %v666
    %v2018 = vunpack.c.h.b16 %v666
    %v2019 = vunpack.c.l.b16 %v667
    %v2020 = vunpack.c.h.b16 %v667
    %v2021 = vunpack.c.l.b16 %v668
    %v2022 = vunpack.c.h.b16 %v668
    %v2023 = vunpack.c.l.b16 %v669
    %v2024 = vunpack.c.h.b16 %v669
    %v2025 = vunpack.c.l.b16 %v670
    %v2026 = vunpack.c.h.b16 %v670
    %v2027 = vunpack.c.l.b16 %v671
    %v2028 = vunpack.c.h.b16 %v671
    %v2029 = vunpack.c.l.b16 %v672
    %v2030 = vunpack.c.h.b16 %v672
    %v2031 = vunpack.c.l.b16 %v673
    %v2032 = vunpack.c.h.b16 %v673
    %v2033 = vunpack.c.l.b16 %v674
    %v2034 = vunpack.c.h.b16 %v674
    %v2035 = vunpack.c.l.b16 %v675
    %v2036 = vunpack.c.h.b16 %v675
    %v2037 = vunpack.c.l.b16 %v676
    %v2038 = vunpack.c.h.b16 %v676
    %v2039 = vunpack.c.l.b16 %v677
    %v2040 = vunpack.c.h.b16 %v677
    %v2041 = vunpack.c.l.b16 %v678
    %v2042 = vunpack.c.h.b16 %v678
    %v2043 = vunpack.c.l.b16 %v679
    %v2044 = vunpack.c.h.b16 %v679
    %v2045 = vunpack.c.l.b16 %v680
    %v2046 = vunpack.c.h.b16 %v680
    %v2047 = vunpack.c.l.b16 %v681
    %v2048 = vunpack.c.h.b16 %v681
    %v2049 = vunpack.c.l.b16 %v682
    %v2050 = vunpack.c.h.b16 %v682
    %v2051 = vunpack.c.l.b16 %v683
    %v2052 = vunpack.c.h.b16 %v683
    %v2053 = vunpack.c.l.b16 %v684
    %v2054 = vunpack.c.h.b16 %v684
    %v2055 = vunpack.c.l.b16 %v685
    %v2056 = vunpack.c.h.b16 %v685
    %v2057 = vunpack.c.l.b16 %v686
    %v2058 = vunpack.c.h.b16 %v686
    %v2059 = vunpack.c.l.b16 %v687
    %v2060 = vunpack.c.h.b16 %v687
    %v2061 = vunpack.c.l.b16 %v688
    %v2062 = vunpack.c.h.b16 %v688
    %v2063 = vunpack.c.l.b16 %v689
    %v2064 = vunpack.c.h.b16 %v689
    %v2065 = vunpack.c.l.b16 %v690
    %v2066 = vunpack.c.h.b16 %v690
    %v2067 = vunpack.c.l.b16 %v691
    %v2068 = vunpack.c.h.b16 %v691
    %v2069 = vunpack.c.l.b16 %v692
    %v2070 = vunpack.c.h.b16 %v692
    %v2071 = vunpack.c.l.b16 %v693
    %v2072 = vunpack.c.h.b16 %v693
    %v2073 = vunpack.c.l.b16 %v694
    %v2074 = vunpack.c.h.b16 %v694
    %v2075 = vunpack.c.l.b16 %v695
    %v2076 = vunpack.c.h.b16 %v695
    %v2077 = vunpack.c.l.b16 %v696
    %v2078 = vunpack.c.h.b16 %v696
    %v2079 = vunpack.c.l.b16 %v697
    %v2080 = vunpack.c.h.b16 %v697
    %v2081 = vunpack.c.l.b16 %v698
    %v2082 = vunpack.c.h.b16 %v698
    %v2083 = vunpack.c.l.b16 %v699
    %v2084 = vunpack.c.h.b16 %v699
    %v2085 = vunpack.c.l.b16 %v700
    %v2086 = vunpack.c.h.b16 %v700
    %v2087 = vunpack.c.l.b16 %v701
    %v2088 = vunpack.c.h.b16 %v701
    %v2089 = vunpack.c.l.b16 %v702
    %v2090 = vunpack.c.h.b16 %v702
    %v2091 = vunpack.c.l.b16 %v703
    %v2092 = vunpack.c.h.b16 %v703
    %v2093 = vunpack.c.l.b16 %v704
    %v2094 = vunpack.c.h.b16 %v704
    %v2095 = vunpack.c.l.b16 %v705
    %v2096 = vunpack.c.h.b16 %v705
    %v2097 = vunpack.c.l.b16 %v706
    %v2098 = vunpack.c.h.b16 %v706
    %v2099 = vunpack.c.l.b16 %v707
    %v2100 = vunpack.c.h.b16 %v707
    %v2101 = vunpack.c.l.b16 %v708
    %v2102 = vunpack.c.h.b16 %v708
    %v2103 = vunpack.c.l.b16 %v709
    %v2104 = vunpack.c.h.b16 %v709
    %v2105 = vunpack.c.l.b16 %v710
    %v2106 = vunpack.c.h.b16 %v710
    %v2107 = vunpack.c.l.b16 %v711
    %v2108 = vunpack.c.h.b16 %v711
    %v2109 = vunpack.c.l.b16 %v712
    %v2110 = vunpack.c.h.b16 %v712
    %v2111 = vunpack.c.l.b16 %v713
    %v2112 = vunpack.c.h.b16 %v713
    %v2113 = vunpack.c.l.b16 %v714
    %v2114 = vunpack.c.h.b16 %v714
    %v2115 = vunpack.c.l.b16 %v715
    %v2116 = vunpack.c.h.b16 %v715
    %v2117 = vunpack.c.l.b16 %v716
    %v2118 = vunpack.c.h.b16 %v716
    %v2119 = vunpack.c.l.b16 %v717
    %v2120 = vunpack.c.h.b16 %v717
    %v2121 = vunpack.c.l.b16 %v718
    %v2122 = vunpack.c.h.b16 %v718
    %v2123 = vunpack.c.l.b16 %v719
    %v2124 = vunpack.c.h.b16 %v719
    %v2125 = vunpack.c.l.b16 %v720
    %v2126 = vunpack.c.h.b16 %v720
    %v2127 = vunpack.c.l.b16 %v721
    %v2128 = vunpack.c.h.b16 %v721
    %v2129 = vunpack.c.l.b16 %v722
    %v2130 = vunpack.c.h.b16 %v722
    %v2131 = vunpack.c.l.b16 %v723
    %v2132 = vunpack.c.h.b16 %v723
    %v2133 = vunpack.c.l.b16 %v724
    %v2134 = vunpack.c.h.b16 %v724
    %v2135 = vunpack.c.l.b16 %v725
    %v2136 = vunpack.c.h.b16 %v725
    %v2137 = vunpack.c.l.b16 %v726
    %v2138 = vunpack.c.h.b16 %v726
    %v2139 = vunpack.c.l.b16 %v727
    %v2140 = vunpack.c.h.b16 %v727
    %v2141 = vunpack.c.l.b16 %v728
    %v2142 = vunpack.c.h.b16 %v728
    %v2143 = vunpack.c.l.b16 %v729
    %v2144 = vunpack.c.h.b16 %v729
    %v2145 = vunpack.c.l.b16 %v730
    %v2146 = vunpack.c.h.b16 %v730
    %v2147 = vunpack.c.l.b16 %v731
    %v2148 = vunpack.c.h.b16 %v731
    %v2149 = vunpack.c.l.b16 %v732
    %v2150 = vunpack.c.h.b16 %v732
    %v2151 = vunpack.c.l.b16 %v733
    %v2152 = vunpack.c.h.b16 %v733
    %v2153 = vunpack.c.l.b16 %v734
    %v2154 = vunpack.c.h.b16 %v734
    %v2155 = vunpack.c.l.b16 %v735
    %v2156 = vunpack.c.h.b16 %v735
    %v2157 = vunpack.c.l.b16 %v736
    %v2158 = vunpack.c.h.b16 %v736
    %v2159 = vunpack.c.l.b16 %v737
    %v2160 = vunpack.c.h.b16 %v737
    %v2161 = vunpack.c.l.b16 %v738
    %v2162 = vunpack.c.h.b16 %v738
    %v2163 = vunpack.c.l.b16 %v739
    %v2164 = vunpack.c.h.b16 %v739
    %v2165 = vunpack.c.l.b16 %v740
    %v2166 = vunpack.c.h.b16 %v740
    %v2167 = vunpack.c.l.b16 %v741
    %v2168 = vunpack.c.h.b16 %v741
    %v2169 = vunpack.c.l.b16 %v742
    %v2170 = vunpack.c.h.b16 %v742
    %v2171 = vunpack.c.l.b16 %v743
    %v2172 = vunpack.c.h.b16 %v743
    %v2173 = vunpack.c.l.b16 %v744
    %v2174 = vunpack.c.h.b16 %v744
    %v2175 = vunpack.c.l.b16 %v745
    %v2176 = vunpack.c.h.b16 %v745
    %v2177 = vunpack.c.l.b16 %v746
    %v2178 = vunpack.c.h.b16 %v746
    %v2179 = vunpack.c.l.b16 %v747
    %v2180 = vunpack.c.h.b16 %v747
    %v2181 = vunpack.c.l.b16 %v748
    %v2182 = vunpack.c.h.b16 %v748
    %v2183 = vunpack.c.l.b16 %v749
    %v2184 = vunpack.c.h.b16 %v749
    %v2185 = vunpack.c.l.b16 %v750
    %v2186 = vunpack.c.h.b16 %v750
    %v2187 = vunpack.c.l.b16 %v751
    %v2188 = vunpack.c.h.b16 %v751
    %v2189 = vunpack.c.l.b16 %v752
    %v2190 = vunpack.c.h.b16 %v752
    %v2191 = vunpack.c.l.b16 %v753
    %v2192 = vunpack.c.h.b16 %v753
    %v2193 = vunpack.c.l.b16 %v754
    %v2194 = vunpack.c.h.b16 %v754
    %v2195 = vunpack.c.l.b16 %v755
    %v2196 = vunpack.c.h.b16 %v755
    %v2197 = vunpack.c.l.b16 %v756
    %v2198 = vunpack.c.h.b16 %v756
    %v2199 = vunpack.c.l.b16 %v757
    %v2200 = vunpack.c.h.b16 %v757
    %v2201 = vunpack.c.l.b16 %v758
    %v2202 = vunpack.c.h.b16 %v758
    %v2203 = vunpack.c.l.b16 %v759
    %v2204 = vunpack.c.h.b16 %v759
    %v2205 = vunpack.c.l.b16 %v760
    %v2206 = vunpack.c.h.b16 %v760
    %v2207 = vunpack.c.l.b16 %v761
    %v2208 = vunpack.c.h.b16 %v761
    %v2209 = vunpack.c.l.b16 %v762
    %v2210 = vunpack.c.h.b16 %v762
    %v2211 = vunpack.c.l.b16 %v763
    %v2212 = vunpack.c.h.b16 %v763
    %v2213 = vunpack.c.l.b16 %v764
    %v2214 = vunpack.c.h.b16 %v764
    %v2215 = vunpack.c.l.b16 %v765
    %v2216 = vunpack.c.h.b16 %v765
    %v2217 = vunpack.c.l.b16 %v766
    %v2218 = vunpack.c.h.b16 %v766
    %v2219 = vunpack.c.l.b16 %v767
    %v2220 = vunpack.c.h.b16 %v767
    %v2221 = vunpack.c.l.b16 %v768
    %v2222 = vunpack.c.h.b16 %v768
    %v2223 = vunpack.c.l.b16 %v769
    %v2224 = vunpack.c.h.b16 %v769
    %v2225 = vunpack.c.l.b16 %v770
    %v2226 = vunpack.c.h.b16 %v770
    %v2227 = vunpack.c.l.b16 %v771
    %v2228 = vunpack.c.h.b16 %v771
    %v2229 = vunpack.c.l.b16 %v772
    %v2230 = vunpack.c.h.b16 %v772
    %v2231 = vunpack.c.l.b16 %v773
    %v2232 = vunpack.c.h.b16 %v773
    %v2233 = vunpack.c.l.b16 %v774
    %v2234 = vunpack.c.h.b16 %v774
    %v2235 = vunpack.c.l.b16 %v775
    %v2236 = vunpack.c.h.b16 %v775
    %v2237 = vunpack.c.l.b16 %v776
    %v2238 = vunpack.c.h.b16 %v776
    %v2239 = vunpack.c.l.b16 %v777
    %v2240 = vunpack.c.h.b16 %v777
    %v2241 = vunpack.c.l.b16 %v778
    %v2242 = vunpack.c.h.b16 %v778
    %v2243 = vunpack.c.l.b16 %v779
    %v2244 = vunpack.c.h.b16 %v779
    %v2245 = vunpack.c.l.b16 %v780
    %v2246 = vunpack.c.h.b16 %v780
    %v2247 = vunpack.c.l.b16 %v781
    %v2248 = vunpack.c.h.b16 %v781
    %v2249 = vunpack.c.l.b16 %v782
    %v2250 = vunpack.c.h.b16 %v782
    %v2251 = vunpack.c.l.b16 %v783
    %v2252 = vunpack.c.h.b16 %v783
    %v2253 = vunpack.c.l.b16 %v784
    %v2254 = vunpack.c.h.b16 %v784
    %v2255 = vunpack.c.l.b16 %v785
    %v2256 = vunpack.c.h.b16 %v785
    %v2257 = vunpack.c.l.b16 %v786
    %v2258 = vunpack.c.h.b16 %v786
    %v2259 = vunpack.c.l.b16 %v787
    %v2260 = vunpack.c.h.b16 %v787
    %v2261 = vunpack.c.l.b16 %v788
    %v2262 = vunpack.c.h.b16 %v788
    %v2263 = vunpack.c.l.b16 %v789
    %v2264 = vunpack.c.h.b16 %v789
    %v2265 = vunpack.c.l.b16 %v790
    %v2266 = vunpack.c.h.b16 %v790
    %v2267 = vunpack.c.l.b16 %v791
    %v2268 = vunpack.c.h.b16 %v791
    %v2269 = vunpack.c.l.b16 %v792
    %v2270 = vunpack.c.h.b16 %v792
    %v2271 = vunpack.c.l.b16 %v793
    %v2272 = vunpack.c.h.b16 %v793
    %v2273 = vunpack.c.l.b16 %v794
    %v2274 = vunpack.c.h.b16 %v794
    %v2275 = vunpack.c.l.b16 %v795
    %v2276 = vunpack.c.h.b16 %v795
    %v2277 = vunpack.c.l.b16 %v796
    %v2278 = vunpack.c.h.b16 %v796
    %v2279 = vunpack.c.l.b16 %v797
    %v2280 = vunpack.c.h.b16 %v797
    %v2281 = vunpack.c.l.b16 %v798
    %v2282 = vunpack.c.h.b16 %v798
    %v2283 = vunpack.c.l.b16 %v799
    %v2284 = vunpack.c.h.b16 %v799
    %v2285 = vunpack.c.l.b16 %v800
    %v2286 = vunpack.c.h.b16 %v800
    %v2287 = vunpack.c.l.b16 %v801
    %v2288 = vunpack.c.h.b16 %v801
    %v2289 = vunpack.c.l.b16 %v802
    %v2290 = vunpack.c.h.b16 %v802
    %v2291 = vunpack.c.l.b16 %v803
    %v2292 = vunpack.c.h.b16 %v803
    %v2293 = vunpack.c.l.b16 %v804
    %v2294 = vunpack.c.h.b16 %v804
    %v2295 = vunpack.c.l.b16 %v805
    %v2296 = vunpack.c.h.b16 %v805
    %v2297 = vunpack.c.l.b16 %v806
    %v2298 = vunpack.c.h.b16 %v806
    %v2299 = vunpack.c.l.b16 %v807
    %v2300 = vunpack.c.h.b16 %v807
    %v2301 = vunpack.c.l.b16 %v808
    %v2302 = vunpack.c.h.b16 %v808
    %v2303 = vunpack.c.l.b16 %v809
    %v2304 = vunpack.c.h.b16 %v809
    %v2305 = vunpack.c.l.b16 %v810
    %v2306 = vunpack.c.h.b16 %v810
    %v2307 = vunpack.c.l.b16 %v811
    %v2308 = vunpack.c.h.b16 %v811
    %v2309 = vunpack.c.l.b16 %v812
    %v2310 = vunpack.c.h.b16 %v812
    %v2311 = vunpack.c.l.b16 %v813
    %v2312 = vunpack.c.h.b16 %v813
    %v2313 = vunpack.c.l.b16 %v814
    %v2314 = vunpack.c.h.b16 %v814
    %v2315 = vunpack.c.l.b16 %v815
    %v2316 = vunpack.c.h.b16 %v815
    %v2317 = vunpack.c.l.b16 %v816
    %v2318 = vunpack.c.h.b16 %v816
    %v2319 = vunpack.c.l.b16 %v817
    %v2320 = vunpack.c.h.b16 %v817
    %v2321 = vunpack.c.l.b16 %v818
    %v2322 = vunpack.c.h.b16 %v818
    %v2323 = vunpack.c.l.b16 %v819
    %v2324 = vunpack.c.h.b16 %v819
    %v2325 = vunpack.c.l.b16 %v820
    %v2326 = vunpack.c.h.b16 %v820
    %v2327 = vunpack.c.l.b16 %v821
    %v2328 = vunpack.c.h.b16 %v821
    %v2329 = vunpack.c.l.b16 %v822
    %v2330 = vunpack.c.h.b16 %v822
    %v2331 = vunpack.c.l.b16 %v823
    %v2332 = vunpack.c.h.b16 %v823
    %v2333 = vunpack.c.l.b16 %v824
    %v2334 = vunpack.c.h.b16 %v824
    %v2335 = vunpack.c.l.b16 %v825
    %v2336 = vunpack.c.h.b16 %v825
    %v2337 = vunpack.c.l.b16 %v826
    %v2338 = vunpack.c.h.b16 %v826
    %v2339 = vunpack.c.l.b16 %v827
    %v2340 = vunpack.c.h.b16 %v827
    %v2341 = vunpack.c.l.b16 %v828
    %v2342 = vunpack.c.h.b16 %v828
    %v2343 = vunpack.c.l.b16 %v829
    %v2344 = vunpack.c.h.b16 %v829
    %v2345 = vunpack.c.l.b16 %v830
    %v2346 = vunpack.c.h.b16 %v830
    %v2347 = vunpack.c.l.b16 %v831
    %v2348 = vunpack.c.h.b16 %v831
    %v2349 = vunpack.c.l.b16 %v832
    %v2350 = vunpack.c.h.b16 %v832
    %v2351 = vunpack.c.l.b16 %v833
    %v2352 = vunpack.c.h.b16 %v833
    %v2353 = vunpack.c.l.b16 %v834
    %v2354 = vunpack.c.h.b16 %v834
    %v2355 = vunpack.c.l.b16 %v835
    %v2356 = vunpack.c.h.b16 %v835
    %v2357 = vunpack.c.l.b16 %v836
    %v2358 = vunpack.c.h.b16 %v836
    %v2359 = vunpack.c.l.b16 %v837
    %v2360 = vunpack.c.h.b16 %v837
    %v2361 = vunpack.c.l.b16 %v838
    %v2362 = vunpack.c.h.b16 %v838
    %v2363 = vunpack.c.l.b16 %v839
    %v2364 = vunpack.c.h.b16 %v839
    %v2365 = vunpack.c.l.b16 %v840
    %v2366 = vunpack.c.h.b16 %v840
    %v2367 = vunpack.c.l.b16 %v841
    %v2368 = vunpack.c.h.b16 %v841
    %v2369 = vunpack.c.l.b16 %v842
    %v2370 = vunpack.c.h.b16 %v842
    %v2371 = vunpack.c.l.b16 %v843
    %v2372 = vunpack.c.h.b16 %v843
    %v2373 = vunpack.c.l.b16 %v844
    %v2374 = vunpack.c.h.b16 %v844
    %v2375 = vunpack.c.l.b16 %v845
    %v2376 = vunpack.c.h.b16 %v845
    %v2377 = vunpack.c.l.b16 %v846
    %v2378 = vunpack.c.h.b16 %v846
    %v2379 = vunpack.c.l.b16 %v847
    %v2380 = vunpack.c.h.b16 %v847
    %v2381 = vunpack.c.l.b16 %v848
    %v2382 = vunpack.c.h.b16 %v848
    %v2383 = vunpack.c.l.b16 %v849
    %v2384 = vunpack.c.h.b16 %v849
    %v2385 = vunpack.c.l.b16 %v850
    %v2386 = vunpack.c.h.b16 %v850
    %v2387 = vunpack.c.l.b16 %v851
    %v2388 = vunpack.c.h.b16 %v851
    %v2389 = vunpack.c.l.b16 %v852
    %v2390 = vunpack.c.h.b16 %v852
    %v2391 = vunpack.c.l.b16 %v853
    %v2392 = vunpack.c.h.b16 %v853
    %v2393 = vunpack.c.l.b16 %v854
    %v2394 = vunpack.c.h.b16 %v854
    %v2395 = vunpack.c.l.b16 %v855
    %v2396 = vunpack.c.h.b16 %v855
    %v2397 = vunpack.c.l.b16 %v856
    %v2398 = vunpack.c.h.b16 %v856
    %v2399 = vunpack.c.l.b16 %v857
    %v2400 = vunpack.c.h.b16 %v857
    %v2401 = vunpack.c.l.b16 %v858
    %v2402 = vunpack.c.h.b16 %v858
    %v2403 = vunpack.c.l.b16 %v859
    %v2404 = vunpack.c.h.b16 %v859
    %v2405 = vunpack.c.l.b16 %v860
    %v2406 = vunpack.c.h.b16 %v860
    %v2407 = vunpack.c.l.b16 %v861
    %v2408 = vunpack.c.h.b16 %v861
    %v2409 = vunpack.c.l.b16 %v862
    %v2410 = vunpack.c.h.b16 %v862
    %v2411 = vunpack.c.l.b16 %v863
    %v2412 = vunpack.c.h.b16 %v863
    %v2413 = vunpack.c.l.b16 %v864
    %v2414 = vunpack.c.h.b16 %v864
    %v2415 = vunpack.c.l.b16 %v865
    %v2416 = vunpack.c.h.b16 %v865
    %v2417 = vunpack.c.l.b16 %v866
    %v2418 = vunpack.c.h.b16 %v866
    %v2419 = vunpack.c.l.b16 %v867
    %v2420 = vunpack.c.h.b16 %v867
    %v2421 = vunpack.c.l.b16 %v868
    %v2422 = vunpack.c.h.b16 %v868
    %v2423 = vpack.c.b16 %v1407, %v1399
    %v2424 = vpack.c.b16 %v1408, %v1400
    %v2425 = vpack.c.b16 %v1409, %v1401
    %v2426 = vpack.c.b16 %v1410, %v1402
    %v2427 = vpack.c.b16 %v1411, %v1403
    %v2428 = vpack.c.b16 %v1412, %v1404
    %v2429 = vpack.c.b16 %v1413, %v1405
    %v2430 = vpack.c.b16 %v1414, %v1406
    %v2431 = vpack.c.b16 %v1423, %v1415
    %v2432 = vpack.c.b16 %v1424, %v1416
    %v2433 = vpack.c.b16 %v1425, %v1417
    %v2434 = vpack.c.b16 %v1426, %v1418
    %v2435 = vpack.c.b16 %v1427, %v1419
    %v2436 = vpack.c.b16 %v1428, %v1420
    %v2437 = vpack.c.b16 %v1429, %v1421
    %v2438 = vpack.c.b16 %v1430, %v1422
    %v2439 = vpack.c.b16 %v1439, %v1431
    %v2440 = vpack.c.b16 %v1440, %v1432
    %v2441 = vpack.c.b16 %v1441, %v1433
    %v2442 = vpack.c.b16 %v1442, %v1434
    %v2443 = vpack.c.b16 %v1443, %v1435
    %v2444 = vpack.c.b16 %v1444, %v1436
    %v2445 = vpack.c.b16 %v1445, %v1437
    %v2446 = vpack.c.b16 %v1446, %v1438
    %v2447 = vpack.c.b16 %v1455, %v1447
    %v2448 = vpack.c.b16 %v1456, %v1448
    %v2449 = vpack.c.b16 %v1457, %v1449
    %v2450 = vpack.c.b16 %v1458, %v1450
    %v2451 = vpack.c.b16 %v1459, %v1451
    %v2452 = vpack.c.b16 %v1460, %v1452
    %v2453 = vpack.c.b16 %v1461, %v1453
    %v2454 = vpack.c.b16 %v1462, %v1454
    %v2455 = vpack.c.b16 %v1471, %v1463
    %v2456 = vpack.c.b16 %v1472, %v1464
    %v2457 = vpack.c.b16 %v1473, %v1465
    %v2458 = vpack.c.b16 %v1474, %v1466
    %v2459 = vpack.c.b16 %v1475, %v1467
    %v2460 = vpack.c.b16 %v1476, %v1468
    %v2461 = vpack.c.b16 %v1477, %v1469
    %v2462 = vpack.c.b16 %v1478, %v1470
    %v2463 = vpack.c.b16 %v1487, %v1479
    %v2464 = vpack.c.b16 %v1488, %v1480
    %v2465 = vpack.c.b16 %v1489, %v1481
    %v2466 = vpack.c.b16 %v1490, %v1482
    %v2467 = vpack.c.b16 %v1491, %v1483
    %v2468 = vpack.c.b16 %v1492, %v1484
    %v2469 = vpack.c.b16 %v1493, %v1485
    %v2470 = vpack.c.b16 %v1494, %v1486
    %v2471 = vpack.c.b16 %v1503, %v1495
    %v2472 = vpack.c.b16 %v1504, %v1496
    %v2473 = vpack.c.b16 %v1505, %v1497
    %v2474 = vpack.c.b16 %v1506, %v1498
    %v2475 = vpack.c.b16 %v1507, %v1499
    %v2476 = vpack.c.b16 %v1508, %v1500
    %v2477 = vpack.c.b16 %v1509, %v1501
    %v2478 = vpack.c.b16 %v1510, %v1502
    %v2479 = vpack.c.b16 %v1519, %v1511
    %v2480 = vpack.c.b16 %v1520, %v1512
    %v2481 = vpack.c.b16 %v1521, %v1513
    %v2482 = vpack.c.b16 %v1522, %v1514
    %v2483 = vpack.c.b16 %v1523, %v1515
    %v2484 = vpack.c.b16 %v1524, %v1516
    %v2485 = vpack.c.b16 %v1525, %v1517
    %v2486 = vpack.c.b16 %v1526, %v1518
    %v2487 = vpack.c.b16 %v1535, %v1527
    %v2488 = vpack.c.b16 %v1536, %v1528
    %v2489 = vpack.c.b16 %v1537, %v1529
    %v2490 = vpack.c.b16 %v1538, %v1530
    %v2491 = vpack.c.b16 %v1539, %v1531
    %v2492 = vpack.c.b16 %v1540, %v1532
    %v2493 = vpack.c.b16 %v1541, %v1533
    %v2494 = vpack.c.b16 %v1542, %v1534
    %v2495 = vpack.c.b16 %v1551, %v1543
    %v2496 = vpack.c.b16 %v1552, %v1544
    %v2497 = vpack.c.b16 %v1553, %v1545
    %v2498 = vpack.c.b16 %v1554, %v1546
    %v2499 = vpack.c.b16 %v1555, %v1547
    %v2500 = vpack.c.b16 %v1556, %v1548
    %v2501 = vpack.c.b16 %v1557, %v1549
    %v2502 = vpack.c.b16 %v1558, %v1550
    %v2503 = vpack.c.b16 %v1567, %v1559
    %v2504 = vpack.c.b16 %v1568, %v1560
    %v2505 = vpack.c.b16 %v1569, %v1561
    %v2506 = vpack.c.b16 %v1570, %v1562
    %v2507 = vpack.c.b16 %v1571, %v1563
    %v2508 = vpack.c.b16 %v1572, %v1564
    %v2509 = vpack.c.b16 %v1573, %v1565
    %v2510 = vpack.c.b16 %v1574, %v1566
    %v2511 = vpack.c.b16 %v1583, %v1575
    %v2512 = vpack.c.b16 %v1584, %v1576
    %v2513 = vpack.c.b16 %v1585, %v1577
    %v2514 = vpack.c.b16 %v1586, %v1578
    %v2515 = vpack.c.b16 %v1587, %v1579
    %v2516 = vpack.c.b16 %v1588, %v1580
    %v2517 = vpack.c.b16 %v1589, %v1581
    %v2518 = vpack.c.b16 %v1590, %v1582
    %v2519 = vpack.c.b16 %v1599, %v1591
    %v2520 = vpack.c.b16 %v1600, %v1592
    %v2521 = vpack.c.b16 %v1601, %v1593
    %v2522 = vpack.c.b16 %v1602, %v1594
    %v2523 = vpack.c.b16 %v1603, %v1595
    %v2524 = vpack.c.b16 %v1604, %v1596
    %v2525 = vpack.c.b16 %v1605, %v1597
    %v2526 = vpack.c.b16 %v1606, %v1598
    %v2527 = vpack.c.b16 %v1615, %v1607
    %v2528 = vpack.c.b16 %v1616, %v1608
    %v2529 = vpack.c.b16 %v1617, %v1609
    %v2530 = vpack.c.b16 %v1618, %v1610
    %v2531 = vpack.c.b16 %v1619, %v1611
    %v2532 = vpack.c.b16 %v1620, %v1612
    %v2533 = vpack.c.b16 %v1621, %v1613
    %v2534 = vpack.c.b16 %v1622, %v1614
    %v2535 = vpack.c.b16 %v1631, %v1623
    %v2536 = vpack.c.b16 %v1632, %v1624
    %v2537 = vpack.c.b16 %v1633, %v1625
    %v2538 = vpack.c.b16 %v1634, %v1626
    %v2539 = vpack.c.b16 %v1635, %v1627
    %v2540 = vpack.c.b16 %v1636, %v1628
    %v2541 = vpack.c.b16 %v1637, %v1629
    %v2542 = vpack.c.b16 %v1638, %v1630
    %v2543 = vpack.c.b16 %v1647, %v1639
    %v2544 = vpack.c.b16 %v1648, %v1640
    %v2545 = vpack.c.b16 %v1649, %v1641
    %v2546 = vpack.c.b16 %v1650, %v1642
    %v2547 = vpack.c.b16 %v1651, %v1643
    %v2548 = vpack.c.b16 %v1652, %v1644
    %v2549 = vpack.c.b16 %v1653, %v1645
    %v2550 = vpack.c.b16 %v1654, %v1646
    %v2551 = vpack.c.b16 %v1663, %v1655
    %v2552 = vpack.c.b16 %v1664, %v1656
    %v2553 = vpack.c.b16 %v1665, %v1657
    %v2554 = vpack.c.b16 %v1666, %v1658
    %v2555 = vpack.c.b16 %v1667, %v1659
    %v2556 = vpack.c.b16 %v1668, %v1660
    %v2557 = vpack.c.b16 %v1669, %v1661
    %v2558 = vpack.c.b16 %v1670, %v1662
    %v2559 = vpack.c.b16 %v1679, %v1671
    %v2560 = vpack.c.b16 %v1680, %v1672
    %v2561 = vpack.c.b16 %v1681, %v1673
    %v2562 = vpack.c.b16 %v1682, %v1674
    %v2563 = vpack.c.b16 %v1683, %v1675
    %v2564 = vpack.c.b16 %v1684, %v1676
    %v2565 = vpack.c.b16 %v1685, %v1677
    %v2566 = vpack.c.b16 %v1686, %v1678
    %v2567 = vpack.c.b16 %v1695, %v1687
    %v2568 = vpack.c.b16 %v1696, %v1688
    %v2569 = vpack.c.b16 %v1697, %v1689
    %v2570 = vpack.c.b16 %v1698, %v1690
    %v2571 = vpack.c.b16 %v1699, %v1691
    %v2572 = vpack.c.b16 %v1700, %v1692
    %v2573 = vpack.c.b16 %v1701, %v1693
    %v2574 = vpack.c.b16 %v1702, %v1694
    %v2575 = vpack.c.b16 %v1711, %v1703
    %v2576 = vpack.c.b16 %v1712, %v1704
    %v2577 = vpack.c.b16 %v1713, %v1705
    %v2578 = vpack.c.b16 %v1714, %v1706
    %v2579 = vpack.c.b16 %v1715, %v1707
    %v2580 = vpack.c.b16 %v1716, %v1708
    %v2581 = vpack.c.b16 %v1717, %v1709
    %v2582 = vpack.c.b16 %v1718, %v1710
    %v2583 = vpack.c.b16 %v1727, %v1719
    %v2584 = vpack.c.b16 %v1728, %v1720
    %v2585 = vpack.c.b16 %v1729, %v1721
    %v2586 = vpack.c.b16 %v1730, %v1722
    %v2587 = vpack.c.b16 %v1731, %v1723
    %v2588 = vpack.c.b16 %v1732, %v1724
    %v2589 = vpack.c.b16 %v1733, %v1725
    %v2590 = vpack.c.b16 %v1734, %v1726
    %v2591 = vpack.c.b16 %v1743, %v1735
    %v2592 = vpack.c.b16 %v1744, %v1736
    %v2593 = vpack.c.b16 %v1745, %v1737
    %v2594 = vpack.c.b16 %v1746, %v1738
    %v2595 = vpack.c.b16 %v1747, %v1739
    %v2596 = vpack.c.b16 %v1748, %v1740
    %v2597 = vpack.c.b16 %v1749, %v1741
    %v2598 = vpack.c.b16 %v1750, %v1742
    %v2599 = vpack.c.b16 %v1759, %v1751
    %v2600 = vpack.c.b16 %v1760, %v1752
    %v2601 = vpack.c.b16 %v1761, %v1753
    %v2602 = vpack.c.b16 %v1762, %v1754
    %v2603 = vpack.c.b16 %v1763, %v1755
    %v2604 = vpack.c.b16 %v1764, %v1756
    %v2605 = vpack.c.b16 %v1765, %v1757
    %v2606 = vpack.c.b16 %v1766, %v1758
    %v2607 = vpack.c.b16 %v1775, %v1767
    %v2608 = vpack.c.b16 %v1776, %v1768
    %v2609 = vpack.c.b16 %v1777, %v1769
    %v2610 = vpack.c.b16 %v1778, %v1770
    %v2611 = vpack.c.b16 %v1779, %v1771
    %v2612 = vpack.c.b16 %v1780, %v1772
    %v2613 = vpack.c.b16 %v1781, %v1773
    %v2614 = vpack.c.b16 %v1782, %v1774
    %v2615 = vpack.c.b16 %v1791, %v1783
    %v2616 = vpack.c.b16 %v1792, %v1784
    %v2617 = vpack.c.b16 %v1793, %v1785
    %v2618 = vpack.c.b16 %v1794, %v1786
    %v2619 = vpack.c.b16 %v1795, %v1787
    %v2620 = vpack.c.b16 %v1796, %v1788
    %v2621 = vpack.c.b16 %v1797, %v1789
    %v2622 = vpack.c.b16 %v1798, %v1790
    %v2623 = vpack.c.b16 %v1807, %v1799
    %v2624 = vpack.c.b16 %v1808, %v1800
    %v2625 = vpack.c.b16 %v1809, %v1801
    %v2626 = vpack.c.b16 %v1810, %v1802
    %v2627 = vpack.c.b16 %v1811, %v1803
    %v2628 = vpack.c.b16 %v1812, %v1804
    %v2629 = vpack.c.b16 %v1813, %v1805
    %v2630 = vpack.c.b16 %v1814, %v1806
    %v2631 = vpack.c.b16 %v1823, %v1815
    %v2632 = vpack.c.b16 %v1824, %v1816
    %v2633 = vpack.c.b16 %v1825, %v1817
    %v2634 = vpack.c.b16 %v1826, %v1818
    %v2635 = vpack.c.b16 %v1827, %v1819
    %v2636 = vpack.c.b16 %v1828, %v1820
    %v2637 = vpack.c.b16 %v1829, %v1821
    %v2638 = vpack.c.b16 %v1830, %v1822
    %v2639 = vpack.c.b16 %v1839, %v1831
    %v2640 = vpack.c.b16 %v1840, %v1832
    %v2641 = vpack.c.b16 %v1841, %v1833
    %v2642 = vpack.c.b16 %v1842, %v1834
    %v2643 = vpack.c.b16 %v1843, %v1835
    %v2644 = vpack.c.b16 %v1844, %v1836
    %v2645 = vpack.c.b16 %v1845, %v1837
    %v2646 = vpack.c.b16 %v1846, %v1838
    %v2647 = vpack.c.b16 %v1855, %v1847
    %v2648 = vpack.c.b16 %v1856, %v1848
    %v2649 = vpack.c.b16 %v1857, %v1849
    %v2650 = vpack.c.b16 %v1858, %v1850
    %v2651 = vpack.c.b16 %v1859, %v1851
    %v2652 = vpack.c.b16 %v1860, %v1852
    %v2653 = vpack.c.b16 %v1861, %v1853
    %v2654 = vpack.c.b16 %v1862, %v1854
    %v2655 = vpack.c.b16 %v1871, %v1863
    %v2656 = vpack.c.b16 %v1872, %v1864
    %v2657 = vpack.c.b16 %v1873, %v1865
    %v2658 = vpack.c.b16 %v1874, %v1866
    %v2659 = vpack.c.b16 %v1875, %v1867
    %v2660 = vpack.c.b16 %v1876, %v1868
    %v2661 = vpack.c.b16 %v1877, %v1869
    %v2662 = vpack.c.b16 %v1878, %v1870
    %v2663 = vpack.c.b16 %v1887, %v1879
    %v2664 = vpack.c.b16 %v1888, %v1880
    %v2665 = vpack.c.b16 %v1889, %v1881
    %v2666 = vpack.c.b16 %v1890, %v1882
    %v2667 = vpack.c.b16 %v1891, %v1883
    %v2668 = vpack.c.b16 %v1892, %v1884
    %v2669 = vpack.c.b16 %v1893, %v1885
    %v2670 = vpack.c.b16 %v1894, %v1886
    %v2671 = vpack.c.b16 %v1903, %v1895
    %v2672 = vpack.c.b16 %v1904, %v1896
    %v2673 = vpack.c.b16 %v1905, %v1897
    %v2674 = vpack.c.b16 %v1906, %v1898
    %v2675 = vpack.c.b16 %v1907, %v1899
    %v2676 = vpack.c.b16 %v1908, %v1900
    %v2677 = vpack.c.b16 %v1909, %v1901
    %v2678 = vpack.c.b16 %v1910, %v1902
    %v2679 = vpack.c.b16 %v1919, %v1911
    %v2680 = vpack.c.b16 %v1920, %v1912
    %v2681 = vpack.c.b16 %v1921, %v1913
    %v2682 = vpack.c.b16 %v1922, %v1914
    %v2683 = vpack.c.b16 %v1923, %v1915
    %v2684 = vpack.c.b16 %v1924, %v1916
    %v2685 = vpack.c.b16 %v1925, %v1917
    %v2686 = vpack.c.b16 %v1926, %v1918
    %v2687 = vpack.c.b16 %v1935, %v1927
    %v2688 = vpack.c.b16 %v1936, %v1928
    %v2689 = vpack.c.b16 %v1937, %v1929
    %v2690 = vpack.c.b16 %v1938, %v1930
    %v2691 = vpack.c.b16 %v1939, %v1931
    %v2692 = vpack.c.b16 %v1940, %v1932
    %v2693 = vpack.c.b16 %v1941, %v1933
    %v2694 = vpack.c.b16 %v1942, %v1934
    %v2695 = vpack.c.b16 %v1951, %v1943
    %v2696 = vpack.c.b16 %v1952, %v1944
    %v2697 = vpack.c.b16 %v1953, %v1945
    %v2698 = vpack.c.b16 %v1954, %v1946
    %v2699 = vpack.c.b16 %v1955, %v1947
    %v2700 = vpack.c.b16 %v1956, %v1948
    %v2701 = vpack.c.b16 %v1957, %v1949
    %v2702 = vpack.c.b16 %v1958, %v1950
    %v2703 = vpack.c.b16 %v1967, %v1959
    %v2704 = vpack.c.b16 %v1968, %v1960
    %v2705 = vpack.c.b16 %v1969, %v1961
    %v2706 = vpack.c.b16 %v1970, %v1962
    %v2707 = vpack.c.b16 %v1971, %v1963
    %v2708 = vpack.c.b16 %v1972, %v1964
    %v2709 = vpack.c.b16 %v1973, %v1965
    %v2710 = vpack.c.b16 %v1974, %v1966
    %v2711 = vpack.c.b16 %v1983, %v1975
    %v2712 = vpack.c.b16 %v1984, %v1976
    %v2713 = vpack.c.b16 %v1985, %v1977
    %v2714 = vpack.c.b16 %v1986, %v1978
    %v2715 = vpack.c.b16 %v1987, %v1979
    %v2716 = vpack.c.b16 %v1988, %v1980
    %v2717 = vpack.c.b16 %v1989, %v1981
    %v2718 = vpack.c.b16 %v1990, %v1982
    %v2719 = vpack.c.b16 %v1999, %v1991
    %v2720 = vpack.c.b16 %v2000, %v1992
    %v2721 = vpack.c.b16 %v2001, %v1993
    %v2722 = vpack.c.b16 %v2002, %v1994
    %v2723 = vpack.c.b16 %v2003, %v1995
    %v2724 = vpack.c.b16 %v2004, %v1996
    %v2725 = vpack.c.b16 %v2005, %v1997
    %v2726 = vpack.c.b16 %v2006, %v1998
    %v2727 = vpack.c.b16 %v2015, %v2007
    %v2728 = vpack.c.b16 %v2016, %v2008
    %v2729 = vpack.c.b16 %v2017, %v2009
    %v2730 = vpack.c.b16 %v2018, %v2010
    %v2731 = vpack.c.b16 %v2019, %v2011
    %v2732 = vpack.c.b16 %v2020, %v2012
    %v2733 = vpack.c.b16 %v2021, %v2013
    %v2734 = vpack.c.b16 %v2022, %v2014
    %v2735 = vpack.c.b16 %v2031, %v2023
    %v2736 = vpack.c.b16 %v2032, %v2024
    %v2737 = vpack.c.b16 %v2033, %v2025
    %v2738 = vpack.c.b16 %v2034, %v2026
    %v2739 = vpack.c.b16 %v2035, %v2027
    %v2740 = vpack.c.b16 %v2036, %v2028
    %v2741 = vpack.c.b16 %v2037, %v2029
    %v2742 = vpack.c.b16 %v2038, %v2030
    %v2743 = vpack.c.b16 %v2047, %v2039
    %v2744 = vpack.c.b16 %v2048, %v2040
    %v2745 = vpack.c.b16 %v2049, %v2041
    %v2746 = vpack.c.b16 %v2050, %v2042
    %v2747 = vpack.c.b16 %v2051, %v2043
    %v2748 = vpack.c.b16 %v2052, %v2044
    %v2749 = vpack.c.b16 %v2053, %v2045
    %v2750 = vpack.c.b16 %v2054, %v2046
    %v2751 = vpack.c.b16 %v2063, %v2055
    %v2752 = vpack.c.b16 %v2064, %v2056
    %v2753 = vpack.c.b16 %v2065, %v2057
    %v2754 = vpack.c.b16 %v2066, %v2058
    %v2755 = vpack.c.b16 %v2067, %v2059
    %v2756 = vpack.c.b16 %v2068, %v2060
    %v2757 = vpack.c.b16 %v2069, %v2061
    %v2758 = vpack.c.b16 %v2070, %v2062
    %v2759 = vpack.c.b16 %v2079, %v2071
    %v2760 = vpack.c.b16 %v2080, %v2072
    %v2761 = vpack.c.b16 %v2081, %v2073
    %v2762 = vpack.c.b16 %v2082, %v2074
    %v2763 = vpack.c.b16 %v2083, %v2075
    %v2764 = vpack.c.b16 %v2084, %v2076
    %v2765 = vpack.c.b16 %v2085, %v2077
    %v2766 = vpack.c.b16 %v2086, %v2078
    %v2767 = vpack.c.b16 %v2095, %v2087
    %v2768 = vpack.c.b16 %v2096, %v2088
    %v2769 = vpack.c.b16 %v2097, %v2089
    %v2770 = vpack.c.b16 %v2098, %v2090
    %v2771 = vpack.c.b16 %v2099, %v2091
    %v2772 = vpack.c.b16 %v2100, %v2092
    %v2773 = vpack.c.b16 %v2101, %v2093
    %v2774 = vpack.c.b16 %v2102, %v2094
    %v2775 = vpack.c.b16 %v2111, %v2103
    %v2776 = vpack.c.b16 %v2112, %v2104
    %v2777 = vpack.c.b16 %v2113, %v2105
    %v2778 = vpack.c.b16 %v2114, %v2106
    %v2779 = vpack.c.b16 %v2115, %v2107
    %v2780 = vpack.c.b16 %v2116, %v2108
    %v2781 = vpack.c.b16 %v2117, %v2109
    %v2782 = vpack.c.b16 %v2118, %v2110
    %v2783 = vpack.c.b16 %v2127, %v2119
    %v2784 = vpack.c.b16 %v2128, %v2120
    %v2785 = vpack.c.b16 %v2129, %v2121
    %v2786 = vpack.c.b16 %v2130, %v2122
    %v2787 = vpack.c.b16 %v2131, %v2123
    %v2788 = vpack.c.b16 %v2132, %v2124
    %v2789 = vpack.c.b16 %v2133, %v2125
    %v2790 = vpack.c.b16 %v2134, %v2126
    %v2791 = vpack.c.b16 %v2143, %v2135
    %v2792 = vpack.c.b16 %v2144, %v2136
    %v2793 = vpack.c.b16 %v2145, %v2137
    %v2794 = vpack.c.b16 %v2146, %v2138
    %v2795 = vpack.c.b16 %v2147, %v2139
    %v2796 = vpack.c.b16 %v2148, %v2140
    %v2797 = vpack.c.b16 %v2149, %v2141
    %v2798 = vpack.c.b16 %v2150, %v2142
    %v2799 = vpack.c.b16 %v2159, %v2151
    %v2800 = vpack.c.b16 %v2160, %v2152
    %v2801 = vpack.c.b16 %v2161, %v2153
    %v2802 = vpack.c.b16 %v2162, %v2154
    %v2803 = vpack.c.b16 %v2163, %v2155
    %v2804 = vpack.c.b16 %v2164, %v2156
    %v2805 = vpack.c.b16 %v2165, %v2157
    %v2806 = vpack.c.b16 %v2166, %v2158
    %v2807 = vpack.c.b16 %v2175, %v2167
    %v2808 = vpack.c.b16 %v2176, %v2168
    %v2809 = vpack.c.b16 %v2177, %v2169
    %v2810 = vpack.c.b16 %v2178, %v2170
    %v2811 = vpack.c.b16 %v2179, %v2171
    %v2812 = vpack.c.b16 %v2180, %v2172
    %v2813 = vpack.c.b16 %v2181, %v2173
    %v2814 = vpack.c.b16 %v2182, %v2174
    %v2815 = vpack.c.b16 %v2191, %v2183
    %v2816 = vpack.c.b16 %v2192, %v2184
    %v2817 = vpack.c.b16 %v2193, %v2185
    %v2818 = vpack.c.b16 %v2194, %v2186
    %v2819 = vpack.c.b16 %v2195, %v2187
    %v2820 = vpack.c.b16 %v2196, %v2188
    %v2821 = vpack.c.b16 %v2197, %v2189
    %v2822 = vpack.c.b16 %v2198, %v2190
    %v2823 = vpack.c.b16 %v2207, %v2199
    %v2824 = vpack.c.b16 %v2208, %v2200
    %v2825 = vpack.c.b16 %v2209, %v2201
    %v2826 = vpack.c.b16 %v2210, %v2202
    %v2827 = vpack.c.b16 %v2211, %v2203
    %v2828 = vpack.c.b16 %v2212, %v2204
    %v2829 = vpack.c.b16 %v2213, %v2205
    %v2830 = vpack.c.b16 %v2214, %v2206
    %v2831 = vpack.c.b16 %v2223, %v2215
    %v2832 = vpack.c.b16 %v2224, %v2216
    %v2833 = vpack.c.b16 %v2225, %v2217
    %v2834 = vpack.c.b16 %v2226, %v2218
    %v2835 = vpack.c.b16 %v2227, %v2219
    %v2836 = vpack.c.b16 %v2228, %v2220
    %v2837 = vpack.c.b16 %v2229, %v2221
    %v2838 = vpack.c.b16 %v2230, %v2222
    %v2839 = vpack.c.b16 %v2239, %v2231
    %v2840 = vpack.c.b16 %v2240, %v2232
    %v2841 = vpack.c.b16 %v2241, %v2233
    %v2842 = vpack.c.b16 %v2242, %v2234
    %v2843 = vpack.c.b16 %v2243, %v2235
    %v2844 = vpack.c.b16 %v2244, %v2236
    %v2845 = vpack.c.b16 %v2245, %v2237
    %v2846 = vpack.c.b16 %v2246, %v2238
    %v2847 = vpack.c.b16 %v2255, %v2247
    %v2848 = vpack.c.b16 %v2256, %v2248
    %v2849 = vpack.c.b16 %v2257, %v2249
    %v2850 = vpack.c.b16 %v2258, %v2250
    %v2851 = vpack.c.b16 %v2259, %v2251
    %v2852 = vpack.c.b16 %v2260, %v2252
    %v2853 = vpack.c.b16 %v2261, %v2253
    %v2854 = vpack.c.b16 %v2262, %v2254
    %v2855 = vpack.c.b16 %v2271, %v2263
    %v2856 = vpack.c.b16 %v2272, %v2264
    %v2857 = vpack.c.b16 %v2273, %v2265
    %v2858 = vpack.c.b16 %v2274, %v2266
    %v2859 = vpack.c.b16 %v2275, %v2267
    %v2860 = vpack.c.b16 %v2276, %v2268
    %v2861 = vpack.c.b16 %v2277, %v2269
    %v2862 = vpack.c.b16 %v2278, %v2270
    %v2863 = vpack.c.b16 %v2287, %v2279
    %v2864 = vpack.c.b16 %v2288, %v2280
    %v2865 = vpack.c.b16 %v2289, %v2281
    %v2866 = vpack.c.b16 %v2290, %v2282
    %v2867 = vpack.c.b16 %v2291, %v2283
    %v2868 = vpack.c.b16 %v2292, %v2284
    %v2869 = vpack.c.b16 %v2293, %v2285
    %v2870 = vpack.c.b16 %v2294, %v2286
    %v2871 = vpack.c.b16 %v2303, %v2295
    %v2872 = vpack.c.b16 %v2304, %v2296
    %v2873 = vpack.c.b16 %v2305, %v2297
    %v2874 = vpack.c.b16 %v2306, %v2298
    %v2875 = vpack.c.b16 %v2307, %v2299
    %v2876 = vpack.c.b16 %v2308, %v2300
    %v2877 = vpack.c.b16 %v2309, %v2301
    %v2878 = vpack.c.b16 %v2310, %v2302
    %v2879 = vpack.c.b16 %v2319, %v2311
    %v2880 = vpack.c.b16 %v2320, %v2312
    %v2881 = vpack.c.b16 %v2321, %v2313
    %v2882 = vpack.c.b16 %v2322, %v2314
    %v2883 = vpack.c.b16 %v2323, %v2315
    %v2884 = vpack.c.b16 %v2324, %v2316
    %v2885 = vpack.c.b16 %v2325, %v2317
    %v2886 = vpack.c.b16 %v2326, %v2318
    %v2887 = vpack.c.b16 %v2335, %v2327
    %v2888 = vpack.c.b16 %v2336, %v2328
    %v2889 = vpack.c.b16 %v2337, %v2329
    %v2890 = vpack.c.b16 %v2338, %v2330
    %v2891 = vpack.c.b16 %v2339, %v2331
    %v2892 = vpack.c.b16 %v2340, %v2332
    %v2893 = vpack.c.b16 %v2341, %v2333
    %v2894 = vpack.c.b16 %v2342, %v2334
    %v2895 = vpack.c.b16 %v2351, %v2343
    %v2896 = vpack.c.b16 %v2352, %v2344
    %v2897 = vpack.c.b16 %v2353, %v2345
    %v2898 = vpack.c.b16 %v2354, %v2346
    %v2899 = vpack.c.b16 %v2355, %v2347
    %v2900 = vpack.c.b16 %v2356, %v2348
    %v2901 = vpack.c.b16 %v2357, %v2349
    %v2902 = vpack.c.b16 %v2358, %v2350
    %v2903 = vpack.c.b16 %v2367, %v2359
    %v2904 = vpack.c.b16 %v2368, %v2360
    %v2905 = vpack.c.b16 %v2369, %v2361
    %v2906 = vpack.c.b16 %v2370, %v2362
    %v2907 = vpack.c.b16 %v2371, %v2363
    %v2908 = vpack.c.b16 %v2372, %v2364
    %v2909 = vpack.c.b16 %v2373, %v2365
    %v2910 = vpack.c.b16 %v2374, %v2366
    %v2911 = vpack.c.b16 %v2383, %v2375
    %v2912 = vpack.c.b16 %v2384, %v2376
    %v2913 = vpack.c.b16 %v2385, %v2377
    %v2914 = vpack.c.b16 %v2386, %v2378
    %v2915 = vpack.c.b16 %v2387, %v2379
    %v2916 = vpack.c.b16 %v2388, %v2380
    %v2917 = vpack.c.b16 %v2389, %v2381
    %v2918 = vpack.c.b16 %v2390, %v2382
    %v2919 = vpack.c.b16 %v2399, %v2391
    %v2920 = vpack.c.b16 %v2400, %v2392
    %v2921 = vpack.c.b16 %v2401, %v2393
    %v2922 = vpack.c.b16 %v2402, %v2394
    %v2923 = vpack.c.b16 %v2403, %v2395
    %v2924 = vpack.c.b16 %v2404, %v2396
    %v2925 = vpack.c.b16 %v2405, %v2397
    %v2926 = vpack.c.b16 %v2406, %v2398
    %v2927 = vpack.c.b16 %v2415, %v2407
    %v2928 = vpack.c.b16 %v2416, %v2408
    %v2929 = vpack.c.b16 %v2417, %v2409
    %v2930 = vpack.c.b16 %v2418, %v2410
    %v2931 = vpack.c.b16 %v2419, %v2411
    %v2932 = vpack.c.b16 %v2420, %v2412
    %v2933 = vpack.c.b16 %v2421, %v2413
    %v2934 = vpack.c.b16 %v2422, %v2414
    %3447 = vmatpush.bf16.msra.mxu0 %v2479
    %3448 = vmatpush.bf16.msra.mxu0 %v2471
    %3449 = vmatpush.bf16.msra.mxu0 %v2463
    %3450 = vmatpush.bf16.msra.mxu0 %v2455
    %3451 = vmatpush.bf16.msra.mxu0 %v2447
    %3452 = vmatpush.bf16.msra.mxu0 %v2439
    %3453 = vmatpush.bf16.msra.mxu0 %v2431
    %3454 = vmatpush.bf16.msra.mxu0 %v2423
    %3455 = vmatmul.bf16.gmra.mxu0 %v349
    %v3456 = vpop.f32.mrf.mxu0
    %v3457 = vadd.f32 %v871, %v3456
    %v3458 = vpop.f32.mrf.mxu0
    %v3459 = vadd.f32 %v871, %v3458
    %3460 = vdwg.mxu0
    %3461 = vmatpush.bf16.msra.mxu0 %v2543
    %3462 = vmatpush.bf16.msra.mxu0 %v2535
    %3463 = vmatpush.bf16.msra.mxu0 %v2527
    %3464 = vmatpush.bf16.msra.mxu0 %v2519
    %3465 = vmatpush.bf16.msra.mxu0 %v2511
    %3466 = vmatpush.bf16.msra.mxu0 %v2503
    %3467 = vmatpush.bf16.msra.mxu0 %v2495
    %3468 = vmatpush.bf16.msra.mxu0 %v2487
    %3469 = vmatmul.bf16.gmra.mxu0 %v350
    %v3470 = vpop.f32.mrf.mxu0
    %v3471 = vadd.f32 %v3457, %v3470
    %v3472 = vpop.f32.mrf.mxu0
    %v3473 = vadd.f32 %v3459, %v3472
    %3474 = vdwg.mxu0
    %3475 = vmatpush.bf16.msra.mxu0 %v2607
    %3476 = vmatpush.bf16.msra.mxu0 %v2599
    %3477 = vmatpush.bf16.msra.mxu0 %v2591
    %3478 = vmatpush.bf16.msra.mxu0 %v2583
    %3479 = vmatpush.bf16.msra.mxu0 %v2575
    %3480 = vmatpush.bf16.msra.mxu0 %v2567
    %3481 = vmatpush.bf16.msra.mxu0 %v2559
    %3482 = vmatpush.bf16.msra.mxu0 %v2551
    %3483 = vmatmul.bf16.gmra.mxu0 %v351
    %v3484 = vpop.f32.mrf.mxu0
    %v3485 = vadd.f32 %v3471, %v3484
    %v3486 = vpop.f32.mrf.mxu0
    %v3487 = vadd.f32 %v3473, %v3486
    %3488 = vdwg.mxu0
    %3489 = vmatpush.bf16.msra.mxu0 %v2671
    %3490 = vmatpush.bf16.msra.mxu0 %v2663
    %3491 = vmatpush.bf16.msra.mxu0 %v2655
    %3492 = vmatpush.bf16.msra.mxu0 %v2647
    %3493 = vmatpush.bf16.msra.mxu0 %v2639
    %3494 = vmatpush.bf16.msra.mxu0 %v2631
    %3495 = vmatpush.bf16.msra.mxu0 %v2623
    %3496 = vmatpush.bf16.msra.mxu0 %v2615
    %3497 = vmatmul.bf16.gmra.mxu0 %v352
    %v3498 = vpop.f32.mrf.mxu0
    %v3499 = vadd.f32 %v3485, %v3498
    %v3500 = vpop.f32.mrf.mxu0
    %v3501 = vadd.f32 %v3487, %v3500
    %3502 = vdwg.mxu0
    %3503 = vmatpush.bf16.msra.mxu0 %v2735
    %3504 = vmatpush.bf16.msra.mxu0 %v2727
    %3505 = vmatpush.bf16.msra.mxu0 %v2719
    %3506 = vmatpush.bf16.msra.mxu0 %v2711
    %3507 = vmatpush.bf16.msra.mxu0 %v2703
    %3508 = vmatpush.bf16.msra.mxu0 %v2695
    %3509 = vmatpush.bf16.msra.mxu0 %v2687
    %3510 = vmatpush.bf16.msra.mxu0 %v2679
    %3511 = vmatmul.bf16.gmra.mxu0 %v353
    %v3512 = vpop.f32.mrf.mxu0
    %v3513 = vadd.f32 %v3499, %v3512
    %v3514 = vpop.f32.mrf.mxu0
    %v3515 = vadd.f32 %v3501, %v3514
    %3516 = vdwg.mxu0
    %3517 = vmatpush.bf16.msra.mxu0 %v2799
    %3518 = vmatpush.bf16.msra.mxu0 %v2791
    %3519 = vmatpush.bf16.msra.mxu0 %v2783
    %3520 = vmatpush.bf16.msra.mxu0 %v2775
    %3521 = vmatpush.bf16.msra.mxu0 %v2767
    %3522 = vmatpush.bf16.msra.mxu0 %v2759
    %3523 = vmatpush.bf16.msra.mxu0 %v2751
    %3524 = vmatpush.bf16.msra.mxu0 %v2743
    %3525 = vmatmul.bf16.gmra.mxu0 %v354
    %v3526 = vpop.f32.mrf.mxu0
    %v3527 = vadd.f32 %v3513, %v3526
    %v3528 = vpop.f32.mrf.mxu0
    %v3529 = vadd.f32 %v3515, %v3528
    %3530 = vdwg.mxu0
    %3531 = vmatpush.bf16.msra.mxu0 %v2863
    %3532 = vmatpush.bf16.msra.mxu0 %v2855
    %3533 = vmatpush.bf16.msra.mxu0 %v2847
    %3534 = vmatpush.bf16.msra.mxu0 %v2839
    %3535 = vmatpush.bf16.msra.mxu0 %v2831
    %3536 = vmatpush.bf16.msra.mxu0 %v2823
    %3537 = vmatpush.bf16.msra.mxu0 %v2815
    %3538 = vmatpush.bf16.msra.mxu0 %v2807
    %3539 = vmatmul.bf16.gmra.mxu0 %v355
    %v3540 = vpop.f32.mrf.mxu0
    %v3541 = vadd.f32 %v3527, %v3540
    %v3542 = vpop.f32.mrf.mxu0
    %v3543 = vadd.f32 %v3529, %v3542
    %3544 = vdwg.mxu0
    %3545 = vmatpush.bf16.msra.mxu0 %v2927
    %3546 = vmatpush.bf16.msra.mxu0 %v2919
    %3547 = vmatpush.bf16.msra.mxu0 %v2911
    %3548 = vmatpush.bf16.msra.mxu0 %v2903
    %3549 = vmatpush.bf16.msra.mxu0 %v2895
    %3550 = vmatpush.bf16.msra.mxu0 %v2887
    %3551 = vmatpush.bf16.msra.mxu0 %v2879
    %3552 = vmatpush.bf16.msra.mxu0 %v2871
    %3553 = vmatmul.bf16.gmra.mxu0 %v356
    %v3554 = vpop.f32.mrf.mxu0
    %v3555 = vadd.f32 %v3541, %v3554
    %v3556 = vpop.f32.mrf.mxu0
    %v3557 = vadd.f32 %v3543, %v3556
    %3558 = vdwg.mxu0
    %3559 = vmatpush.bf16.msra.mxu0 %v2480
    %3560 = vmatpush.bf16.msra.mxu0 %v2472
    %3561 = vmatpush.bf16.msra.mxu0 %v2464
    %3562 = vmatpush.bf16.msra.mxu0 %v2456
    %3563 = vmatpush.bf16.msra.mxu0 %v2448
    %3564 = vmatpush.bf16.msra.mxu0 %v2440
    %3565 = vmatpush.bf16.msra.mxu0 %v2432
    %3566 = vmatpush.bf16.msra.mxu0 %v2424
    %3567 = vmatmul.bf16.gmra.mxu0 %v349
    %v3568 = vpop.f32.mrf.mxu0
    %v3569 = vadd.f32 %v872, %v3568
    %v3570 = vpop.f32.mrf.mxu0
    %v3571 = vadd.f32 %v872, %v3570
    %3572 = vdwg.mxu0
    %3573 = vmatpush.bf16.msra.mxu0 %v2544
    %3574 = vmatpush.bf16.msra.mxu0 %v2536
    %3575 = vmatpush.bf16.msra.mxu0 %v2528
    %3576 = vmatpush.bf16.msra.mxu0 %v2520
    %3577 = vmatpush.bf16.msra.mxu0 %v2512
    %3578 = vmatpush.bf16.msra.mxu0 %v2504
    %3579 = vmatpush.bf16.msra.mxu0 %v2496
    %3580 = vmatpush.bf16.msra.mxu0 %v2488
    %3581 = vmatmul.bf16.gmra.mxu0 %v350
    %v3582 = vpop.f32.mrf.mxu0
    %v3583 = vadd.f32 %v3569, %v3582
    %v3584 = vpop.f32.mrf.mxu0
    %v3585 = vadd.f32 %v3571, %v3584
    %3586 = vdwg.mxu0
    %3587 = vmatpush.bf16.msra.mxu0 %v2608
    %3588 = vmatpush.bf16.msra.mxu0 %v2600
    %3589 = vmatpush.bf16.msra.mxu0 %v2592
    %3590 = vmatpush.bf16.msra.mxu0 %v2584
    %3591 = vmatpush.bf16.msra.mxu0 %v2576
    %3592 = vmatpush.bf16.msra.mxu0 %v2568
    %3593 = vmatpush.bf16.msra.mxu0 %v2560
    %3594 = vmatpush.bf16.msra.mxu0 %v2552
    %3595 = vmatmul.bf16.gmra.mxu0 %v351
    %v3596 = vpop.f32.mrf.mxu0
    %v3597 = vadd.f32 %v3583, %v3596
    %v3598 = vpop.f32.mrf.mxu0
    %v3599 = vadd.f32 %v3585, %v3598
    %3600 = vdwg.mxu0
    %3601 = vmatpush.bf16.msra.mxu0 %v2672
    %3602 = vmatpush.bf16.msra.mxu0 %v2664
    %3603 = vmatpush.bf16.msra.mxu0 %v2656
    %3604 = vmatpush.bf16.msra.mxu0 %v2648
    %3605 = vmatpush.bf16.msra.mxu0 %v2640
    %3606 = vmatpush.bf16.msra.mxu0 %v2632
    %3607 = vmatpush.bf16.msra.mxu0 %v2624
    %3608 = vmatpush.bf16.msra.mxu0 %v2616
    %3609 = vmatmul.bf16.gmra.mxu0 %v352
    %v3610 = vpop.f32.mrf.mxu0
    %v3611 = vadd.f32 %v3597, %v3610
    %v3612 = vpop.f32.mrf.mxu0
    %v3613 = vadd.f32 %v3599, %v3612
    %3614 = vdwg.mxu0
    %3615 = vmatpush.bf16.msra.mxu0 %v2736
    %3616 = vmatpush.bf16.msra.mxu0 %v2728
    %3617 = vmatpush.bf16.msra.mxu0 %v2720
    %3618 = vmatpush.bf16.msra.mxu0 %v2712
    %3619 = vmatpush.bf16.msra.mxu0 %v2704
    %3620 = vmatpush.bf16.msra.mxu0 %v2696
    %3621 = vmatpush.bf16.msra.mxu0 %v2688
    %3622 = vmatpush.bf16.msra.mxu0 %v2680
    %3623 = vmatmul.bf16.gmra.mxu0 %v353
    %v3624 = vpop.f32.mrf.mxu0
    %v3625 = vadd.f32 %v3611, %v3624
    %v3626 = vpop.f32.mrf.mxu0
    %v3627 = vadd.f32 %v3613, %v3626
    %3628 = vdwg.mxu0
    %3629 = vmatpush.bf16.msra.mxu0 %v2800
    %3630 = vmatpush.bf16.msra.mxu0 %v2792
    %3631 = vmatpush.bf16.msra.mxu0 %v2784
    %3632 = vmatpush.bf16.msra.mxu0 %v2776
    %3633 = vmatpush.bf16.msra.mxu0 %v2768
    %3634 = vmatpush.bf16.msra.mxu0 %v2760
    %3635 = vmatpush.bf16.msra.mxu0 %v2752
    %3636 = vmatpush.bf16.msra.mxu0 %v2744
    %3637 = vmatmul.bf16.gmra.mxu0 %v354
    %v3638 = vpop.f32.mrf.mxu0
    %v3639 = vadd.f32 %v3625, %v3638
    %v3640 = vpop.f32.mrf.mxu0
    %v3641 = vadd.f32 %v3627, %v3640
    %3642 = vdwg.mxu0
    %3643 = vmatpush.bf16.msra.mxu0 %v2864
    %3644 = vmatpush.bf16.msra.mxu0 %v2856
    %3645 = vmatpush.bf16.msra.mxu0 %v2848
    %3646 = vmatpush.bf16.msra.mxu0 %v2840
    %3647 = vmatpush.bf16.msra.mxu0 %v2832
    %3648 = vmatpush.bf16.msra.mxu0 %v2824
    %3649 = vmatpush.bf16.msra.mxu0 %v2816
    %3650 = vmatpush.bf16.msra.mxu0 %v2808
    %3651 = vmatmul.bf16.gmra.mxu0 %v355
    %v3652 = vpop.f32.mrf.mxu0
    %v3653 = vadd.f32 %v3639, %v3652
    %v3654 = vpop.f32.mrf.mxu0
    %v3655 = vadd.f32 %v3641, %v3654
    %3656 = vdwg.mxu0
    %3657 = vmatpush.bf16.msra.mxu0 %v2928
    %3658 = vmatpush.bf16.msra.mxu0 %v2920
    %3659 = vmatpush.bf16.msra.mxu0 %v2912
    %3660 = vmatpush.bf16.msra.mxu0 %v2904
    %3661 = vmatpush.bf16.msra.mxu0 %v2896
    %3662 = vmatpush.bf16.msra.mxu0 %v2888
    %3663 = vmatpush.bf16.msra.mxu0 %v2880
    %3664 = vmatpush.bf16.msra.mxu0 %v2872
    %3665 = vmatmul.bf16.gmra.mxu0 %v356
    %v3666 = vpop.f32.mrf.mxu0
    %v3667 = vadd.f32 %v3653, %v3666
    %v3668 = vpop.f32.mrf.mxu0
    %v3669 = vadd.f32 %v3655, %v3668
    %3670 = vdwg.mxu0
    %3671 = vmatpush.bf16.msra.mxu0 %v2481
    %3672 = vmatpush.bf16.msra.mxu0 %v2473
    %3673 = vmatpush.bf16.msra.mxu0 %v2465
    %3674 = vmatpush.bf16.msra.mxu0 %v2457
    %3675 = vmatpush.bf16.msra.mxu0 %v2449
    %3676 = vmatpush.bf16.msra.mxu0 %v2441
    %3677 = vmatpush.bf16.msra.mxu0 %v2433
    %3678 = vmatpush.bf16.msra.mxu0 %v2425
    %3679 = vmatmul.bf16.gmra.mxu0 %v349
    %v3680 = vpop.f32.mrf.mxu0
    %v3681 = vadd.f32 %v873, %v3680
    %v3682 = vpop.f32.mrf.mxu0
    %v3683 = vadd.f32 %v873, %v3682
    %3684 = vdwg.mxu0
    %3685 = vmatpush.bf16.msra.mxu0 %v2545
    %3686 = vmatpush.bf16.msra.mxu0 %v2537
    %3687 = vmatpush.bf16.msra.mxu0 %v2529
    %3688 = vmatpush.bf16.msra.mxu0 %v2521
    %3689 = vmatpush.bf16.msra.mxu0 %v2513
    %3690 = vmatpush.bf16.msra.mxu0 %v2505
    %3691 = vmatpush.bf16.msra.mxu0 %v2497
    %3692 = vmatpush.bf16.msra.mxu0 %v2489
    %3693 = vmatmul.bf16.gmra.mxu0 %v350
    %v3694 = vpop.f32.mrf.mxu0
    %v3695 = vadd.f32 %v3681, %v3694
    %v3696 = vpop.f32.mrf.mxu0
    %v3697 = vadd.f32 %v3683, %v3696
    %3698 = vdwg.mxu0
    %3699 = vmatpush.bf16.msra.mxu0 %v2609
    %3700 = vmatpush.bf16.msra.mxu0 %v2601
    %3701 = vmatpush.bf16.msra.mxu0 %v2593
    %3702 = vmatpush.bf16.msra.mxu0 %v2585
    %3703 = vmatpush.bf16.msra.mxu0 %v2577
    %3704 = vmatpush.bf16.msra.mxu0 %v2569
    %3705 = vmatpush.bf16.msra.mxu0 %v2561
    %3706 = vmatpush.bf16.msra.mxu0 %v2553
    %3707 = vmatmul.bf16.gmra.mxu0 %v351
    %v3708 = vpop.f32.mrf.mxu0
    %v3709 = vadd.f32 %v3695, %v3708
    %v3710 = vpop.f32.mrf.mxu0
    %v3711 = vadd.f32 %v3697, %v3710
    %3712 = vdwg.mxu0
    %3713 = vmatpush.bf16.msra.mxu0 %v2673
    %3714 = vmatpush.bf16.msra.mxu0 %v2665
    %3715 = vmatpush.bf16.msra.mxu0 %v2657
    %3716 = vmatpush.bf16.msra.mxu0 %v2649
    %3717 = vmatpush.bf16.msra.mxu0 %v2641
    %3718 = vmatpush.bf16.msra.mxu0 %v2633
    %3719 = vmatpush.bf16.msra.mxu0 %v2625
    %3720 = vmatpush.bf16.msra.mxu0 %v2617
    %3721 = vmatmul.bf16.gmra.mxu0 %v352
    %v3722 = vpop.f32.mrf.mxu0
    %v3723 = vadd.f32 %v3709, %v3722
    %v3724 = vpop.f32.mrf.mxu0
    %v3725 = vadd.f32 %v3711, %v3724
    %3726 = vdwg.mxu0
    %3727 = vmatpush.bf16.msra.mxu0 %v2737
    %3728 = vmatpush.bf16.msra.mxu0 %v2729
    %3729 = vmatpush.bf16.msra.mxu0 %v2721
    %3730 = vmatpush.bf16.msra.mxu0 %v2713
    %3731 = vmatpush.bf16.msra.mxu0 %v2705
    %3732 = vmatpush.bf16.msra.mxu0 %v2697
    %3733 = vmatpush.bf16.msra.mxu0 %v2689
    %3734 = vmatpush.bf16.msra.mxu0 %v2681
    %3735 = vmatmul.bf16.gmra.mxu0 %v353
    %v3736 = vpop.f32.mrf.mxu0
    %v3737 = vadd.f32 %v3723, %v3736
    %v3738 = vpop.f32.mrf.mxu0
    %v3739 = vadd.f32 %v3725, %v3738
    %3740 = vdwg.mxu0
    %3741 = vmatpush.bf16.msra.mxu0 %v2801
    %3742 = vmatpush.bf16.msra.mxu0 %v2793
    %3743 = vmatpush.bf16.msra.mxu0 %v2785
    %3744 = vmatpush.bf16.msra.mxu0 %v2777
    %3745 = vmatpush.bf16.msra.mxu0 %v2769
    %3746 = vmatpush.bf16.msra.mxu0 %v2761
    %3747 = vmatpush.bf16.msra.mxu0 %v2753
    %3748 = vmatpush.bf16.msra.mxu0 %v2745
    %3749 = vmatmul.bf16.gmra.mxu0 %v354
    %v3750 = vpop.f32.mrf.mxu0
    %v3751 = vadd.f32 %v3737, %v3750
    %v3752 = vpop.f32.mrf.mxu0
    %v3753 = vadd.f32 %v3739, %v3752
    %3754 = vdwg.mxu0
    %3755 = vmatpush.bf16.msra.mxu0 %v2865
    %3756 = vmatpush.bf16.msra.mxu0 %v2857
    %3757 = vmatpush.bf16.msra.mxu0 %v2849
    %3758 = vmatpush.bf16.msra.mxu0 %v2841
    %3759 = vmatpush.bf16.msra.mxu0 %v2833
    %3760 = vmatpush.bf16.msra.mxu0 %v2825
    %3761 = vmatpush.bf16.msra.mxu0 %v2817
    %3762 = vmatpush.bf16.msra.mxu0 %v2809
    %3763 = vmatmul.bf16.gmra.mxu0 %v355
    %v3764 = vpop.f32.mrf.mxu0
    %v3765 = vadd.f32 %v3751, %v3764
    %v3766 = vpop.f32.mrf.mxu0
    %v3767 = vadd.f32 %v3753, %v3766
    %3768 = vdwg.mxu0
    %3769 = vmatpush.bf16.msra.mxu0 %v2929
    %3770 = vmatpush.bf16.msra.mxu0 %v2921
    %3771 = vmatpush.bf16.msra.mxu0 %v2913
    %3772 = vmatpush.bf16.msra.mxu0 %v2905
    %3773 = vmatpush.bf16.msra.mxu0 %v2897
    %3774 = vmatpush.bf16.msra.mxu0 %v2889
    %3775 = vmatpush.bf16.msra.mxu0 %v2881
    %3776 = vmatpush.bf16.msra.mxu0 %v2873
    %3777 = vmatmul.bf16.gmra.mxu0 %v356
    %v3778 = vpop.f32.mrf.mxu0
    %v3779 = vadd.f32 %v3765, %v3778
    %v3780 = vpop.f32.mrf.mxu0
    %v3781 = vadd.f32 %v3767, %v3780
    %3782 = vdwg.mxu0
    %3783 = vmatpush.bf16.msra.mxu0 %v2482
    %3784 = vmatpush.bf16.msra.mxu0 %v2474
    %3785 = vmatpush.bf16.msra.mxu0 %v2466
    %3786 = vmatpush.bf16.msra.mxu0 %v2458
    %3787 = vmatpush.bf16.msra.mxu0 %v2450
    %3788 = vmatpush.bf16.msra.mxu0 %v2442
    %3789 = vmatpush.bf16.msra.mxu0 %v2434
    %3790 = vmatpush.bf16.msra.mxu0 %v2426
    %3791 = vmatmul.bf16.gmra.mxu0 %v349
    %v3792 = vpop.f32.mrf.mxu0
    %v3793 = vadd.f32 %v874, %v3792
    %v3794 = vpop.f32.mrf.mxu0
    %v3795 = vadd.f32 %v874, %v3794
    %3796 = vdwg.mxu0
    %3797 = vmatpush.bf16.msra.mxu0 %v2546
    %3798 = vmatpush.bf16.msra.mxu0 %v2538
    %3799 = vmatpush.bf16.msra.mxu0 %v2530
    %3800 = vmatpush.bf16.msra.mxu0 %v2522
    %3801 = vmatpush.bf16.msra.mxu0 %v2514
    %3802 = vmatpush.bf16.msra.mxu0 %v2506
    %3803 = vmatpush.bf16.msra.mxu0 %v2498
    %3804 = vmatpush.bf16.msra.mxu0 %v2490
    %3805 = vmatmul.bf16.gmra.mxu0 %v350
    %v3806 = vpop.f32.mrf.mxu0
    %v3807 = vadd.f32 %v3793, %v3806
    %v3808 = vpop.f32.mrf.mxu0
    %v3809 = vadd.f32 %v3795, %v3808
    %3810 = vdwg.mxu0
    %3811 = vmatpush.bf16.msra.mxu0 %v2610
    %3812 = vmatpush.bf16.msra.mxu0 %v2602
    %3813 = vmatpush.bf16.msra.mxu0 %v2594
    %3814 = vmatpush.bf16.msra.mxu0 %v2586
    %3815 = vmatpush.bf16.msra.mxu0 %v2578
    %3816 = vmatpush.bf16.msra.mxu0 %v2570
    %3817 = vmatpush.bf16.msra.mxu0 %v2562
    %3818 = vmatpush.bf16.msra.mxu0 %v2554
    %3819 = vmatmul.bf16.gmra.mxu0 %v351
    %v3820 = vpop.f32.mrf.mxu0
    %v3821 = vadd.f32 %v3807, %v3820
    %v3822 = vpop.f32.mrf.mxu0
    %v3823 = vadd.f32 %v3809, %v3822
    %3824 = vdwg.mxu0
    %3825 = vmatpush.bf16.msra.mxu0 %v2674
    %3826 = vmatpush.bf16.msra.mxu0 %v2666
    %3827 = vmatpush.bf16.msra.mxu0 %v2658
    %3828 = vmatpush.bf16.msra.mxu0 %v2650
    %3829 = vmatpush.bf16.msra.mxu0 %v2642
    %3830 = vmatpush.bf16.msra.mxu0 %v2634
    %3831 = vmatpush.bf16.msra.mxu0 %v2626
    %3832 = vmatpush.bf16.msra.mxu0 %v2618
    %3833 = vmatmul.bf16.gmra.mxu0 %v352
    %v3834 = vpop.f32.mrf.mxu0
    %v3835 = vadd.f32 %v3821, %v3834
    %v3836 = vpop.f32.mrf.mxu0
    %v3837 = vadd.f32 %v3823, %v3836
    %3838 = vdwg.mxu0
    %3839 = vmatpush.bf16.msra.mxu0 %v2738
    %3840 = vmatpush.bf16.msra.mxu0 %v2730
    %3841 = vmatpush.bf16.msra.mxu0 %v2722
    %3842 = vmatpush.bf16.msra.mxu0 %v2714
    %3843 = vmatpush.bf16.msra.mxu0 %v2706
    %3844 = vmatpush.bf16.msra.mxu0 %v2698
    %3845 = vmatpush.bf16.msra.mxu0 %v2690
    %3846 = vmatpush.bf16.msra.mxu0 %v2682
    %3847 = vmatmul.bf16.gmra.mxu0 %v353
    %v3848 = vpop.f32.mrf.mxu0
    %v3849 = vadd.f32 %v3835, %v3848
    %v3850 = vpop.f32.mrf.mxu0
    %v3851 = vadd.f32 %v3837, %v3850
    %3852 = vdwg.mxu0
    %3853 = vmatpush.bf16.msra.mxu0 %v2802
    %3854 = vmatpush.bf16.msra.mxu0 %v2794
    %3855 = vmatpush.bf16.msra.mxu0 %v2786
    %3856 = vmatpush.bf16.msra.mxu0 %v2778
    %3857 = vmatpush.bf16.msra.mxu0 %v2770
    %3858 = vmatpush.bf16.msra.mxu0 %v2762
    %3859 = vmatpush.bf16.msra.mxu0 %v2754
    %3860 = vmatpush.bf16.msra.mxu0 %v2746
    %3861 = vmatmul.bf16.gmra.mxu0 %v354
    %v3862 = vpop.f32.mrf.mxu0
    %v3863 = vadd.f32 %v3849, %v3862
    %v3864 = vpop.f32.mrf.mxu0
    %v3865 = vadd.f32 %v3851, %v3864
    %3866 = vdwg.mxu0
    %3867 = vmatpush.bf16.msra.mxu0 %v2866
    %3868 = vmatpush.bf16.msra.mxu0 %v2858
    %3869 = vmatpush.bf16.msra.mxu0 %v2850
    %3870 = vmatpush.bf16.msra.mxu0 %v2842
    %3871 = vmatpush.bf16.msra.mxu0 %v2834
    %3872 = vmatpush.bf16.msra.mxu0 %v2826
    %3873 = vmatpush.bf16.msra.mxu0 %v2818
    %3874 = vmatpush.bf16.msra.mxu0 %v2810
    %3875 = vmatmul.bf16.gmra.mxu0 %v355
    %v3876 = vpop.f32.mrf.mxu0
    %v3877 = vadd.f32 %v3863, %v3876
    %v3878 = vpop.f32.mrf.mxu0
    %v3879 = vadd.f32 %v3865, %v3878
    %3880 = vdwg.mxu0
    %3881 = vmatpush.bf16.msra.mxu0 %v2930
    %3882 = vmatpush.bf16.msra.mxu0 %v2922
    %3883 = vmatpush.bf16.msra.mxu0 %v2914
    %3884 = vmatpush.bf16.msra.mxu0 %v2906
    %3885 = vmatpush.bf16.msra.mxu0 %v2898
    %3886 = vmatpush.bf16.msra.mxu0 %v2890
    %3887 = vmatpush.bf16.msra.mxu0 %v2882
    %3888 = vmatpush.bf16.msra.mxu0 %v2874
    %3889 = vmatmul.bf16.gmra.mxu0 %v356
    %v3890 = vpop.f32.mrf.mxu0
    %v3891 = vadd.f32 %v3877, %v3890
    %v3892 = vpop.f32.mrf.mxu0
    %v3893 = vadd.f32 %v3879, %v3892
    %3894 = vdwg.mxu0
    %3895 = vmatpush.bf16.msra.mxu0 %v2483
    %3896 = vmatpush.bf16.msra.mxu0 %v2475
    %3897 = vmatpush.bf16.msra.mxu0 %v2467
    %3898 = vmatpush.bf16.msra.mxu0 %v2459
    %3899 = vmatpush.bf16.msra.mxu0 %v2451
    %3900 = vmatpush.bf16.msra.mxu0 %v2443
    %3901 = vmatpush.bf16.msra.mxu0 %v2435
    %3902 = vmatpush.bf16.msra.mxu0 %v2427
    %3903 = vmatmul.bf16.gmra.mxu0 %v349
    %v3904 = vpop.f32.mrf.mxu0
    %v3905 = vadd.f32 %v875, %v3904
    %v3906 = vpop.f32.mrf.mxu0
    %v3907 = vadd.f32 %v875, %v3906
    %3908 = vdwg.mxu0
    %3909 = vmatpush.bf16.msra.mxu0 %v2547
    %3910 = vmatpush.bf16.msra.mxu0 %v2539
    %3911 = vmatpush.bf16.msra.mxu0 %v2531
    %3912 = vmatpush.bf16.msra.mxu0 %v2523
    %3913 = vmatpush.bf16.msra.mxu0 %v2515
    %3914 = vmatpush.bf16.msra.mxu0 %v2507
    %3915 = vmatpush.bf16.msra.mxu0 %v2499
    %3916 = vmatpush.bf16.msra.mxu0 %v2491
    %3917 = vmatmul.bf16.gmra.mxu0 %v350
    %v3918 = vpop.f32.mrf.mxu0
    %v3919 = vadd.f32 %v3905, %v3918
    %v3920 = vpop.f32.mrf.mxu0
    %v3921 = vadd.f32 %v3907, %v3920
    %3922 = vdwg.mxu0
    %3923 = vmatpush.bf16.msra.mxu0 %v2611
    %3924 = vmatpush.bf16.msra.mxu0 %v2603
    %3925 = vmatpush.bf16.msra.mxu0 %v2595
    %3926 = vmatpush.bf16.msra.mxu0 %v2587
    %3927 = vmatpush.bf16.msra.mxu0 %v2579
    %3928 = vmatpush.bf16.msra.mxu0 %v2571
    %3929 = vmatpush.bf16.msra.mxu0 %v2563
    %3930 = vmatpush.bf16.msra.mxu0 %v2555
    %3931 = vmatmul.bf16.gmra.mxu0 %v351
    %v3932 = vpop.f32.mrf.mxu0
    %v3933 = vadd.f32 %v3919, %v3932
    %v3934 = vpop.f32.mrf.mxu0
    %v3935 = vadd.f32 %v3921, %v3934
    %3936 = vdwg.mxu0
    %3937 = vmatpush.bf16.msra.mxu0 %v2675
    %3938 = vmatpush.bf16.msra.mxu0 %v2667
    %3939 = vmatpush.bf16.msra.mxu0 %v2659
    %3940 = vmatpush.bf16.msra.mxu0 %v2651
    %3941 = vmatpush.bf16.msra.mxu0 %v2643
    %3942 = vmatpush.bf16.msra.mxu0 %v2635
    %3943 = vmatpush.bf16.msra.mxu0 %v2627
    %3944 = vmatpush.bf16.msra.mxu0 %v2619
    %3945 = vmatmul.bf16.gmra.mxu0 %v352
    %v3946 = vpop.f32.mrf.mxu0
    %v3947 = vadd.f32 %v3933, %v3946
    %v3948 = vpop.f32.mrf.mxu0
    %v3949 = vadd.f32 %v3935, %v3948
    %3950 = vdwg.mxu0
    %3951 = vmatpush.bf16.msra.mxu0 %v2739
    %3952 = vmatpush.bf16.msra.mxu0 %v2731
    %3953 = vmatpush.bf16.msra.mxu0 %v2723
    %3954 = vmatpush.bf16.msra.mxu0 %v2715
    %3955 = vmatpush.bf16.msra.mxu0 %v2707
    %3956 = vmatpush.bf16.msra.mxu0 %v2699
    %3957 = vmatpush.bf16.msra.mxu0 %v2691
    %3958 = vmatpush.bf16.msra.mxu0 %v2683
    %3959 = vmatmul.bf16.gmra.mxu0 %v353
    %v3960 = vpop.f32.mrf.mxu0
    %v3961 = vadd.f32 %v3947, %v3960
    %v3962 = vpop.f32.mrf.mxu0
    %v3963 = vadd.f32 %v3949, %v3962
    %3964 = vdwg.mxu0
    %3965 = vmatpush.bf16.msra.mxu0 %v2803
    %3966 = vmatpush.bf16.msra.mxu0 %v2795
    %3967 = vmatpush.bf16.msra.mxu0 %v2787
    %3968 = vmatpush.bf16.msra.mxu0 %v2779
    %3969 = vmatpush.bf16.msra.mxu0 %v2771
    %3970 = vmatpush.bf16.msra.mxu0 %v2763
    %3971 = vmatpush.bf16.msra.mxu0 %v2755
    %3972 = vmatpush.bf16.msra.mxu0 %v2747
    %3973 = vmatmul.bf16.gmra.mxu0 %v354
    %v3974 = vpop.f32.mrf.mxu0
    %v3975 = vadd.f32 %v3961, %v3974
    %v3976 = vpop.f32.mrf.mxu0
    %v3977 = vadd.f32 %v3963, %v3976
    %3978 = vdwg.mxu0
    %3979 = vmatpush.bf16.msra.mxu0 %v2867
    %3980 = vmatpush.bf16.msra.mxu0 %v2859
    %3981 = vmatpush.bf16.msra.mxu0 %v2851
    %3982 = vmatpush.bf16.msra.mxu0 %v2843
    %3983 = vmatpush.bf16.msra.mxu0 %v2835
    %3984 = vmatpush.bf16.msra.mxu0 %v2827
    %3985 = vmatpush.bf16.msra.mxu0 %v2819
    %3986 = vmatpush.bf16.msra.mxu0 %v2811
    %3987 = vmatmul.bf16.gmra.mxu0 %v355
    %v3988 = vpop.f32.mrf.mxu0
    %v3989 = vadd.f32 %v3975, %v3988
    %v3990 = vpop.f32.mrf.mxu0
    %v3991 = vadd.f32 %v3977, %v3990
    %3992 = vdwg.mxu0
    %3993 = vmatpush.bf16.msra.mxu0 %v2931
    %3994 = vmatpush.bf16.msra.mxu0 %v2923
    %3995 = vmatpush.bf16.msra.mxu0 %v2915
    %3996 = vmatpush.bf16.msra.mxu0 %v2907
    %3997 = vmatpush.bf16.msra.mxu0 %v2899
    %3998 = vmatpush.bf16.msra.mxu0 %v2891
    %3999 = vmatpush.bf16.msra.mxu0 %v2883
    %4000 = vmatpush.bf16.msra.mxu0 %v2875
    %4001 = vmatmul.bf16.gmra.mxu0 %v356
    %v4002 = vpop.f32.mrf.mxu0
    %v4003 = vadd.f32 %v3989, %v4002
    %v4004 = vpop.f32.mrf.mxu0
    %v4005 = vadd.f32 %v3991, %v4004
    %4006 = vdwg.mxu0
    %4007 = vmatpush.bf16.msra.mxu0 %v2484
    %4008 = vmatpush.bf16.msra.mxu0 %v2476
    %4009 = vmatpush.bf16.msra.mxu0 %v2468
    %4010 = vmatpush.bf16.msra.mxu0 %v2460
    %4011 = vmatpush.bf16.msra.mxu0 %v2452
    %4012 = vmatpush.bf16.msra.mxu0 %v2444
    %4013 = vmatpush.bf16.msra.mxu0 %v2436
    %4014 = vmatpush.bf16.msra.mxu0 %v2428
    %4015 = vmatmul.bf16.gmra.mxu0 %v349
    %v4016 = vpop.f32.mrf.mxu0
    %v4017 = vadd.f32 %v876, %v4016
    %v4018 = vpop.f32.mrf.mxu0
    %v4019 = vadd.f32 %v876, %v4018
    %4020 = vdwg.mxu0
    %4021 = vmatpush.bf16.msra.mxu0 %v2548
    %4022 = vmatpush.bf16.msra.mxu0 %v2540
    %4023 = vmatpush.bf16.msra.mxu0 %v2532
    %4024 = vmatpush.bf16.msra.mxu0 %v2524
    %4025 = vmatpush.bf16.msra.mxu0 %v2516
    %4026 = vmatpush.bf16.msra.mxu0 %v2508
    %4027 = vmatpush.bf16.msra.mxu0 %v2500
    %4028 = vmatpush.bf16.msra.mxu0 %v2492
    %4029 = vmatmul.bf16.gmra.mxu0 %v350
    %v4030 = vpop.f32.mrf.mxu0
    %v4031 = vadd.f32 %v4017, %v4030
    %v4032 = vpop.f32.mrf.mxu0
    %v4033 = vadd.f32 %v4019, %v4032
    %4034 = vdwg.mxu0
    %4035 = vmatpush.bf16.msra.mxu0 %v2612
    %4036 = vmatpush.bf16.msra.mxu0 %v2604
    %4037 = vmatpush.bf16.msra.mxu0 %v2596
    %4038 = vmatpush.bf16.msra.mxu0 %v2588
    %4039 = vmatpush.bf16.msra.mxu0 %v2580
    %4040 = vmatpush.bf16.msra.mxu0 %v2572
    %4041 = vmatpush.bf16.msra.mxu0 %v2564
    %4042 = vmatpush.bf16.msra.mxu0 %v2556
    %4043 = vmatmul.bf16.gmra.mxu0 %v351
    %v4044 = vpop.f32.mrf.mxu0
    %v4045 = vadd.f32 %v4031, %v4044
    %v4046 = vpop.f32.mrf.mxu0
    %v4047 = vadd.f32 %v4033, %v4046
    %4048 = vdwg.mxu0
    %4049 = vmatpush.bf16.msra.mxu0 %v2676
    %4050 = vmatpush.bf16.msra.mxu0 %v2668
    %4051 = vmatpush.bf16.msra.mxu0 %v2660
    %4052 = vmatpush.bf16.msra.mxu0 %v2652
    %4053 = vmatpush.bf16.msra.mxu0 %v2644
    %4054 = vmatpush.bf16.msra.mxu0 %v2636
    %4055 = vmatpush.bf16.msra.mxu0 %v2628
    %4056 = vmatpush.bf16.msra.mxu0 %v2620
    %4057 = vmatmul.bf16.gmra.mxu0 %v352
    %v4058 = vpop.f32.mrf.mxu0
    %v4059 = vadd.f32 %v4045, %v4058
    %v4060 = vpop.f32.mrf.mxu0
    %v4061 = vadd.f32 %v4047, %v4060
    %4062 = vdwg.mxu0
    %4063 = vmatpush.bf16.msra.mxu0 %v2740
    %4064 = vmatpush.bf16.msra.mxu0 %v2732
    %4065 = vmatpush.bf16.msra.mxu0 %v2724
    %4066 = vmatpush.bf16.msra.mxu0 %v2716
    %4067 = vmatpush.bf16.msra.mxu0 %v2708
    %4068 = vmatpush.bf16.msra.mxu0 %v2700
    %4069 = vmatpush.bf16.msra.mxu0 %v2692
    %4070 = vmatpush.bf16.msra.mxu0 %v2684
    %4071 = vmatmul.bf16.gmra.mxu0 %v353
    %v4072 = vpop.f32.mrf.mxu0
    %v4073 = vadd.f32 %v4059, %v4072
    %v4074 = vpop.f32.mrf.mxu0
    %v4075 = vadd.f32 %v4061, %v4074
    %4076 = vdwg.mxu0
    %4077 = vmatpush.bf16.msra.mxu0 %v2804
    %4078 = vmatpush.bf16.msra.mxu0 %v2796
    %4079 = vmatpush.bf16.msra.mxu0 %v2788
    %4080 = vmatpush.bf16.msra.mxu0 %v2780
    %4081 = vmatpush.bf16.msra.mxu0 %v2772
    %4082 = vmatpush.bf16.msra.mxu0 %v2764
    %4083 = vmatpush.bf16.msra.mxu0 %v2756
    %4084 = vmatpush.bf16.msra.mxu0 %v2748
    %4085 = vmatmul.bf16.gmra.mxu0 %v354
    %v4086 = vpop.f32.mrf.mxu0
    %v4087 = vadd.f32 %v4073, %v4086
    %v4088 = vpop.f32.mrf.mxu0
    %v4089 = vadd.f32 %v4075, %v4088
    %4090 = vdwg.mxu0
    %4091 = vmatpush.bf16.msra.mxu0 %v2868
    %4092 = vmatpush.bf16.msra.mxu0 %v2860
    %4093 = vmatpush.bf16.msra.mxu0 %v2852
    %4094 = vmatpush.bf16.msra.mxu0 %v2844
    %4095 = vmatpush.bf16.msra.mxu0 %v2836
    %4096 = vmatpush.bf16.msra.mxu0 %v2828
    %4097 = vmatpush.bf16.msra.mxu0 %v2820
    %4098 = vmatpush.bf16.msra.mxu0 %v2812
    %4099 = vmatmul.bf16.gmra.mxu0 %v355
    %v4100 = vpop.f32.mrf.mxu0
    %v4101 = vadd.f32 %v4087, %v4100
    %v4102 = vpop.f32.mrf.mxu0
    %v4103 = vadd.f32 %v4089, %v4102
    %4104 = vdwg.mxu0
    %4105 = vmatpush.bf16.msra.mxu0 %v2932
    %4106 = vmatpush.bf16.msra.mxu0 %v2924
    %4107 = vmatpush.bf16.msra.mxu0 %v2916
    %4108 = vmatpush.bf16.msra.mxu0 %v2908
    %4109 = vmatpush.bf16.msra.mxu0 %v2900
    %4110 = vmatpush.bf16.msra.mxu0 %v2892
    %4111 = vmatpush.bf16.msra.mxu0 %v2884
    %4112 = vmatpush.bf16.msra.mxu0 %v2876
    %4113 = vmatmul.bf16.gmra.mxu0 %v356
    %v4114 = vpop.f32.mrf.mxu0
    %v4115 = vadd.f32 %v4101, %v4114
    %v4116 = vpop.f32.mrf.mxu0
    %v4117 = vadd.f32 %v4103, %v4116
    %4118 = vdwg.mxu0
    %4119 = vmatpush.bf16.msra.mxu0 %v2485
    %4120 = vmatpush.bf16.msra.mxu0 %v2477
    %4121 = vmatpush.bf16.msra.mxu0 %v2469
    %4122 = vmatpush.bf16.msra.mxu0 %v2461
    %4123 = vmatpush.bf16.msra.mxu0 %v2453
    %4124 = vmatpush.bf16.msra.mxu0 %v2445
    %4125 = vmatpush.bf16.msra.mxu0 %v2437
    %4126 = vmatpush.bf16.msra.mxu0 %v2429
    %4127 = vmatmul.bf16.gmra.mxu0 %v349
    %v4128 = vpop.f32.mrf.mxu0
    %v4129 = vadd.f32 %v877, %v4128
    %v4130 = vpop.f32.mrf.mxu0
    %v4131 = vadd.f32 %v877, %v4130
    %4132 = vdwg.mxu0
    %4133 = vmatpush.bf16.msra.mxu0 %v2549
    %4134 = vmatpush.bf16.msra.mxu0 %v2541
    %4135 = vmatpush.bf16.msra.mxu0 %v2533
    %4136 = vmatpush.bf16.msra.mxu0 %v2525
    %4137 = vmatpush.bf16.msra.mxu0 %v2517
    %4138 = vmatpush.bf16.msra.mxu0 %v2509
    %4139 = vmatpush.bf16.msra.mxu0 %v2501
    %4140 = vmatpush.bf16.msra.mxu0 %v2493
    %4141 = vmatmul.bf16.gmra.mxu0 %v350
    %v4142 = vpop.f32.mrf.mxu0
    %v4143 = vadd.f32 %v4129, %v4142
    %v4144 = vpop.f32.mrf.mxu0
    %v4145 = vadd.f32 %v4131, %v4144
    %4146 = vdwg.mxu0
    %4147 = vmatpush.bf16.msra.mxu0 %v2613
    %4148 = vmatpush.bf16.msra.mxu0 %v2605
    %4149 = vmatpush.bf16.msra.mxu0 %v2597
    %4150 = vmatpush.bf16.msra.mxu0 %v2589
    %4151 = vmatpush.bf16.msra.mxu0 %v2581
    %4152 = vmatpush.bf16.msra.mxu0 %v2573
    %4153 = vmatpush.bf16.msra.mxu0 %v2565
    %4154 = vmatpush.bf16.msra.mxu0 %v2557
    %4155 = vmatmul.bf16.gmra.mxu0 %v351
    %v4156 = vpop.f32.mrf.mxu0
    %v4157 = vadd.f32 %v4143, %v4156
    %v4158 = vpop.f32.mrf.mxu0
    %v4159 = vadd.f32 %v4145, %v4158
    %4160 = vdwg.mxu0
    %4161 = vmatpush.bf16.msra.mxu0 %v2677
    %4162 = vmatpush.bf16.msra.mxu0 %v2669
    %4163 = vmatpush.bf16.msra.mxu0 %v2661
    %4164 = vmatpush.bf16.msra.mxu0 %v2653
    %4165 = vmatpush.bf16.msra.mxu0 %v2645
    %4166 = vmatpush.bf16.msra.mxu0 %v2637
    %4167 = vmatpush.bf16.msra.mxu0 %v2629
    %4168 = vmatpush.bf16.msra.mxu0 %v2621
    %4169 = vmatmul.bf16.gmra.mxu0 %v352
    %v4170 = vpop.f32.mrf.mxu0
    %v4171 = vadd.f32 %v4157, %v4170
    %v4172 = vpop.f32.mrf.mxu0
    %v4173 = vadd.f32 %v4159, %v4172
    %4174 = vdwg.mxu0
    %4175 = vmatpush.bf16.msra.mxu0 %v2741
    %4176 = vmatpush.bf16.msra.mxu0 %v2733
    %4177 = vmatpush.bf16.msra.mxu0 %v2725
    %4178 = vmatpush.bf16.msra.mxu0 %v2717
    %4179 = vmatpush.bf16.msra.mxu0 %v2709
    %4180 = vmatpush.bf16.msra.mxu0 %v2701
    %4181 = vmatpush.bf16.msra.mxu0 %v2693
    %4182 = vmatpush.bf16.msra.mxu0 %v2685
    %4183 = vmatmul.bf16.gmra.mxu0 %v353
    %v4184 = vpop.f32.mrf.mxu0
    %v4185 = vadd.f32 %v4171, %v4184
    %v4186 = vpop.f32.mrf.mxu0
    %v4187 = vadd.f32 %v4173, %v4186
    %4188 = vdwg.mxu0
    %4189 = vmatpush.bf16.msra.mxu0 %v2805
    %4190 = vmatpush.bf16.msra.mxu0 %v2797
    %4191 = vmatpush.bf16.msra.mxu0 %v2789
    %4192 = vmatpush.bf16.msra.mxu0 %v2781
    %4193 = vmatpush.bf16.msra.mxu0 %v2773
    %4194 = vmatpush.bf16.msra.mxu0 %v2765
    %4195 = vmatpush.bf16.msra.mxu0 %v2757
    %4196 = vmatpush.bf16.msra.mxu0 %v2749
    %4197 = vmatmul.bf16.gmra.mxu0 %v354
    %v4198 = vpop.f32.mrf.mxu0
    %v4199 = vadd.f32 %v4185, %v4198
    %v4200 = vpop.f32.mrf.mxu0
    %v4201 = vadd.f32 %v4187, %v4200
    %4202 = vdwg.mxu0
    %4203 = vmatpush.bf16.msra.mxu0 %v2869
    %4204 = vmatpush.bf16.msra.mxu0 %v2861
    %4205 = vmatpush.bf16.msra.mxu0 %v2853
    %4206 = vmatpush.bf16.msra.mxu0 %v2845
    %4207 = vmatpush.bf16.msra.mxu0 %v2837
    %4208 = vmatpush.bf16.msra.mxu0 %v2829
    %4209 = vmatpush.bf16.msra.mxu0 %v2821
    %4210 = vmatpush.bf16.msra.mxu0 %v2813
    %4211 = vmatmul.bf16.gmra.mxu0 %v355
    %v4212 = vpop.f32.mrf.mxu0
    %v4213 = vadd.f32 %v4199, %v4212
    %v4214 = vpop.f32.mrf.mxu0
    %v4215 = vadd.f32 %v4201, %v4214
    %4216 = vdwg.mxu0
    %4217 = vmatpush.bf16.msra.mxu0 %v2933
    %4218 = vmatpush.bf16.msra.mxu0 %v2925
    %4219 = vmatpush.bf16.msra.mxu0 %v2917
    %4220 = vmatpush.bf16.msra.mxu0 %v2909
    %4221 = vmatpush.bf16.msra.mxu0 %v2901
    %4222 = vmatpush.bf16.msra.mxu0 %v2893
    %4223 = vmatpush.bf16.msra.mxu0 %v2885
    %4224 = vmatpush.bf16.msra.mxu0 %v2877
    %4225 = vmatmul.bf16.gmra.mxu0 %v356
    %v4226 = vpop.f32.mrf.mxu0
    %v4227 = vadd.f32 %v4213, %v4226
    %v4228 = vpop.f32.mrf.mxu0
    %v4229 = vadd.f32 %v4215, %v4228
    %4230 = vdwg.mxu0
    %4231 = vmatpush.bf16.msra.mxu0 %v2486
    %4232 = vmatpush.bf16.msra.mxu0 %v2478
    %4233 = vmatpush.bf16.msra.mxu0 %v2470
    %4234 = vmatpush.bf16.msra.mxu0 %v2462
    %4235 = vmatpush.bf16.msra.mxu0 %v2454
    %4236 = vmatpush.bf16.msra.mxu0 %v2446
    %4237 = vmatpush.bf16.msra.mxu0 %v2438
    %4238 = vmatpush.bf16.msra.mxu0 %v2430
    %4239 = vmatmul.bf16.gmra.mxu0 %v349
    %v4240 = vpop.f32.mrf.mxu0
    %v4241 = vadd.f32 %v878, %v4240
    %v4242 = vpop.f32.mrf.mxu0
    %v4243 = vadd.f32 %v878, %v4242
    %4244 = vdwg.mxu0
    %4245 = vmatpush.bf16.msra.mxu0 %v2550
    %4246 = vmatpush.bf16.msra.mxu0 %v2542
    %4247 = vmatpush.bf16.msra.mxu0 %v2534
    %4248 = vmatpush.bf16.msra.mxu0 %v2526
    %4249 = vmatpush.bf16.msra.mxu0 %v2518
    %4250 = vmatpush.bf16.msra.mxu0 %v2510
    %4251 = vmatpush.bf16.msra.mxu0 %v2502
    %4252 = vmatpush.bf16.msra.mxu0 %v2494
    %4253 = vmatmul.bf16.gmra.mxu0 %v350
    %v4254 = vpop.f32.mrf.mxu0
    %v4255 = vadd.f32 %v4241, %v4254
    %v4256 = vpop.f32.mrf.mxu0
    %v4257 = vadd.f32 %v4243, %v4256
    %4258 = vdwg.mxu0
    %4259 = vmatpush.bf16.msra.mxu0 %v2614
    %4260 = vmatpush.bf16.msra.mxu0 %v2606
    %4261 = vmatpush.bf16.msra.mxu0 %v2598
    %4262 = vmatpush.bf16.msra.mxu0 %v2590
    %4263 = vmatpush.bf16.msra.mxu0 %v2582
    %4264 = vmatpush.bf16.msra.mxu0 %v2574
    %4265 = vmatpush.bf16.msra.mxu0 %v2566
    %4266 = vmatpush.bf16.msra.mxu0 %v2558
    %4267 = vmatmul.bf16.gmra.mxu0 %v351
    %v4268 = vpop.f32.mrf.mxu0
    %v4269 = vadd.f32 %v4255, %v4268
    %v4270 = vpop.f32.mrf.mxu0
    %v4271 = vadd.f32 %v4257, %v4270
    %4272 = vdwg.mxu0
    %4273 = vmatpush.bf16.msra.mxu0 %v2678
    %4274 = vmatpush.bf16.msra.mxu0 %v2670
    %4275 = vmatpush.bf16.msra.mxu0 %v2662
    %4276 = vmatpush.bf16.msra.mxu0 %v2654
    %4277 = vmatpush.bf16.msra.mxu0 %v2646
    %4278 = vmatpush.bf16.msra.mxu0 %v2638
    %4279 = vmatpush.bf16.msra.mxu0 %v2630
    %4280 = vmatpush.bf16.msra.mxu0 %v2622
    %4281 = vmatmul.bf16.gmra.mxu0 %v352
    %v4282 = vpop.f32.mrf.mxu0
    %v4283 = vadd.f32 %v4269, %v4282
    %v4284 = vpop.f32.mrf.mxu0
    %v4285 = vadd.f32 %v4271, %v4284
    %4286 = vdwg.mxu0
    %4287 = vmatpush.bf16.msra.mxu0 %v2742
    %4288 = vmatpush.bf16.msra.mxu0 %v2734
    %4289 = vmatpush.bf16.msra.mxu0 %v2726
    %4290 = vmatpush.bf16.msra.mxu0 %v2718
    %4291 = vmatpush.bf16.msra.mxu0 %v2710
    %4292 = vmatpush.bf16.msra.mxu0 %v2702
    %4293 = vmatpush.bf16.msra.mxu0 %v2694
    %4294 = vmatpush.bf16.msra.mxu0 %v2686
    %4295 = vmatmul.bf16.gmra.mxu0 %v353
    %v4296 = vpop.f32.mrf.mxu0
    %v4297 = vadd.f32 %v4283, %v4296
    %v4298 = vpop.f32.mrf.mxu0
    %v4299 = vadd.f32 %v4285, %v4298
    %4300 = vdwg.mxu0
    %4301 = vmatpush.bf16.msra.mxu0 %v2806
    %4302 = vmatpush.bf16.msra.mxu0 %v2798
    %4303 = vmatpush.bf16.msra.mxu0 %v2790
    %4304 = vmatpush.bf16.msra.mxu0 %v2782
    %4305 = vmatpush.bf16.msra.mxu0 %v2774
    %4306 = vmatpush.bf16.msra.mxu0 %v2766
    %4307 = vmatpush.bf16.msra.mxu0 %v2758
    %4308 = vmatpush.bf16.msra.mxu0 %v2750
    %4309 = vmatmul.bf16.gmra.mxu0 %v354
    %v4310 = vpop.f32.mrf.mxu0
    %v4311 = vadd.f32 %v4297, %v4310
    %v4312 = vpop.f32.mrf.mxu0
    %v4313 = vadd.f32 %v4299, %v4312
    %4314 = vdwg.mxu0
    %4315 = vmatpush.bf16.msra.mxu0 %v2870
    %4316 = vmatpush.bf16.msra.mxu0 %v2862
    %4317 = vmatpush.bf16.msra.mxu0 %v2854
    %4318 = vmatpush.bf16.msra.mxu0 %v2846
    %4319 = vmatpush.bf16.msra.mxu0 %v2838
    %4320 = vmatpush.bf16.msra.mxu0 %v2830
    %4321 = vmatpush.bf16.msra.mxu0 %v2822
    %4322 = vmatpush.bf16.msra.mxu0 %v2814
    %4323 = vmatmul.bf16.gmra.mxu0 %v355
    %v4324 = vpop.f32.mrf.mxu0
    %v4325 = vadd.f32 %v4311, %v4324
    %v4326 = vpop.f32.mrf.mxu0
    %v4327 = vadd.f32 %v4313, %v4326
    %4328 = vdwg.mxu0
    %4329 = vmatpush.bf16.msra.mxu0 %v2934
    %4330 = vmatpush.bf16.msra.mxu0 %v2926
    %4331 = vmatpush.bf16.msra.mxu0 %v2918
    %4332 = vmatpush.bf16.msra.mxu0 %v2910
    %4333 = vmatpush.bf16.msra.mxu0 %v2902
    %4334 = vmatpush.bf16.msra.mxu0 %v2894
    %4335 = vmatpush.bf16.msra.mxu0 %v2886
    %4336 = vmatpush.bf16.msra.mxu0 %v2878
    %4337 = vmatmul.bf16.gmra.mxu0 %v356
    %v4338 = vpop.f32.mrf.mxu0
    %v4339 = vadd.f32 %v4325, %v4338
    %v4340 = vpop.f32.mrf.mxu0
    %v4341 = vadd.f32 %v4327, %v4340
    %4342 = vdwg.mxu0
    %v4343 = vmax.f32 %v3555, 0.0
    %v4344 = vmax.f32 %v3667, 0.0
    %v4345 = vmax.f32 %v3779, 0.0
    %v4346 = vmax.f32 %v3891, 0.0
    %v4347 = vmax.f32 %v4003, 0.0
    %v4348 = vmax.f32 %v4115, 0.0
    %v4349 = vmax.f32 %v4227, 0.0
    %v4350 = vmax.f32 %v4339, 0.0
    %v4351 = vmax.f32 %v3557, 0.0
    %v4352 = vmax.f32 %v3669, 0.0
    %v4353 = vmax.f32 %v3781, 0.0
    %v4354 = vmax.f32 %v3893, 0.0
    %v4355 = vmax.f32 %v4005, 0.0
    %v4356 = vmax.f32 %v4117, 0.0
    %v4357 = vmax.f32 %v4229, 0.0
    %v4358 = vmax.f32 %v4341, 0.0
    %v4359 = vld [vmem:[#allocation10] sm:$0xff]
    %s4360 = sld [smem:[#allocation2]]
    %v4361 = vstv %s4360
    %v4363 = vperm.slane %v4359, 0
    %v4364 = vperm.slane %v4359, 1
    %v4365 = vperm.slane %v4359, 2
    %v4366 = vperm.slane %v4359, 3
    %v4367 = vperm.slane %v4359, 4
    %v4368 = vperm.slane %v4359, 5
    %v4369 = vperm.slane %v4359, 6
    %v4370 = vperm.slane %v4359, 7
    %4379 = vmatpush.xpose.msra.mxu0 0.0
    %4380 = vmatpush.xpose.msra.mxu0 0.0
    %4381 = vmatpush.xpose.msra.mxu0 0.0
    %4382 = vmatpush.xpose.msra.mxu0 0.0
    %4383 = vmatpush.xpose.msra.mxu0 0.0
    %4384 = vmatpush.xpose.msra.mxu0 0.0
    %4385 = vmatpush.xpose.msra.mxu0 0.0
    %4386 = vmatpush.xpose.msra.mxu0 0.0
    %4387 = vmatpush.xpose.msra.mxu0 0.0
    %4388 = vmatpush.xpose.msra.mxu0 0.0
    %4389 = vmatpush.xpose.msra.mxu0 0.0
    %4390 = vmatpush.xpose.msra.mxu0 0.0
    %4391 = vmatpush.xpose.msra.mxu0 0.0
    %4392 = vmatpush.xpose.msra.mxu0 0.0
    %4393 = vmatpush.xpose.msra.mxu0 %v4351
    %4394 = vmatpush.xpose.msra.mxu0 %v4343
    %4395 = vmatmul.f32.gmra.mxu0 %v4363
    %v4396 = vpop.f32.mrf.mxu0
    %v4397 = vadd.f32 %v4361, %v4396
    %4398 = vdwg.mxu0
    %4399 = vmatpush.xpose.msra.mxu0 0.0
    %4400 = vmatpush.xpose.msra.mxu0 0.0
    %4401 = vmatpush.xpose.msra.mxu0 0.0
    %4402 = vmatpush.xpose.msra.mxu0 0.0
    %4403 = vmatpush.xpose.msra.mxu0 0.0
    %4404 = vmatpush.xpose.msra.mxu0 0.0
    %4405 = vmatpush.xpose.msra.mxu0 0.0
    %4406 = vmatpush.xpose.msra.mxu0 0.0
    %4407 = vmatpush.xpose.msra.mxu0 0.0
    %4408 = vmatpush.xpose.msra.mxu0 0.0
    %4409 = vmatpush.xpose.msra.mxu0 0.0
    %4410 = vmatpush.xpose.msra.mxu0 0.0
    %4411 = vmatpush.xpose.msra.mxu0 0.0
    %4412 = vmatpush.xpose.msra.mxu0 0.0
    %4413 = vmatpush.xpose.msra.mxu0 %v4352
    %4414 = vmatpush.xpose.msra.mxu0 %v4344
    %4415 = vmatmul.f32.gmra.mxu0 %v4364
    %v4416 = vpop.f32.mrf.mxu0
    %v4417 = vadd.f32 %v4397, %v4416
    %4418 = vdwg.mxu0
    %4419 = vmatpush.xpose.msra.mxu0 0.0
    %4420 = vmatpush.xpose.msra.mxu0 0.0
    %4421 = vmatpush.xpose.msra.mxu0 0.0
    %4422 = vmatpush.xpose.msra.mxu0 0.0
    %4423 = vmatpush.xpose.msra.mxu0 0.0
    %4424 = vmatpush.xpose.msra.mxu0 0.0
    %4425 = vmatpush.xpose.msra.mxu0 0.0
    %4426 = vmatpush.xpose.msra.mxu0 0.0
    %4427 = vmatpush.xpose.msra.mxu0 0.0
    %4428 = vmatpush.xpose.msra.mxu0 0.0
    %4429 = vmatpush.xpose.msra.mxu0 0.0
    %4430 = vmatpush.xpose.msra.mxu0 0.0
    %4431 = vmatpush.xpose.msra.mxu0 0.0
    %4432 = vmatpush.xpose.msra.mxu0 0.0
    %4433 = vmatpush.xpose.msra.mxu0 %v4353
    %4434 = vmatpush.xpose.msra.mxu0 %v4345
    %4435 = vmatmul.f32.gmra.mxu0 %v4365
    %v4436 = vpop.f32.mrf.mxu0
    %v4437 = vadd.f32 %v4417, %v4436
    %4438 = vdwg.mxu0
    %4439 = vmatpush.xpose.msra.mxu0 0.0
    %4440 = vmatpush.xpose.msra.mxu0 0.0
    %4441 = vmatpush.xpose.msra.mxu0 0.0
    %4442 = vmatpush.xpose.msra.mxu0 0.0
    %4443 = vmatpush.xpose.msra.mxu0 0.0
    %4444 = vmatpush.xpose.msra.mxu0 0.0
    %4445 = vmatpush.xpose.msra.mxu0 0.0
    %4446 = vmatpush.xpose.msra.mxu0 0.0
    %4447 = vmatpush.xpose.msra.mxu0 0.0
    %4448 = vmatpush.xpose.msra.mxu0 0.0
    %4449 = vmatpush.xpose.msra.mxu0 0.0
    %4450 = vmatpush.xpose.msra.mxu0 0.0
    %4451 = vmatpush.xpose.msra.mxu0 0.0
    %4452 = vmatpush.xpose.msra.mxu0 0.0
    %4453 = vmatpush.xpose.msra.mxu0 %v4354
    %4454 = vmatpush.xpose.msra.mxu0 %v4346
    %4455 = vmatmul.f32.gmra.mxu0 %v4366
    %v4456 = vpop.f32.mrf.mxu0
    %v4457 = vadd.f32 %v4437, %v4456
    %4458 = vdwg.mxu0
    %4459 = vmatpush.xpose.msra.mxu0 0.0
    %4460 = vmatpush.xpose.msra.mxu0 0.0
    %4461 = vmatpush.xpose.msra.mxu0 0.0
    %4462 = vmatpush.xpose.msra.mxu0 0.0
    %4463 = vmatpush.xpose.msra.mxu0 0.0
    %4464 = vmatpush.xpose.msra.mxu0 0.0
    %4465 = vmatpush.xpose.msra.mxu0 0.0
    %4466 = vmatpush.xpose.msra.mxu0 0.0
    %4467 = vmatpush.xpose.msra.mxu0 0.0
    %4468 = vmatpush.xpose.msra.mxu0 0.0
    %4469 = vmatpush.xpose.msra.mxu0 0.0
    %4470 = vmatpush.xpose.msra.mxu0 0.0
    %4471 = vmatpush.xpose.msra.mxu0 0.0
    %4472 = vmatpush.xpose.msra.mxu0 0.0
    %4473 = vmatpush.xpose.msra.mxu0 %v4355
    %4474 = vmatpush.xpose.msra.mxu0 %v4347
    %4475 = vmatmul.f32.gmra.mxu0 %v4367
    %v4476 = vpop.f32.mrf.mxu0
    %v4477 = vadd.f32 %v4457, %v4476
    %4478 = vdwg.mxu0
    %4479 = vmatpush.xpose.msra.mxu0 0.0
    %4480 = vmatpush.xpose.msra.mxu0 0.0
    %4481 = vmatpush.xpose.msra.mxu0 0.0
    %4482 = vmatpush.xpose.msra.mxu0 0.0
    %4483 = vmatpush.xpose.msra.mxu0 0.0
    %4484 = vmatpush.xpose.msra.mxu0 0.0
    %4485 = vmatpush.xpose.msra.mxu0 0.0
    %4486 = vmatpush.xpose.msra.mxu0 0.0
    %4487 = vmatpush.xpose.msra.mxu0 0.0
    %4488 = vmatpush.xpose.msra.mxu0 0.0
    %4489 = vmatpush.xpose.msra.mxu0 0.0
    %4490 = vmatpush.xpose.msra.mxu0 0.0
    %4491 = vmatpush.xpose.msra.mxu0 0.0
    %4492 = vmatpush.xpose.msra.mxu0 0.0
    %4493 = vmatpush.xpose.msra.mxu0 %v4356
    %4494 = vmatpush.xpose.msra.mxu0 %v4348
    %4495 = vmatmul.f32.gmra.mxu0 %v4368
    %v4496 = vpop.f32.mrf.mxu0
    %v4497 = vadd.f32 %v4477, %v4496
    %4498 = vdwg.mxu0
    %4499 = vmatpush.xpose.msra.mxu0 0.0
    %4500 = vmatpush.xpose.msra.mxu0 0.0
    %4501 = vmatpush.xpose.msra.mxu0 0.0
    %4502 = vmatpush.xpose.msra.mxu0 0.0
    %4503 = vmatpush.xpose.msra.mxu0 0.0
    %4504 = vmatpush.xpose.msra.mxu0 0.0
    %4505 = vmatpush.xpose.msra.mxu0 0.0
    %4506 = vmatpush.xpose.msra.mxu0 0.0
    %4507 = vmatpush.xpose.msra.mxu0 0.0
    %4508 = vmatpush.xpose.msra.mxu0 0.0
    %4509 = vmatpush.xpose.msra.mxu0 0.0
    %4510 = vmatpush.xpose.msra.mxu0 0.0
    %4511 = vmatpush.xpose.msra.mxu0 0.0
    %4512 = vmatpush.xpose.msra.mxu0 0.0
    %4513 = vmatpush.xpose.msra.mxu0 %v4357
    %4514 = vmatpush.xpose.msra.mxu0 %v4349
    %4515 = vmatmul.f32.gmra.mxu0 %v4369
    %v4516 = vpop.f32.mrf.mxu0
    %v4517 = vadd.f32 %v4497, %v4516
    %4518 = vdwg.mxu0
    %4519 = vmatpush.xpose.msra.mxu0 0.0
    %4520 = vmatpush.xpose.msra.mxu0 0.0
    %4521 = vmatpush.xpose.msra.mxu0 0.0
    %4522 = vmatpush.xpose.msra.mxu0 0.0
    %4523 = vmatpush.xpose.msra.mxu0 0.0
    %4524 = vmatpush.xpose.msra.mxu0 0.0
    %4525 = vmatpush.xpose.msra.mxu0 0.0
    %4526 = vmatpush.xpose.msra.mxu0 0.0
    %4527 = vmatpush.xpose.msra.mxu0 0.0
    %4528 = vmatpush.xpose.msra.mxu0 0.0
    %4529 = vmatpush.xpose.msra.mxu0 0.0
    %4530 = vmatpush.xpose.msra.mxu0 0.0
    %4531 = vmatpush.xpose.msra.mxu0 0.0
    %4532 = vmatpush.xpose.msra.mxu0 0.0
    %4533 = vmatpush.xpose.msra.mxu0 %v4358
    %4534 = vmatpush.xpose.msra.mxu0 %v4350
    %4535 = vmatmul.f32.gmra.mxu0 %v4370
    %v4536 = vpop.f32.mrf.mxu0
    %v4537 = vadd.f32 %v4517, %v4536
    %4538 = vdwg.mxu0
    %vm4539 = vcmask 122880
    %4540 = vst.msk [vmem:[%s7] sm:$0x1] %vm4539, %v4537
    // Predicated region
    $region50: #{discriminator_dann_forward.1} parent=1 // pred_check
      _
    $region51: #{discriminator_dann_forward.1} parent=1 // pred_check_branch
      %4542 = sbr.rel (0) target = $region53
    $region52: #{discriminator_dann_forward.1} parent=1 // pred_region
      _
    $region53: #{discriminator_dann_forward.1} parent=1 // pred_fallthru
      _
    // Predicated region
    $region54: #{discriminator_dann_forward.1} parent=1 // pred_check
      _
    $region55: #{discriminator_dann_forward.1} parent=1 // pred_check_branch
      %4544 = sbr.rel (0) target = $region57
    $region56: #{discriminator_dann_forward.1} parent=1 // pred_region
      _
    $region57: #{discriminator_dann_forward.1} parent=1 // pred_fallthru
      _
    %4545 = vsyncpa [#allocation4], 1
    %4546 = vsyncpa [#allocation6], 1
    %4547 = vsyncpa [#allocation9], 1

</llo_original>
